<compile_context>
chip_gen: v5e
topology: v5e:2x2
jax: 0.10.0
libtpu: 0.0.40
codegen_flags: <defaults>
</compile_context>

<pallas_src>
import functools

import jax
import jax.numpy as jnp
from jax.experimental import pallas as pl
from jax.experimental.pallas import tpu as pltpu


D_IN_RAW = 300   # PyTorch nn.Linear(300, 512)
D_IN_PAD = 384   # 3 * 128, lane-aligned contraction dim
D_HID = 512


# ----------------------------------------------------------------------------- kernel

def _moco_fused_kernel(
    # inputs
    z_ref, pos_ref, neg_ref,
    wz1_ref, bz1_ref, wz2_ref, bz2_ref,      # encoder_z   (512 -> 512 -> 512)
    wq1_ref, bq1_ref, wq2_ref, bq2_ref,      # encoder_inp (384 -> 512 -> 512)
    wk1_ref, bk1_ref, wk2_ref, bk2_ref,      # encoder_k   (384 -> 512 -> 512)
    # outputs
    loss_ref, zp_ref, wk1_out, bk1_out, wk2_out, bk2_out,
    *, inv_T, m, batch):
    """Fused MoCo forward: 3 MLPs + key-encoder momentum update + contrastive CE loss."""

    def mlp(x, w1, b1, w2, b2):
        # weights are pre-transposed: (in_features, out_features)
        h = jnp.dot(x, w1, preferred_element_type=jnp.float32) + b1
        h = jnp.maximum(h, 0.0)
        return jnp.dot(h, w2, preferred_element_type=jnp.float32) + b2

    # z_p = encoder_z(z_) ; batch_pos_vec = encoder_inp(pos1)
    z_p = mlp(z_ref[...], wz1_ref[...], bz1_ref[...], wz2_ref[...], bz2_ref[...])
    pos_vec = mlp(pos_ref[...], wq1_ref[...], bq1_ref[...], wq2_ref[...], bq2_ref[...])

    # momentum update of encoder_k: pk*m + pq*(1-m), kept in VMEM and written back
    wk1 = wk1_ref[...] * m + wq1_ref[...] * (1.0 - m)
    bk1 = bk1_ref[...] * m + bq1_ref[...] * (1.0 - m)
    wk2 = wk2_ref[...] * m + wq2_ref[...] * (1.0 - m)
    bk2 = bk2_ref[...] * m + bq2_ref[...] * (1.0 - m)
    wk1_out[...] = wk1
    bk1_out[...] = bk1
    wk2_out[...] = wk2
    bk2_out[...] = bk2

    # neg_p = encoder_k(neg_batch) using the freshly updated params (no HBM trip)
    neg_p = mlp(neg_ref[...], wk1, bk1, wk2, bk2)

    # logits = [rowwise <z_p, pos_vec>, z_p @ neg_p^T] / T ; CE with target class 0
    pos = jnp.sum(z_p * pos_vec, axis=-1, keepdims=True) * inv_T            # (B, 1)
    neg = jax.lax.dot_general(z_p, neg_p, (((1,), (1,)), ((), ())),
                              preferred_element_type=jnp.float32) * inv_T   # (B, N)
    mx = jnp.maximum(pos, jnp.max(neg, axis=-1, keepdims=True))             # (B, 1)
    lse = jnp.log(jnp.exp(pos - mx) +
                  jnp.sum(jnp.exp(neg - mx), axis=-1, keepdims=True)) + mx
    per_row = lse - pos                                                     # (B, 1)
    loss_ref[...] = jnp.sum(per_row, axis=0, keepdims=True) / float(batch)  # (1, 1)

    zp_ref[...] = z_p.astype(zp_ref.dtype)


# ----------------------------------------------------------------------------- wrapper

_VMEM = pl.BlockSpec(memory_space=pltpu.MemorySpace.VMEM)


def _pad_features(x):
    pad = D_IN_PAD - x.shape[-1]
    if pad <= 0:
        return x
    return jnp.pad(x, ((0, 0), (0, pad)))


@functools.partial(jax.jit, static_argnames=("m", "T"))
def moco_forward(params, z_, pos1, neg_batch, m=0.999, T=0.07):
    """Mirrors MoCo.forward: returns (loss, z_p, updated_encoder_k_params)."""
    B = z_.shape[0]

    pos1_p = _pad_features(pos1)
    neg_in = _pad_features(neg_batch)

    wz1, bz1, wz2, bz2 = params["encoder_z"]
    wq1, bq1, wq2, bq2 = params["encoder_inp"]
    wk1, bk1, wk2, bk2 = params["encoder_k"]

    kernel = functools.partial(_moco_fused_kernel, inv_T=1.0 / T, m=m, batch=B)

    out_shapes = (
        jax.ShapeDtypeStruct((1, 1), jnp.float32),        # loss
        jax.ShapeDtypeStruct((B, D_HID), jnp.float32),    # z_p
        jax.ShapeDtypeStruct(wk1.shape, wk1.dtype),       # updated encoder_k params
        jax.ShapeDtypeStruct(bk1.shape, bk1.dtype),
        jax.ShapeDtypeStruct(wk2.shape, wk2.dtype),
        jax.ShapeDtypeStruct(bk2.shape, bk2.dtype),
    )

    loss, z_p, nwk1, nbk1, nwk2, nbk2 = pl.pallas_call(
        kernel,
        out_shape=out_shapes,
        in_specs=[_VMEM] * 15,
        out_specs=(_VMEM,) * 6,
        # write the momentum-updated encoder_k back over its own HBM buffers
        input_output_aliases={11: 2, 12: 3, 13: 4, 14: 5},
        compiler_params=pltpu.CompilerParams(vmem_limit_bytes=32 * 1024 * 1024),
    )(z_, pos1_p, neg_in,
      wz1, bz1, wz2, bz2,
      wq1, bq1, wq2, bq2,
      wk1, bk1, wk2, bk2)

    return loss[0, 0], z_p, (nwk1, nbk1, nwk2, nbk2)


# ----------------------------------------------------------------------------- params

def _init_linear(key, fan_in, fan_out, pad_in=None):
    """PyTorch nn.Linear default init: U(-1/sqrt(fan_in), 1/sqrt(fan_in)).
    Stored pre-transposed (in, out), optionally zero-padded along the input dim."""
    kw, kb = jax.random.split(key)
    bound = 1.0 / jnp.sqrt(fan_in)
    w = jax.random.uniform(kw, (fan_out, fan_in), jnp.float32, -bound, bound)
    b = jax.random.uniform(kb, (fan_out,), jnp.float32, -bound, bound)
    wt = w.T                                           # transpose ONCE at init
    if pad_in is not None and pad_in > fan_in:
        wt = jnp.pad(wt, ((0, pad_in - fan_in), (0, 0)))  # exact: zero rows
    return wt, b.reshape(1, -1)


def init_moco_params(key):
    k = jax.random.split(key, 4)
    enc_inp = (*_init_linear(k[0], D_IN_RAW, D_HID, pad_in=D_IN_PAD),
               *_init_linear(k[1], D_HID, D_HID))
    enc_z = (*_init_linear(k[2], D_HID, D_HID),
             *_init_linear(k[3], D_HID, D_HID))
    enc_k = tuple(jnp.array(p) for p in enc_inp)       # param_k.data.copy_(param_q.data)
    return {"encoder_inp": enc_inp, "encoder_z": enc_z, "encoder_k": enc_k}


# ----------------------------------------------------------------------------- reference

def _mlp_ref(x, w1t, b1, w2t, b2):
    h = jnp.maximum(x @ w1t + b1, 0.0)
    return h @ w2t + b2


def moco_forward_ref(params, z_, pos1, neg_batch, m=0.999, T=0.07):
    pos1 = _pad_features(pos1)
    neg_batch = _pad_features(neg_batch)
    z_p = _mlp_ref(z_, *params["encoder_z"])
    pos_vec = _mlp_ref(pos1, *params["encoder_inp"])
    enc_k = tuple(pk * m + pq * (1.0 - m)
                  for pk, pq in zip(params["encoder_k"], params["encoder_inp"]))
    neg_p = _mlp_ref(neg_batch, *enc_k)
    pos = jnp.sum(z_p * pos_vec, axis=-1, keepdims=True)
    neg = z_p @ neg_p.T
    logits = jnp.concatenate([pos, neg], axis=1) / T
    lse = jax.scipy.special.logsumexp(logits, axis=-1)
    loss = jnp.mean(lse - logits[:, 0])
    return loss, z_p, enc_k


# ----------------------------------------------------------------------------- main

if __name__ == "__main__":
    key = jax.random.PRNGKey(0)
    k_par, k_z, k_pos, k_neg = jax.random.split(key, 4)

    B, N_NEG = 2, 8
    params = init_moco_params(k_par)
    z_ = jax.random.normal(k_z, (B, D_HID), jnp.float32)
    pos1 = jax.random.normal(k_pos, (B, D_IN_RAW), jnp.float32)
    neg_batch = jax.random.normal(k_neg, (N_NEG, D_IN_RAW), jnp.float32)

    # pure-JAX reference (computed before the kernel call, which may alias enc_k buffers)
    loss_ref, z_p_ref, enc_k_ref = moco_forward_ref(params, z_, pos1, neg_batch)

    loss, z_p, enc_k_new = moco_forward(params, z_, pos1, neg_batch)
    jax.block_until_ready((loss, z_p, enc_k_new))

    assert jnp.allclose(z_p, z_p_ref, rtol=1e-3, atol=1e-3), "z_p mismatch"
    assert jnp.allclose(loss, loss_ref, rtol=1e-3, atol=1e-3), "loss mismatch"
    for a, b in zip(enc_k_new, enc_k_ref):
        assert jnp.allclose(a, b, rtol=1e-5, atol=1e-6), "encoder_k momentum update mismatch"

    print("KERNEL_OK")
</pallas_src>

<mosaic_0001>
module attributes {stable_mosaic.version = 11 : i64} {
  func.func @_moco_fused_kernel(%arg0: memref<2x512xf32, #tpu.memory_space<vmem>>, %arg1: memref<2x384xf32, #tpu.memory_space<vmem>>, %arg2: memref<8x384xf32, #tpu.memory_space<vmem>>, %arg3: memref<512x512xf32, #tpu.memory_space<vmem>>, %arg4: memref<1x512xf32, #tpu.memory_space<vmem>>, %arg5: memref<512x512xf32, #tpu.memory_space<vmem>>, %arg6: memref<1x512xf32, #tpu.memory_space<vmem>>, %arg7: memref<384x512xf32, #tpu.memory_space<vmem>>, %arg8: memref<1x512xf32, #tpu.memory_space<vmem>>, %arg9: memref<512x512xf32, #tpu.memory_space<vmem>>, %arg10: memref<1x512xf32, #tpu.memory_space<vmem>>, %arg11: memref<384x512xf32, #tpu.memory_space<vmem>>, %arg12: memref<1x512xf32, #tpu.memory_space<vmem>>, %arg13: memref<512x512xf32, #tpu.memory_space<vmem>>, %arg14: memref<1x512xf32, #tpu.memory_space<vmem>>, %arg15: memref<1x1xf32, #tpu.memory_space<vmem>>, %arg16: memref<2x512xf32, #tpu.memory_space<vmem>>, %arg17: memref<384x512xf32, #tpu.memory_space<vmem>>, %arg18: memref<1x512xf32, #tpu.memory_space<vmem>>, %arg19: memref<512x512xf32, #tpu.memory_space<vmem>>, %arg20: memref<1x512xf32, #tpu.memory_space<vmem>>) attributes {dimension_semantics = [], scalar_prefetch = 0 : i64, scratch_operands = 0 : i64, tpu.core_type = #tpu.core_type<tc>} {
    %c0 = arith.constant 0 : index
    %c0_0 = arith.constant 0 : index
    %0 = vector.load %arg0[%c0, %c0_0] : memref<2x512xf32, #tpu.memory_space<vmem>>, vector<2x512xf32>
    %c0_1 = arith.constant 0 : index
    %c0_2 = arith.constant 0 : index
    %1 = vector.load %arg3[%c0_1, %c0_2] : memref<512x512xf32, #tpu.memory_space<vmem>>, vector<512x512xf32>
    %c0_3 = arith.constant 0 : index
    %c0_4 = arith.constant 0 : index
    %2 = vector.load %arg4[%c0_3, %c0_4] : memref<1x512xf32, #tpu.memory_space<vmem>>, vector<1x512xf32>
    %c0_5 = arith.constant 0 : index
    %c0_6 = arith.constant 0 : index
    %3 = vector.load %arg5[%c0_5, %c0_6] : memref<512x512xf32, #tpu.memory_space<vmem>>, vector<512x512xf32>
    %c0_7 = arith.constant 0 : index
    %c0_8 = arith.constant 0 : index
    %4 = vector.load %arg6[%c0_7, %c0_8] : memref<1x512xf32, #tpu.memory_space<vmem>>, vector<1x512xf32>
    %cst = arith.constant dense<0.000000e+00> : vector<2x512xf32>
    %5 = tpu.matmul %0, %1, %cst {dimension_numbers = #tpu.dot_dimension_numbers<[1], [0], [0], [1], [0, 0, 1, 1], [], []>} : vector<2x512xf32>, vector<512x512xf32>, vector<2x512xf32> -> vector<2x512xf32>
    %6 = vector.broadcast %2 : vector<1x512xf32> to vector<2x512xf32>
    %7 = arith.addf %5, %6 : vector<2x512xf32>
    %cst_9 = arith.constant 0.000000e+00 : f32
    %8 = vector.broadcast %cst_9 : f32 to vector<2x512xf32>
    %9 = arith.maximumf %7, %8 : vector<2x512xf32>
    %cst_10 = arith.constant dense<0.000000e+00> : vector<2x512xf32>
    %10 = tpu.matmul %9, %3, %cst_10 {dimension_numbers = #tpu.dot_dimension_numbers<[1], [0], [0], [1], [0, 0, 1, 1], [], []>} : vector<2x512xf32>, vector<512x512xf32>, vector<2x512xf32> -> vector<2x512xf32>
    %11 = vector.broadcast %4 : vector<1x512xf32> to vector<2x512xf32>
    %12 = arith.addf %10, %11 : vector<2x512xf32>
    %c0_11 = arith.constant 0 : index
    %c0_12 = arith.constant 0 : index
    %13 = vector.load %arg1[%c0_11, %c0_12] : memref<2x384xf32, #tpu.memory_space<vmem>>, vector<2x384xf32>
    %c0_13 = arith.constant 0 : index
    %c0_14 = arith.constant 0 : index
    %14 = vector.load %arg7[%c0_13, %c0_14] : memref<384x512xf32, #tpu.memory_space<vmem>>, vector<384x512xf32>
    %c0_15 = arith.constant 0 : index
    %c0_16 = arith.constant 0 : index
    %15 = vector.load %arg8[%c0_15, %c0_16] : memref<1x512xf32, #tpu.memory_space<vmem>>, vector<1x512xf32>
    %c0_17 = arith.constant 0 : index
    %c0_18 = arith.constant 0 : index
    %16 = vector.load %arg9[%c0_17, %c0_18] : memref<512x512xf32, #tpu.memory_space<vmem>>, vector<512x512xf32>
    %c0_19 = arith.constant 0 : index
    %c0_20 = arith.constant 0 : index
    %17 = vector.load %arg10[%c0_19, %c0_20] : memref<1x512xf32, #tpu.memory_space<vmem>>, vector<1x512xf32>
    %cst_21 = arith.constant dense<0.000000e+00> : vector<2x512xf32>
    %18 = tpu.matmul %13, %14, %cst_21 {dimension_numbers = #tpu.dot_dimension_numbers<[1], [0], [0], [1], [0, 0, 1, 1], [], []>} : vector<2x384xf32>, vector<384x512xf32>, vector<2x512xf32> -> vector<2x512xf32>
    %19 = vector.broadcast %15 : vector<1x512xf32> to vector<2x512xf32>
    %20 = arith.addf %18, %19 : vector<2x512xf32>
    %cst_22 = arith.constant 0.000000e+00 : f32
    %21 = vector.broadcast %cst_22 : f32 to vector<2x512xf32>
    %22 = arith.maximumf %20, %21 : vector<2x512xf32>
    %cst_23 = arith.constant dense<0.000000e+00> : vector<2x512xf32>
    %23 = tpu.matmul %22, %16, %cst_23 {dimension_numbers = #tpu.dot_dimension_numbers<[1], [0], [0], [1], [0, 0, 1, 1], [], []>} : vector<2x512xf32>, vector<512x512xf32>, vector<2x512xf32> -> vector<2x512xf32>
    %24 = vector.broadcast %17 : vector<1x512xf32> to vector<2x512xf32>
    %25 = arith.addf %23, %24 : vector<2x512xf32>
    %c0_24 = arith.constant 0 : index
    %c0_25 = arith.constant 0 : index
    %26 = vector.load %arg11[%c0_24, %c0_25] : memref<384x512xf32, #tpu.memory_space<vmem>>, vector<384x512xf32>
    %cst_26 = arith.constant 9.990000e-01 : f32
    %27 = vector.broadcast %cst_26 : f32 to vector<384x512xf32>
    %28 = arith.mulf %26, %27 : vector<384x512xf32>
    %c0_27 = arith.constant 0 : index
    %c0_28 = arith.constant 0 : index
    %29 = vector.load %arg7[%c0_27, %c0_28] : memref<384x512xf32, #tpu.memory_space<vmem>>, vector<384x512xf32>
    %cst_29 = arith.constant 1.000000e-03 : f32
    %30 = vector.broadcast %cst_29 : f32 to vector<384x512xf32>
    %31 = arith.mulf %29, %30 : vector<384x512xf32>
    %32 = arith.addf %28, %31 : vector<384x512xf32>
    %c0_30 = arith.constant 0 : index
    %c0_31 = arith.constant 0 : index
    %33 = vector.load %arg12[%c0_30, %c0_31] : memref<1x512xf32, #tpu.memory_space<vmem>>, vector<1x512xf32>
    %cst_32 = arith.constant 9.990000e-01 : f32
    %34 = vector.broadcast %cst_32 : f32 to vector<1x512xf32>
    %35 = arith.mulf %33, %34 : vector<1x512xf32>
    %c0_33 = arith.constant 0 : index
    %c0_34 = arith.constant 0 : index
    %36 = vector.load %arg8[%c0_33, %c0_34] : memref<1x512xf32, #tpu.memory_space<vmem>>, vector<1x512xf32>
    %cst_35 = arith.constant 1.000000e-03 : f32
    %37 = vector.broadcast %cst_35 : f32 to vector<1x512xf32>
    %38 = arith.mulf %36, %37 : vector<1x512xf32>
    %39 = arith.addf %35, %38 : vector<1x512xf32>
    %c0_36 = arith.constant 0 : index
    %c0_37 = arith.constant 0 : index
    %40 = vector.load %arg13[%c0_36, %c0_37] : memref<512x512xf32, #tpu.memory_space<vmem>>, vector<512x512xf32>
    %cst_38 = arith.constant 9.990000e-01 : f32
    %41 = vector.broadcast %cst_38 : f32 to vector<512x512xf32>
    %42 = arith.mulf %40, %41 : vector<512x512xf32>
    %c0_39 = arith.constant 0 : index
    %c0_40 = arith.constant 0 : index
    %43 = vector.load %arg9[%c0_39, %c0_40] : memref<512x512xf32, #tpu.memory_space<vmem>>, vector<512x512xf32>
    %cst_41 = arith.constant 1.000000e-03 : f32
    %44 = vector.broadcast %cst_41 : f32 to vector<512x512xf32>
    %45 = arith.mulf %43, %44 : vector<512x512xf32>
    %46 = arith.addf %42, %45 : vector<512x512xf32>
    %c0_42 = arith.constant 0 : index
    %c0_43 = arith.constant 0 : index
    %47 = vector.load %arg14[%c0_42, %c0_43] : memref<1x512xf32, #tpu.memory_space<vmem>>, vector<1x512xf32>
    %cst_44 = arith.constant 9.990000e-01 : f32
    %48 = vector.broadcast %cst_44 : f32 to vector<1x512xf32>
    %49 = arith.mulf %47, %48 : vector<1x512xf32>
    %c0_45 = arith.constant 0 : index
    %c0_46 = arith.constant 0 : index
    %50 = vector.load %arg10[%c0_45, %c0_46] : memref<1x512xf32, #tpu.memory_space<vmem>>, vector<1x512xf32>
    %cst_47 = arith.constant 1.000000e-03 : f32
    %51 = vector.broadcast %cst_47 : f32 to vector<1x512xf32>
    %52 = arith.mulf %50, %51 : vector<1x512xf32>
    %53 = arith.addf %49, %52 : vector<1x512xf32>
    %c0_48 = arith.constant 0 : index
    %c0_49 = arith.constant 0 : index
    %54 = vector.load %arg17[%c0_48, %c0_49] : memref<384x512xf32, #tpu.memory_space<vmem>>, vector<384x512xf32>
    tpu.vector_store %arg17[%c0_48, %c0_49], %32 {strides = array<i32>} : memref<384x512xf32, #tpu.memory_space<vmem>>, vector<384x512xf32>,
    %c0_50 = arith.constant 0 : index
    %c0_51 = arith.constant 0 : index
    %55 = vector.load %arg18[%c0_50, %c0_51] : memref<1x512xf32, #tpu.memory_space<vmem>>, vector<1x512xf32>
    tpu.vector_store %arg18[%c0_50, %c0_51], %39 {strides = array<i32>} : memref<1x512xf32, #tpu.memory_space<vmem>>, vector<1x512xf32>,
    %c0_52 = arith.constant 0 : index
    %c0_53 = arith.constant 0 : index
    %56 = vector.load %arg19[%c0_52, %c0_53] : memref<512x512xf32, #tpu.memory_space<vmem>>, vector<512x512xf32>
    tpu.vector_store %arg19[%c0_52, %c0_53], %46 {strides = array<i32>} : memref<512x512xf32, #tpu.memory_space<vmem>>, vector<512x512xf32>,
    %c0_54 = arith.constant 0 : index
    %c0_55 = arith.constant 0 : index
    %57 = vector.load %arg20[%c0_54, %c0_55] : memref<1x512xf32, #tpu.memory_space<vmem>>, vector<1x512xf32>
    tpu.vector_store %arg20[%c0_54, %c0_55], %53 {strides = array<i32>} : memref<1x512xf32, #tpu.memory_space<vmem>>, vector<1x512xf32>,
    %c0_56 = arith.constant 0 : index
    %c0_57 = arith.constant 0 : index
    %58 = vector.load %arg2[%c0_56, %c0_57] : memref<8x384xf32, #tpu.memory_space<vmem>>, vector<8x384xf32>
    %cst_58 = arith.constant dense<0.000000e+00> : vector<8x512xf32>
    %59 = tpu.matmul %58, %32, %cst_58 {dimension_numbers = #tpu.dot_dimension_numbers<[1], [0], [0], [1], [0, 0, 1, 1], [], []>} : vector<8x384xf32>, vector<384x512xf32>, vector<8x512xf32> -> vector<8x512xf32>
    %60 = vector.broadcast %39 : vector<1x512xf32> to vector<8x512xf32>
    %61 = arith.addf %59, %60 : vector<8x512xf32>
    %cst_59 = arith.constant 0.000000e+00 : f32
    %62 = vector.broadcast %cst_59 : f32 to vector<8x512xf32>
    %63 = arith.maximumf %61, %62 : vector<8x512xf32>
    %cst_60 = arith.constant dense<0.000000e+00> : vector<8x512xf32>
    %64 = tpu.matmul %63, %46, %cst_60 {dimension_numbers = #tpu.dot_dimension_numbers<[1], [0], [0], [1], [0, 0, 1, 1], [], []>} : vector<8x512xf32>, vector<512x512xf32>, vector<8x512xf32> -> vector<8x512xf32>
    %65 = vector.broadcast %53 : vector<1x512xf32> to vector<8x512xf32>
    %66 = arith.addf %64, %65 : vector<8x512xf32>
    %67 = arith.mulf %12, %25 : vector<2x512xf32>
    %cst_61 = arith.constant dense<0.000000e+00> : vector<2xf32>
    %68 = vector.multi_reduction <add>, %67, %cst_61 [1] : vector<2x512xf32> to vector<2xf32>
    %69 = vector.shape_cast %68 : vector<2xf32> to vector<2x1xf32>
    %cst_62 = arith.constant 14.2857141 : f32
    %70 = vector.broadcast %cst_62 : f32 to vector<2x1xf32>
    %71 = arith.mulf %69, %70 : vector<2x1xf32>
    %cst_63 = arith.constant dense<0.000000e+00> : vector<2x8xf32>
    %72 = tpu.matmul %12, %66, %cst_63 {dimension_numbers = #tpu.dot_dimension_numbers<[1], [1], [0], [0], [0, 0, 1, 0], [], []>} : vector<2x512xf32>, vector<8x512xf32>, vector<2x8xf32> -> vector<2x8xf32>
    %cst_64 = arith.constant 14.2857141 : f32
    %73 = vector.broadcast %cst_64 : f32 to vector<2x8xf32>
    %74 = arith.mulf %72, %73 : vector<2x8xf32>
    %cst_65 = arith.constant dense<0xFF800000> : vector<2xf32>
    %75 = vector.multi_reduction <maximumf>, %74, %cst_65 [1] : vector<2x8xf32> to vector<2xf32>
    %76 = vector.shape_cast %75 : vector<2xf32> to vector<2x1xf32>
    %77 = arith.maximumf %71, %76 : vector<2x1xf32>
    %78 = arith.subf %71, %77 : vector<2x1xf32>
    %79 = math.exp %78 : vector<2x1xf32>
    %80 = vector.broadcast %77 : vector<2x1xf32> to vector<2x8xf32>
    %81 = arith.subf %74, %80 : vector<2x8xf32>
    %82 = math.exp %81 : vector<2x8xf32>
    %cst_66 = arith.constant dense<0.000000e+00> : vector<2xf32>
    %83 = vector.multi_reduction <add>, %82, %cst_66 [1] : vector<2x8xf32> to vector<2xf32>
    %84 = vector.shape_cast %83 : vector<2xf32> to vector<2x1xf32>
    %85 = arith.addf %79, %84 : vector<2x1xf32>
    %86 = math.log %85 : vector<2x1xf32>
    %87 = arith.addf %86, %77 : vector<2x1xf32>
    %88 = arith.subf %87, %71 : vector<2x1xf32>
    %cst_67 = arith.constant dense<0.000000e+00> : vector<1xf32>
    %89 = vector.multi_reduction <add>, %88, %cst_67 [0] : vector<2x1xf32> to vector<1xf32>
    %90 = vector.shape_cast %89 : vector<1xf32> to vector<1x1xf32>
    %cst_68 = arith.constant 2.000000e+00 : f32
    %91 = vector.broadcast %cst_68 : f32 to vector<1x1xf32>
    %92 = arith.divf %90, %91 : vector<1x1xf32>
    %c0_69 = arith.constant 0 : index
    %c0_70 = arith.constant 0 : index
    %93 = vector.load %arg15[%c0_69, %c0_70] : memref<1x1xf32, #tpu.memory_space<vmem>>, vector<1x1xf32>
    tpu.vector_store %arg15[%c0_69, %c0_70], %92 {strides = array<i32>} : memref<1x1xf32, #tpu.memory_space<vmem>>, vector<1x1xf32>,
    %c0_71 = arith.constant 0 : index
    %c0_72 = arith.constant 0 : index
    %94 = vector.load %arg16[%c0_71, %c0_72] : memref<2x512xf32, #tpu.memory_space<vmem>>, vector<2x512xf32>
    tpu.vector_store %arg16[%c0_71, %c0_72], %12 {strides = array<i32>} : memref<2x512xf32, #tpu.memory_space<vmem>>, vector<2x512xf32>,
    return
  }
}

</mosaic_0001>

<llo_original>
// kernel: moco_forward.1
$region0: #{moco_forward.1}
  #allocation0 [shape = 'u32[]', space=smem, size = 0x4, offset = 0x4, fixed_abs, tag = 'smem constant byte address 0x4 - core index']
  #allocation1 [shape = 'u32[72,128]{1,0:T(1,128)}', space=vmem, size = 0x9000, scoped, tag = 'internal scratch']
  %s0 = inlined_call_operand.vmem [shape: f32[2,512], index: 0, kind: input, shape index: {}]
  %s1 = inlined_call_operand.vmem [shape: f32[2,384], index: 1, kind: input, shape index: {}]
  %s2 = inlined_call_operand.vmem [shape: f32[8,384], index: 2, kind: input, shape index: {}]
  %s3 = inlined_call_operand.vmem [shape: f32[512,512], index: 3, kind: input, shape index: {}]
  %s4 = inlined_call_operand.vmem [shape: f32[1,512], index: 4, kind: input, shape index: {}]
  %s5 = inlined_call_operand.hbm [shape: f32[512,512], index: 5, kind: input, shape index: {}]
  %s6 = inlined_call_operand.vmem [shape: f32[1,512], index: 6, kind: input, shape index: {}]
  %s7 = inlined_call_operand.hbm [shape: f32[384,512], index: 7, kind: input, shape index: {}]
  %s8 = inlined_call_operand.vmem [shape: f32[1,512], index: 8, kind: input, shape index: {}]
  %s9 = inlined_call_operand.hbm [shape: f32[512,512], index: 9, kind: input, shape index: {}]
  %s10 = inlined_call_operand.vmem [shape: f32[1,512], index: 10, kind: input, shape index: {}]
  %s11 = inlined_call_operand.vmem [shape: f32[384,512], index: 11, kind: input, shape index: {}, may-alias: {11,17}]
  %s12 = inlined_call_operand.vmem [shape: f32[1,512], index: 12, kind: input, shape index: {}, may-alias: {12,18}]
  %s13 = inlined_call_operand.vmem [shape: f32[512,512], index: 13, kind: input, shape index: {}, may-alias: {13,19}]
  %s14 = inlined_call_operand.vmem [shape: f32[1,512], index: 14, kind: input, shape index: {}, may-alias: {14,20}]
  %s15 = inlined_call_operand.hbm [shape: f32[1,1], index: 15, kind: output, shape index: {0}]
  %s16 = inlined_call_operand.hbm [shape: f32[2,512], index: 16, kind: output, shape index: {1}]
  %s17 = inlined_call_operand.vmem [shape: f32[384,512], index: 17, kind: output, shape index: {2}, may-alias: {11,17}]
  %s18 = inlined_call_operand.vmem [shape: f32[1,512], index: 18, kind: output, shape index: {3}, may-alias: {12,18}]
  %s19 = inlined_call_operand.vmem [shape: f32[512,512], index: 19, kind: output, shape index: {4}, may-alias: {13,19}]
  %s20 = inlined_call_operand.vmem [shape: f32[1,512], index: 20, kind: output, shape index: {5}, may-alias: {14,20}]
  %21 = xla_tuple %s15, %s16, %s17, %s18, %s19, %s20
  %s22 = sld [smem:[#allocation0]]
  $region122: #{moco_forward.1} parent=0
    _
  %s24 = ssub.s32 1, %s22
  %s25 = scalar_select 0, %s24, %s22
  $region1: #{moco_forward.1} parent=0
    #allocation2 [shape = 'u8[1048576]{0}', space=vmem, size = 0x100000, scoped, tag = 'input window, operand 5, single buffered']
    #allocation3 [shape = 's32[1]{0}', space=sflag, size = 0x4, scoped, tag = 'scoped memory for moco_forward.1']
    #allocation4 [shape = 's32[1]{0}', space=sflag, size = 0x4, scoped, tag = 'scoped memory for moco_forward.1']
    #allocation5 [shape = 'u8[786432]{0}', space=vmem, size = 0xc0000, scoped, tag = 'input window, operand 7, single buffered']
    #allocation6 [shape = 's32[1]{0}', space=sflag, size = 0x4, scoped, tag = 'scoped memory for moco_forward.1']
    #allocation7 [shape = 'u8[1048576]{0}', space=vmem, size = 0x100000, scoped, tag = 'input window, operand 9, single buffered']
    #allocation8 [shape = 'u8[512]{0}', space=vmem, size = 0x400, scoped, tag = 'output window, operand 0, single buffered']
    #allocation9 [shape = 'u8[4096]{0}', space=vmem, size = 0x1000, scoped, tag = 'output window, operand 1, single buffered']
    #allocation10 [shape = 's32[1]{0}', space=sflag, size = 0x4, scoped, tag = 'scoped memory for moco_forward.1']
    %26 = vsyncpa [#allocation3], 0
    %27 = vsyncpa [#allocation6], 0
    %28 = vsyncpa [#allocation4], 0
    %29 = vsyncpa [#allocation10], 0
    // Predicated region
    $region2: #{moco_forward.1} parent=1 // pred_check
      _
    $region3: #{moco_forward.1} parent=1 // pred_check_branch
      %31 = sbr.rel (0) target = $region5
    $region4: #{moco_forward.1} parent=1 // pred_region
      _
    $region5: #{moco_forward.1} parent=1 // pred_fallthru
      _
    // Predicated region
    $region6: #{moco_forward.1} parent=1 // pred_check
      _
    $region7: #{moco_forward.1} parent=1 // pred_check_branch
      %33 = sbr.rel (0) target = $region9
    $region8: #{moco_forward.1} parent=1 // pred_region
      _
    $region9: #{moco_forward.1} parent=1 // pred_fallthru
      _
    // Predicated region
    $region10: #{moco_forward.1} parent=1 // pred_check
      _
    $region11: #{moco_forward.1} parent=1 // pred_check_branch
      %35 = sbr.rel (0) target = $region13
    $region12: #{moco_forward.1} parent=1 // pred_region
      _
    $region13: #{moco_forward.1} parent=1 // pred_fallthru
      _
    // Predicated region
    $region14: #{moco_forward.1} parent=1 // pred_check
      _
    $region15: #{moco_forward.1} parent=1 // pred_check_branch
      %37 = sbr.rel (0) target = $region17
    $region16: #{moco_forward.1} parent=1 // pred_region
      _
    $region17: #{moco_forward.1} parent=1 // pred_fallthru
      _
    // Predicated region
    $region18: #{moco_forward.1} parent=1 // pred_check
      _
    $region19: #{moco_forward.1} parent=1 // pred_check_branch
      %39 = sbr.rel (0) target = $region21
    $region20: #{moco_forward.1} parent=1 // pred_region
      _
    $region21: #{moco_forward.1} parent=1 // pred_fallthru
      _
    // Predicated region
    $region22: #{moco_forward.1} parent=1 // pred_check
      _
    $region23: #{moco_forward.1} parent=1 // pred_check_branch
      %41 = sbr.rel (0) target = $region25
    $region24: #{moco_forward.1} parent=1 // pred_region
      %43 = vsyncadd [#allocation3], 0
      %s44 = sshll.u32 %s5, 4
      %s45 = int_to_ptr.hbm [resolvable:$true] %s44
      %s46 = sshll.u32 [#allocation2], 4
      %s47 = int_to_ptr.vmem [resolvable:$true] %s46
      %52 = dma.hbm_to_vmem [thread:$0]  %s45, 32768, %s47, [#allocation3], 512, 512, 32
    $region25: #{moco_forward.1} parent=1 // pred_fallthru
      _
    // Predicated region
    $region26: #{moco_forward.1} parent=1 // pred_check
      _
    $region27: #{moco_forward.1} parent=1 // pred_check_branch
      %54 = sbr.rel (0) target = $region29
    $region28: #{moco_forward.1} parent=1 // pred_region
      _
    $region29: #{moco_forward.1} parent=1 // pred_fallthru
      _
    // Predicated region
    $region30: #{moco_forward.1} parent=1 // pred_check
      _
    $region31: #{moco_forward.1} parent=1 // pred_check_branch
      %56 = sbr.rel (0) target = $region33
    $region32: #{moco_forward.1} parent=1 // pred_region
      %58 = vsyncadd [#allocation6], 0
      %s59 = sshll.u32 %s7, 4
      %s60 = int_to_ptr.hbm [resolvable:$true] %s59
      %s61 = sshll.u32 [#allocation5], 4
      %s62 = int_to_ptr.vmem [resolvable:$true] %s61
      %67 = dma.hbm_to_vmem [thread:$0]  %s60, 24576, %s62, [#allocation6], 512, 512, 32
    $region33: #{moco_forward.1} parent=1 // pred_fallthru
      _
    // Predicated region
    $region34: #{moco_forward.1} parent=1 // pred_check
      _
    $region35: #{moco_forward.1} parent=1 // pred_check_branch
      %69 = sbr.rel (0) target = $region37
    $region36: #{moco_forward.1} parent=1 // pred_region
      _
    $region37: #{moco_forward.1} parent=1 // pred_fallthru
      _
    // Predicated region
    $region38: #{moco_forward.1} parent=1 // pred_check
      _
    $region39: #{moco_forward.1} parent=1 // pred_check_branch
      %71 = sbr.rel (0) target = $region41
    $region40: #{moco_forward.1} parent=1 // pred_region
      %73 = vsyncadd [#allocation6], 0
      %s74 = sshll.u32 %s9, 4
      %s75 = int_to_ptr.hbm [resolvable:$true] %s74
      %s76 = sshll.u32 [#allocation7], 4
      %s77 = int_to_ptr.vmem [resolvable:$true] %s76
      %82 = dma.hbm_to_vmem [thread:$0]  %s75, 32768, %s77, [#allocation6], 512, 512, 32
    $region41: #{moco_forward.1} parent=1 // pred_fallthru
      _
    // Predicated region
    $region42: #{moco_forward.1} parent=1 // pred_check
      _
    $region43: #{moco_forward.1} parent=1 // pred_check_branch
      %84 = sbr.rel (0) target = $region45
    $region44: #{moco_forward.1} parent=1 // pred_region
      _
    $region45: #{moco_forward.1} parent=1 // pred_fallthru
      _
    // Predicated region
    $region46: #{moco_forward.1} parent=1 // pred_check
      _
    $region47: #{moco_forward.1} parent=1 // pred_check_branch
      %86 = sbr.rel (0) target = $region49
    $region48: #{moco_forward.1} parent=1 // pred_region
      _
    $region49: #{moco_forward.1} parent=1 // pred_fallthru
      _
    // Predicated region
    $region50: #{moco_forward.1} parent=1 // pred_check
      _
    $region51: #{moco_forward.1} parent=1 // pred_check_branch
      %88 = sbr.rel (0) target = $region53
    $region52: #{moco_forward.1} parent=1 // pred_region
      _
    $region53: #{moco_forward.1} parent=1 // pred_fallthru
      _
    // Predicated region
    $region54: #{moco_forward.1} parent=1 // pred_check
      _
    $region55: #{moco_forward.1} parent=1 // pred_check_branch
      %90 = sbr.rel (0) target = $region57
    $region56: #{moco_forward.1} parent=1 // pred_region
      _
    $region57: #{moco_forward.1} parent=1 // pred_fallthru
      _
    // Predicated region
    $region58: #{moco_forward.1} parent=1 // pred_check
      _
    $region59: #{moco_forward.1} parent=1 // pred_check_branch
      %92 = sbr.rel (0) target = $region61
    $region60: #{moco_forward.1} parent=1 // pred_region
      _
    $region61: #{moco_forward.1} parent=1 // pred_fallthru
      _
    // Predicated region
    $region62: #{moco_forward.1} parent=1 // pred_check
      _
    $region63: #{moco_forward.1} parent=1 // pred_check_branch
      %94 = sbr.rel (0) target = $region65
    $region64: #{moco_forward.1} parent=1 // pred_region
      %96 = dma.done [#allocation3], 32768
    $region65: #{moco_forward.1} parent=1 // pred_fallthru
      _
    // Predicated region
    $region66: #{moco_forward.1} parent=1 // pred_check
      _
    $region67: #{moco_forward.1} parent=1 // pred_check_branch
      %98 = sbr.rel (0) target = $region69
    $region68: #{moco_forward.1} parent=1 // pred_region
      %100 = dma.done [#allocation6], 24576
    $region69: #{moco_forward.1} parent=1 // pred_fallthru
      _
    // Predicated region
    $region70: #{moco_forward.1} parent=1 // pred_check
      _
    $region71: #{moco_forward.1} parent=1 // pred_check_branch
      %102 = sbr.rel (0) target = $region73
    $region72: #{moco_forward.1} parent=1 // pred_region
      %104 = dma.done [#allocation6], 32768
    $region73: #{moco_forward.1} parent=1 // pred_fallthru
      _
    %v105 = vld [vmem:[%s0] sm:$0xff]
    %v106 = vld [vmem:[%s3] sm:$0xff]
    %v107 = vld [vmem:[%s3 + $0x8] sm:$0xff]
    %v108 = vld [vmem:[%s3 + $0x10] sm:$0xff]
    %v109 = vld [vmem:[%s3 + $0x18] sm:$0xff]
    %v110 = vld [vmem:[%s3 + $0x20] sm:$0xff]
    %v111 = vld [vmem:[%s3 + $0x28] sm:$0xff]
    %v112 = vld [vmem:[%s3 + $0x30] sm:$0xff]
    %v113 = vld [vmem:[%s3 + $0x38] sm:$0xff]
    %v114 = vld [vmem:[%s3 + $0x40] sm:$0xff]
    %v115 = vld [vmem:[%s3 + $0x48] sm:$0xff]
    %v116 = vld [vmem:[%s3 + $0x50] sm:$0xff]
    %v117 = vld [vmem:[%s3 + $0x58] sm:$0xff]
    %v118 = vld [vmem:[%s3 + $0x60] sm:$0xff]
    %v119 = vld [vmem:[%s3 + $0x68] sm:$0xff]
    %v120 = vld [vmem:[%s3 + $0x70] sm:$0xff]
    %v121 = vld [vmem:[%s3 + $0x78] sm:$0xff]
    %v122 = vld [vmem:[%s3 + $0x80] sm:$0xff]
    %v123 = vld [vmem:[%s3 + $0x88] sm:$0xff]
    %v124 = vld [vmem:[%s3 + $0x90] sm:$0xff]
    %v125 = vld [vmem:[%s3 + $0x98] sm:$0xff]
    %v126 = vld [vmem:[%s3 + $0xa0] sm:$0xff]
    %v127 = vld [vmem:[%s3 + $0xa8] sm:$0xff]
    %v128 = vld [vmem:[%s3 + $0xb0] sm:$0xff]
    %v129 = vld [vmem:[%s3 + $0xb8] sm:$0xff]
    %v130 = vld [vmem:[%s3 + $0xc0] sm:$0xff]
    %v131 = vld [vmem:[%s3 + $0xc8] sm:$0xff]
    %v132 = vld [vmem:[%s3 + $0xd0] sm:$0xff]
    %v133 = vld [vmem:[%s3 + $0xd8] sm:$0xff]
    %v134 = vld [vmem:[%s3 + $0xe0] sm:$0xff]
    %v135 = vld [vmem:[%s3 + $0xe8] sm:$0xff]
    %v136 = vld [vmem:[%s3 + $0xf0] sm:$0xff]
    %v137 = vld [vmem:[%s3 + $0xf8] sm:$0xff]
    %v138 = vld [vmem:[%s3 + $0x100] sm:$0xff]
    %v139 = vld [vmem:[%s3 + $0x108] sm:$0xff]
    %v140 = vld [vmem:[%s3 + $0x110] sm:$0xff]
    %v141 = vld [vmem:[%s3 + $0x118] sm:$0xff]
    %v142 = vld [vmem:[%s3 + $0x120] sm:$0xff]
    %v143 = vld [vmem:[%s3 + $0x128] sm:$0xff]
    %v144 = vld [vmem:[%s3 + $0x130] sm:$0xff]
    %v145 = vld [vmem:[%s3 + $0x138] sm:$0xff]
    %v146 = vld [vmem:[%s3 + $0x140] sm:$0xff]
    %v147 = vld [vmem:[%s3 + $0x148] sm:$0xff]
    %v148 = vld [vmem:[%s3 + $0x150] sm:$0xff]
    %v149 = vld [vmem:[%s3 + $0x158] sm:$0xff]
    %v150 = vld [vmem:[%s3 + $0x160] sm:$0xff]
    %v151 = vld [vmem:[%s3 + $0x168] sm:$0xff]
    %v152 = vld [vmem:[%s3 + $0x170] sm:$0xff]
    %v153 = vld [vmem:[%s3 + $0x178] sm:$0xff]
    %v154 = vld [vmem:[%s3 + $0x180] sm:$0xff]
    %v155 = vld [vmem:[%s3 + $0x188] sm:$0xff]
    %v156 = vld [vmem:[%s3 + $0x190] sm:$0xff]
    %v157 = vld [vmem:[%s3 + $0x198] sm:$0xff]
    %v158 = vld [vmem:[%s3 + $0x1a0] sm:$0xff]
    %v159 = vld [vmem:[%s3 + $0x1a8] sm:$0xff]
    %v160 = vld [vmem:[%s3 + $0x1b0] sm:$0xff]
    %v161 = vld [vmem:[%s3 + $0x1b8] sm:$0xff]
    %v162 = vld [vmem:[%s3 + $0x1c0] sm:$0xff]
    %v163 = vld [vmem:[%s3 + $0x1c8] sm:$0xff]
    %v164 = vld [vmem:[%s3 + $0x1d0] sm:$0xff]
    %v165 = vld [vmem:[%s3 + $0x1d8] sm:$0xff]
    %v166 = vld [vmem:[%s3 + $0x1e0] sm:$0xff]
    %v167 = vld [vmem:[%s3 + $0x1e8] sm:$0xff]
    %v168 = vld [vmem:[%s3 + $0x1f0] sm:$0xff]
    %v169 = vld [vmem:[%s3 + $0x1f8] sm:$0xff]
    %v170 = vld [vmem:[%s3 + $0x200] sm:$0xff]
    %v171 = vld [vmem:[%s3 + $0x208] sm:$0xff]
    %v172 = vld [vmem:[%s3 + $0x210] sm:$0xff]
    %v173 = vld [vmem:[%s3 + $0x218] sm:$0xff]
    %v174 = vld [vmem:[%s3 + $0x220] sm:$0xff]
    %v175 = vld [vmem:[%s3 + $0x228] sm:$0xff]
    %v176 = vld [vmem:[%s3 + $0x230] sm:$0xff]
    %v177 = vld [vmem:[%s3 + $0x238] sm:$0xff]
    %v178 = vld [vmem:[%s3 + $0x240] sm:$0xff]
    %v179 = vld [vmem:[%s3 + $0x248] sm:$0xff]
    %v180 = vld [vmem:[%s3 + $0x250] sm:$0xff]
    %v181 = vld [vmem:[%s3 + $0x258] sm:$0xff]
    %v182 = vld [vmem:[%s3 + $0x260] sm:$0xff]
    %v183 = vld [vmem:[%s3 + $0x268] sm:$0xff]
    %v184 = vld [vmem:[%s3 + $0x270] sm:$0xff]
    %v185 = vld [vmem:[%s3 + $0x278] sm:$0xff]
    %v186 = vld [vmem:[%s3 + $0x280] sm:$0xff]
    %v187 = vld [vmem:[%s3 + $0x288] sm:$0xff]
    %v188 = vld [vmem:[%s3 + $0x290] sm:$0xff]
    %v189 = vld [vmem:[%s3 + $0x298] sm:$0xff]
    %v190 = vld [vmem:[%s3 + $0x2a0] sm:$0xff]
    %v191 = vld [vmem:[%s3 + $0x2a8] sm:$0xff]
    %v192 = vld [vmem:[%s3 + $0x2b0] sm:$0xff]
    %v193 = vld [vmem:[%s3 + $0x2b8] sm:$0xff]
    %v194 = vld [vmem:[%s3 + $0x2c0] sm:$0xff]
    %v195 = vld [vmem:[%s3 + $0x2c8] sm:$0xff]
    %v196 = vld [vmem:[%s3 + $0x2d0] sm:$0xff]
    %v197 = vld [vmem:[%s3 + $0x2d8] sm:$0xff]
    %v198 = vld [vmem:[%s3 + $0x2e0] sm:$0xff]
    %v199 = vld [vmem:[%s3 + $0x2e8] sm:$0xff]
    %v200 = vld [vmem:[%s3 + $0x2f0] sm:$0xff]
    %v201 = vld [vmem:[%s3 + $0x2f8] sm:$0xff]
    %v202 = vld [vmem:[%s3 + $0x300] sm:$0xff]
    %v203 = vld [vmem:[%s3 + $0x308] sm:$0xff]
    %v204 = vld [vmem:[%s3 + $0x310] sm:$0xff]
    %v205 = vld [vmem:[%s3 + $0x318] sm:$0xff]
    %v206 = vld [vmem:[%s3 + $0x320] sm:$0xff]
    %v207 = vld [vmem:[%s3 + $0x328] sm:$0xff]
    %v208 = vld [vmem:[%s3 + $0x330] sm:$0xff]
    %v209 = vld [vmem:[%s3 + $0x338] sm:$0xff]
    %v210 = vld [vmem:[%s3 + $0x340] sm:$0xff]
    %v211 = vld [vmem:[%s3 + $0x348] sm:$0xff]
    %v212 = vld [vmem:[%s3 + $0x350] sm:$0xff]
    %v213 = vld [vmem:[%s3 + $0x358] sm:$0xff]
    %v214 = vld [vmem:[%s3 + $0x360] sm:$0xff]
    %v215 = vld [vmem:[%s3 + $0x368] sm:$0xff]
    %v216 = vld [vmem:[%s3 + $0x370] sm:$0xff]
    %v217 = vld [vmem:[%s3 + $0x378] sm:$0xff]
    %v218 = vld [vmem:[%s3 + $0x380] sm:$0xff]
    %v219 = vld [vmem:[%s3 + $0x388] sm:$0xff]
    %v220 = vld [vmem:[%s3 + $0x390] sm:$0xff]
    %v221 = vld [vmem:[%s3 + $0x398] sm:$0xff]
    %v222 = vld [vmem:[%s3 + $0x3a0] sm:$0xff]
    %v223 = vld [vmem:[%s3 + $0x3a8] sm:$0xff]
    %v224 = vld [vmem:[%s3 + $0x3b0] sm:$0xff]
    %v225 = vld [vmem:[%s3 + $0x3b8] sm:$0xff]
    %v226 = vld [vmem:[%s3 + $0x3c0] sm:$0xff]
    %v227 = vld [vmem:[%s3 + $0x3c8] sm:$0xff]
    %v228 = vld [vmem:[%s3 + $0x3d0] sm:$0xff]
    %v229 = vld [vmem:[%s3 + $0x3d8] sm:$0xff]
    %v230 = vld [vmem:[%s3 + $0x3e0] sm:$0xff]
    %v231 = vld [vmem:[%s3 + $0x3e8] sm:$0xff]
    %v232 = vld [vmem:[%s3 + $0x3f0] sm:$0xff]
    %v233 = vld [vmem:[%s3 + $0x3f8] sm:$0xff]
    %v234 = vld [vmem:[%s3 + $0x400] sm:$0xff]
    %v235 = vld [vmem:[%s3 + $0x408] sm:$0xff]
    %v236 = vld [vmem:[%s3 + $0x410] sm:$0xff]
    %v237 = vld [vmem:[%s3 + $0x418] sm:$0xff]
    %v238 = vld [vmem:[%s3 + $0x420] sm:$0xff]
    %v239 = vld [vmem:[%s3 + $0x428] sm:$0xff]
    %v240 = vld [vmem:[%s3 + $0x430] sm:$0xff]
    %v241 = vld [vmem:[%s3 + $0x438] sm:$0xff]
    %v242 = vld [vmem:[%s3 + $0x440] sm:$0xff]
    %v243 = vld [vmem:[%s3 + $0x448] sm:$0xff]
    %v244 = vld [vmem:[%s3 + $0x450] sm:$0xff]
    %v245 = vld [vmem:[%s3 + $0x458] sm:$0xff]
    %v246 = vld [vmem:[%s3 + $0x460] sm:$0xff]
    %v247 = vld [vmem:[%s3 + $0x468] sm:$0xff]
    %v248 = vld [vmem:[%s3 + $0x470] sm:$0xff]
    %v249 = vld [vmem:[%s3 + $0x478] sm:$0xff]
    %v250 = vld [vmem:[%s3 + $0x480] sm:$0xff]
    %v251 = vld [vmem:[%s3 + $0x488] sm:$0xff]
    %v252 = vld [vmem:[%s3 + $0x490] sm:$0xff]
    %v253 = vld [vmem:[%s3 + $0x498] sm:$0xff]
    %v254 = vld [vmem:[%s3 + $0x4a0] sm:$0xff]
    %v255 = vld [vmem:[%s3 + $0x4a8] sm:$0xff]
    %v256 = vld [vmem:[%s3 + $0x4b0] sm:$0xff]
    %v257 = vld [vmem:[%s3 + $0x4b8] sm:$0xff]
    %v258 = vld [vmem:[%s3 + $0x4c0] sm:$0xff]
    %v259 = vld [vmem:[%s3 + $0x4c8] sm:$0xff]
    %v260 = vld [vmem:[%s3 + $0x4d0] sm:$0xff]
    %v261 = vld [vmem:[%s3 + $0x4d8] sm:$0xff]
    %v262 = vld [vmem:[%s3 + $0x4e0] sm:$0xff]
    %v263 = vld [vmem:[%s3 + $0x4e8] sm:$0xff]
    %v264 = vld [vmem:[%s3 + $0x4f0] sm:$0xff]
    %v265 = vld [vmem:[%s3 + $0x4f8] sm:$0xff]
    %v266 = vld [vmem:[%s3 + $0x500] sm:$0xff]
    %v267 = vld [vmem:[%s3 + $0x508] sm:$0xff]
    %v268 = vld [vmem:[%s3 + $0x510] sm:$0xff]
    %v269 = vld [vmem:[%s3 + $0x518] sm:$0xff]
    %v270 = vld [vmem:[%s3 + $0x520] sm:$0xff]
    %v271 = vld [vmem:[%s3 + $0x528] sm:$0xff]
    %v272 = vld [vmem:[%s3 + $0x530] sm:$0xff]
    %v273 = vld [vmem:[%s3 + $0x538] sm:$0xff]
    %v274 = vld [vmem:[%s3 + $0x540] sm:$0xff]
    %v275 = vld [vmem:[%s3 + $0x548] sm:$0xff]
    %v276 = vld [vmem:[%s3 + $0x550] sm:$0xff]
    %v277 = vld [vmem:[%s3 + $0x558] sm:$0xff]
    %v278 = vld [vmem:[%s3 + $0x560] sm:$0xff]
    %v279 = vld [vmem:[%s3 + $0x568] sm:$0xff]
    %v280 = vld [vmem:[%s3 + $0x570] sm:$0xff]
    %v281 = vld [vmem:[%s3 + $0x578] sm:$0xff]
    %v282 = vld [vmem:[%s3 + $0x580] sm:$0xff]
    %v283 = vld [vmem:[%s3 + $0x588] sm:$0xff]
    %v284 = vld [vmem:[%s3 + $0x590] sm:$0xff]
    %v285 = vld [vmem:[%s3 + $0x598] sm:$0xff]
    %v286 = vld [vmem:[%s3 + $0x5a0] sm:$0xff]
    %v287 = vld [vmem:[%s3 + $0x5a8] sm:$0xff]
    %v288 = vld [vmem:[%s3 + $0x5b0] sm:$0xff]
    %v289 = vld [vmem:[%s3 + $0x5b8] sm:$0xff]
    %v290 = vld [vmem:[%s3 + $0x5c0] sm:$0xff]
    %v291 = vld [vmem:[%s3 + $0x5c8] sm:$0xff]
    %v292 = vld [vmem:[%s3 + $0x5d0] sm:$0xff]
    %v293 = vld [vmem:[%s3 + $0x5d8] sm:$0xff]
    %v294 = vld [vmem:[%s3 + $0x5e0] sm:$0xff]
    %v295 = vld [vmem:[%s3 + $0x5e8] sm:$0xff]
    %v296 = vld [vmem:[%s3 + $0x5f0] sm:$0xff]
    %v297 = vld [vmem:[%s3 + $0x5f8] sm:$0xff]
    %v298 = vld [vmem:[%s3 + $0x600] sm:$0xff]
    %v299 = vld [vmem:[%s3 + $0x608] sm:$0xff]
    %v300 = vld [vmem:[%s3 + $0x610] sm:$0xff]
    %v301 = vld [vmem:[%s3 + $0x618] sm:$0xff]
    %v302 = vld [vmem:[%s3 + $0x620] sm:$0xff]
    %v303 = vld [vmem:[%s3 + $0x628] sm:$0xff]
    %v304 = vld [vmem:[%s3 + $0x630] sm:$0xff]
    %v305 = vld [vmem:[%s3 + $0x638] sm:$0xff]
    %v306 = vld [vmem:[%s3 + $0x640] sm:$0xff]
    %v307 = vld [vmem:[%s3 + $0x648] sm:$0xff]
    %v308 = vld [vmem:[%s3 + $0x650] sm:$0xff]
    %v309 = vld [vmem:[%s3 + $0x658] sm:$0xff]
    %v310 = vld [vmem:[%s3 + $0x660] sm:$0xff]
    %v311 = vld [vmem:[%s3 + $0x668] sm:$0xff]
    %v312 = vld [vmem:[%s3 + $0x670] sm:$0xff]
    %v313 = vld [vmem:[%s3 + $0x678] sm:$0xff]
    %v314 = vld [vmem:[%s3 + $0x680] sm:$0xff]
    %v315 = vld [vmem:[%s3 + $0x688] sm:$0xff]
    %v316 = vld [vmem:[%s3 + $0x690] sm:$0xff]
    %v317 = vld [vmem:[%s3 + $0x698] sm:$0xff]
    %v318 = vld [vmem:[%s3 + $0x6a0] sm:$0xff]
    %v319 = vld [vmem:[%s3 + $0x6a8] sm:$0xff]
    %v320 = vld [vmem:[%s3 + $0x6b0] sm:$0xff]
    %v321 = vld [vmem:[%s3 + $0x6b8] sm:$0xff]
    %v322 = vld [vmem:[%s3 + $0x6c0] sm:$0xff]
    %v323 = vld [vmem:[%s3 + $0x6c8] sm:$0xff]
    %v324 = vld [vmem:[%s3 + $0x6d0] sm:$0xff]
    %v325 = vld [vmem:[%s3 + $0x6d8] sm:$0xff]
    %v326 = vld [vmem:[%s3 + $0x6e0] sm:$0xff]
    %v327 = vld [vmem:[%s3 + $0x6e8] sm:$0xff]
    %v328 = vld [vmem:[%s3 + $0x6f0] sm:$0xff]
    %v329 = vld [vmem:[%s3 + $0x6f8] sm:$0xff]
    %v330 = vld [vmem:[%s3 + $0x700] sm:$0xff]
    %v331 = vld [vmem:[%s3 + $0x708] sm:$0xff]
    %v332 = vld [vmem:[%s3 + $0x710] sm:$0xff]
    %v333 = vld [vmem:[%s3 + $0x718] sm:$0xff]
    %v334 = vld [vmem:[%s3 + $0x720] sm:$0xff]
    %v335 = vld [vmem:[%s3 + $0x728] sm:$0xff]
    %v336 = vld [vmem:[%s3 + $0x730] sm:$0xff]
    %v337 = vld [vmem:[%s3 + $0x738] sm:$0xff]
    %v338 = vld [vmem:[%s3 + $0x740] sm:$0xff]
    %v339 = vld [vmem:[%s3 + $0x748] sm:$0xff]
    %v340 = vld [vmem:[%s3 + $0x750] sm:$0xff]
    %v341 = vld [vmem:[%s3 + $0x758] sm:$0xff]
    %v342 = vld [vmem:[%s3 + $0x760] sm:$0xff]
    %v343 = vld [vmem:[%s3 + $0x768] sm:$0xff]
    %v344 = vld [vmem:[%s3 + $0x770] sm:$0xff]
    %v345 = vld [vmem:[%s3 + $0x778] sm:$0xff]
    %v346 = vld [vmem:[%s3 + $0x780] sm:$0xff]
    %v347 = vld [vmem:[%s3 + $0x788] sm:$0xff]
    %v348 = vld [vmem:[%s3 + $0x790] sm:$0xff]
    %v349 = vld [vmem:[%s3 + $0x798] sm:$0xff]
    %v350 = vld [vmem:[%s3 + $0x7a0] sm:$0xff]
    %v351 = vld [vmem:[%s3 + $0x7a8] sm:$0xff]
    %v352 = vld [vmem:[%s3 + $0x7b0] sm:$0xff]
    %v353 = vld [vmem:[%s3 + $0x7b8] sm:$0xff]
    %v354 = vld [vmem:[%s3 + $0x7c0] sm:$0xff]
    %v355 = vld [vmem:[%s3 + $0x7c8] sm:$0xff]
    %v356 = vld [vmem:[%s3 + $0x7d0] sm:$0xff]
    %v357 = vld [vmem:[%s3 + $0x7d8] sm:$0xff]
    %v358 = vld [vmem:[%s3 + $0x7e0] sm:$0xff]
    %v359 = vld [vmem:[%s3 + $0x7e8] sm:$0xff]
    %v360 = vld [vmem:[%s3 + $0x7f0] sm:$0xff]
    %v361 = vld [vmem:[%s3 + $0x7f8] sm:$0xff]
    %v362 = vld [vmem:[%s4] sm:$0xf]
    %v363 = vld [vmem:[#allocation2] sm:$0xff]
    %v364 = vld [vmem:[#allocation2 + $0x8] sm:$0xff]
    %v365 = vld [vmem:[#allocation2 + $0x10] sm:$0xff]
    %v366 = vld [vmem:[#allocation2 + $0x18] sm:$0xff]
    %v367 = vld [vmem:[#allocation2 + $0x20] sm:$0xff]
    %v368 = vld [vmem:[#allocation2 + $0x28] sm:$0xff]
    %v369 = vld [vmem:[#allocation2 + $0x30] sm:$0xff]
    %v370 = vld [vmem:[#allocation2 + $0x38] sm:$0xff]
    %v371 = vld [vmem:[#allocation2 + $0x40] sm:$0xff]
    %v372 = vld [vmem:[#allocation2 + $0x48] sm:$0xff]
    %v373 = vld [vmem:[#allocation2 + $0x50] sm:$0xff]
    %v374 = vld [vmem:[#allocation2 + $0x58] sm:$0xff]
    %v375 = vld [vmem:[#allocation2 + $0x60] sm:$0xff]
    %v376 = vld [vmem:[#allocation2 + $0x68] sm:$0xff]
    %v377 = vld [vmem:[#allocation2 + $0x70] sm:$0xff]
    %v378 = vld [vmem:[#allocation2 + $0x78] sm:$0xff]
    %v379 = vld [vmem:[#allocation2 + $0x80] sm:$0xff]
    %v380 = vld [vmem:[#allocation2 + $0x88] sm:$0xff]
    %v381 = vld [vmem:[#allocation2 + $0x90] sm:$0xff]
    %v382 = vld [vmem:[#allocation2 + $0x98] sm:$0xff]
    %v383 = vld [vmem:[#allocation2 + $0xa0] sm:$0xff]
    %v384 = vld [vmem:[#allocation2 + $0xa8] sm:$0xff]
    %v385 = vld [vmem:[#allocation2 + $0xb0] sm:$0xff]
    %v386 = vld [vmem:[#allocation2 + $0xb8] sm:$0xff]
    %v387 = vld [vmem:[#allocation2 + $0xc0] sm:$0xff]
    %v388 = vld [vmem:[#allocation2 + $0xc8] sm:$0xff]
    %v389 = vld [vmem:[#allocation2 + $0xd0] sm:$0xff]
    %v390 = vld [vmem:[#allocation2 + $0xd8] sm:$0xff]
    %v391 = vld [vmem:[#allocation2 + $0xe0] sm:$0xff]
    %v392 = vld [vmem:[#allocation2 + $0xe8] sm:$0xff]
    %v393 = vld [vmem:[#allocation2 + $0xf0] sm:$0xff]
    %v394 = vld [vmem:[#allocation2 + $0xf8] sm:$0xff]
    %v395 = vld [vmem:[#allocation2 + $0x100] sm:$0xff]
    %v396 = vld [vmem:[#allocation2 + $0x108] sm:$0xff]
    %v397 = vld [vmem:[#allocation2 + $0x110] sm:$0xff]
    %v398 = vld [vmem:[#allocation2 + $0x118] sm:$0xff]
    %v399 = vld [vmem:[#allocation2 + $0x120] sm:$0xff]
    %v400 = vld [vmem:[#allocation2 + $0x128] sm:$0xff]
    %v401 = vld [vmem:[#allocation2 + $0x130] sm:$0xff]
    %v402 = vld [vmem:[#allocation2 + $0x138] sm:$0xff]
    %v403 = vld [vmem:[#allocation2 + $0x140] sm:$0xff]
    %v404 = vld [vmem:[#allocation2 + $0x148] sm:$0xff]
    %v405 = vld [vmem:[#allocation2 + $0x150] sm:$0xff]
    %v406 = vld [vmem:[#allocation2 + $0x158] sm:$0xff]
    %v407 = vld [vmem:[#allocation2 + $0x160] sm:$0xff]
    %v408 = vld [vmem:[#allocation2 + $0x168] sm:$0xff]
    %v409 = vld [vmem:[#allocation2 + $0x170] sm:$0xff]
    %v410 = vld [vmem:[#allocation2 + $0x178] sm:$0xff]
    %v411 = vld [vmem:[#allocation2 + $0x180] sm:$0xff]
    %v412 = vld [vmem:[#allocation2 + $0x188] sm:$0xff]
    %v413 = vld [vmem:[#allocation2 + $0x190] sm:$0xff]
    %v414 = vld [vmem:[#allocation2 + $0x198] sm:$0xff]
    %v415 = vld [vmem:[#allocation2 + $0x1a0] sm:$0xff]
    %v416 = vld [vmem:[#allocation2 + $0x1a8] sm:$0xff]
    %v417 = vld [vmem:[#allocation2 + $0x1b0] sm:$0xff]
    %v418 = vld [vmem:[#allocation2 + $0x1b8] sm:$0xff]
    %v419 = vld [vmem:[#allocation2 + $0x1c0] sm:$0xff]
    %v420 = vld [vmem:[#allocation2 + $0x1c8] sm:$0xff]
    %v421 = vld [vmem:[#allocation2 + $0x1d0] sm:$0xff]
    %v422 = vld [vmem:[#allocation2 + $0x1d8] sm:$0xff]
    %v423 = vld [vmem:[#allocation2 + $0x1e0] sm:$0xff]
    %v424 = vld [vmem:[#allocation2 + $0x1e8] sm:$0xff]
    %v425 = vld [vmem:[#allocation2 + $0x1f0] sm:$0xff]
    %v426 = vld [vmem:[#allocation2 + $0x1f8] sm:$0xff]
    %v427 = vld [vmem:[#allocation2 + $0x200] sm:$0xff]
    %v428 = vld [vmem:[#allocation2 + $0x208] sm:$0xff]
    %v429 = vld [vmem:[#allocation2 + $0x210] sm:$0xff]
    %v430 = vld [vmem:[#allocation2 + $0x218] sm:$0xff]
    %v431 = vld [vmem:[#allocation2 + $0x220] sm:$0xff]
    %v432 = vld [vmem:[#allocation2 + $0x228] sm:$0xff]
    %v433 = vld [vmem:[#allocation2 + $0x230] sm:$0xff]
    %v434 = vld [vmem:[#allocation2 + $0x238] sm:$0xff]
    %v435 = vld [vmem:[#allocation2 + $0x240] sm:$0xff]
    %v436 = vld [vmem:[#allocation2 + $0x248] sm:$0xff]
    %v437 = vld [vmem:[#allocation2 + $0x250] sm:$0xff]
    %v438 = vld [vmem:[#allocation2 + $0x258] sm:$0xff]
    %v439 = vld [vmem:[#allocation2 + $0x260] sm:$0xff]
    %v440 = vld [vmem:[#allocation2 + $0x268] sm:$0xff]
    %v441 = vld [vmem:[#allocation2 + $0x270] sm:$0xff]
    %v442 = vld [vmem:[#allocation2 + $0x278] sm:$0xff]
    %v443 = vld [vmem:[#allocation2 + $0x280] sm:$0xff]
    %v444 = vld [vmem:[#allocation2 + $0x288] sm:$0xff]
    %v445 = vld [vmem:[#allocation2 + $0x290] sm:$0xff]
    %v446 = vld [vmem:[#allocation2 + $0x298] sm:$0xff]
    %v447 = vld [vmem:[#allocation2 + $0x2a0] sm:$0xff]
    %v448 = vld [vmem:[#allocation2 + $0x2a8] sm:$0xff]
    %v449 = vld [vmem:[#allocation2 + $0x2b0] sm:$0xff]
    %v450 = vld [vmem:[#allocation2 + $0x2b8] sm:$0xff]
    %v451 = vld [vmem:[#allocation2 + $0x2c0] sm:$0xff]
    %v452 = vld [vmem:[#allocation2 + $0x2c8] sm:$0xff]
    %v453 = vld [vmem:[#allocation2 + $0x2d0] sm:$0xff]
    %v454 = vld [vmem:[#allocation2 + $0x2d8] sm:$0xff]
    %v455 = vld [vmem:[#allocation2 + $0x2e0] sm:$0xff]
    %v456 = vld [vmem:[#allocation2 + $0x2e8] sm:$0xff]
    %v457 = vld [vmem:[#allocation2 + $0x2f0] sm:$0xff]
    %v458 = vld [vmem:[#allocation2 + $0x2f8] sm:$0xff]
    %v459 = vld [vmem:[#allocation2 + $0x300] sm:$0xff]
    %v460 = vld [vmem:[#allocation2 + $0x308] sm:$0xff]
    %v461 = vld [vmem:[#allocation2 + $0x310] sm:$0xff]
    %v462 = vld [vmem:[#allocation2 + $0x318] sm:$0xff]
    %v463 = vld [vmem:[#allocation2 + $0x320] sm:$0xff]
    %v464 = vld [vmem:[#allocation2 + $0x328] sm:$0xff]
    %v465 = vld [vmem:[#allocation2 + $0x330] sm:$0xff]
    %v466 = vld [vmem:[#allocation2 + $0x338] sm:$0xff]
    %v467 = vld [vmem:[#allocation2 + $0x340] sm:$0xff]
    %v468 = vld [vmem:[#allocation2 + $0x348] sm:$0xff]
    %v469 = vld [vmem:[#allocation2 + $0x350] sm:$0xff]
    %v470 = vld [vmem:[#allocation2 + $0x358] sm:$0xff]
    %v471 = vld [vmem:[#allocation2 + $0x360] sm:$0xff]
    %v472 = vld [vmem:[#allocation2 + $0x368] sm:$0xff]
    %v473 = vld [vmem:[#allocation2 + $0x370] sm:$0xff]
    %v474 = vld [vmem:[#allocation2 + $0x378] sm:$0xff]
    %v475 = vld [vmem:[#allocation2 + $0x380] sm:$0xff]
    %v476 = vld [vmem:[#allocation2 + $0x388] sm:$0xff]
    %v477 = vld [vmem:[#allocation2 + $0x390] sm:$0xff]
    %v478 = vld [vmem:[#allocation2 + $0x398] sm:$0xff]
    %v479 = vld [vmem:[#allocation2 + $0x3a0] sm:$0xff]
    %v480 = vld [vmem:[#allocation2 + $0x3a8] sm:$0xff]
    %v481 = vld [vmem:[#allocation2 + $0x3b0] sm:$0xff]
    %v482 = vld [vmem:[#allocation2 + $0x3b8] sm:$0xff]
    %v483 = vld [vmem:[#allocation2 + $0x3c0] sm:$0xff]
    %v484 = vld [vmem:[#allocation2 + $0x3c8] sm:$0xff]
    %v485 = vld [vmem:[#allocation2 + $0x3d0] sm:$0xff]
    %v486 = vld [vmem:[#allocation2 + $0x3d8] sm:$0xff]
    %v487 = vld [vmem:[#allocation2 + $0x3e0] sm:$0xff]
    %v488 = vld [vmem:[#allocation2 + $0x3e8] sm:$0xff]
    %v489 = vld [vmem:[#allocation2 + $0x3f0] sm:$0xff]
    %v490 = vld [vmem:[#allocation2 + $0x3f8] sm:$0xff]
    %v491 = vld [vmem:[#allocation2 + $0x400] sm:$0xff]
    %v492 = vld [vmem:[#allocation2 + $0x408] sm:$0xff]
    %v493 = vld [vmem:[#allocation2 + $0x410] sm:$0xff]
    %v494 = vld [vmem:[#allocation2 + $0x418] sm:$0xff]
    %v495 = vld [vmem:[#allocation2 + $0x420] sm:$0xff]
    %v496 = vld [vmem:[#allocation2 + $0x428] sm:$0xff]
    %v497 = vld [vmem:[#allocation2 + $0x430] sm:$0xff]
    %v498 = vld [vmem:[#allocation2 + $0x438] sm:$0xff]
    %v499 = vld [vmem:[#allocation2 + $0x440] sm:$0xff]
    %v500 = vld [vmem:[#allocation2 + $0x448] sm:$0xff]
    %v501 = vld [vmem:[#allocation2 + $0x450] sm:$0xff]
    %v502 = vld [vmem:[#allocation2 + $0x458] sm:$0xff]
    %v503 = vld [vmem:[#allocation2 + $0x460] sm:$0xff]
    %v504 = vld [vmem:[#allocation2 + $0x468] sm:$0xff]
    %v505 = vld [vmem:[#allocation2 + $0x470] sm:$0xff]
    %v506 = vld [vmem:[#allocation2 + $0x478] sm:$0xff]
    %v507 = vld [vmem:[#allocation2 + $0x480] sm:$0xff]
    %v508 = vld [vmem:[#allocation2 + $0x488] sm:$0xff]
    %v509 = vld [vmem:[#allocation2 + $0x490] sm:$0xff]
    %v510 = vld [vmem:[#allocation2 + $0x498] sm:$0xff]
    %v511 = vld [vmem:[#allocation2 + $0x4a0] sm:$0xff]
    %v512 = vld [vmem:[#allocation2 + $0x4a8] sm:$0xff]
    %v513 = vld [vmem:[#allocation2 + $0x4b0] sm:$0xff]
    %v514 = vld [vmem:[#allocation2 + $0x4b8] sm:$0xff]
    %v515 = vld [vmem:[#allocation2 + $0x4c0] sm:$0xff]
    %v516 = vld [vmem:[#allocation2 + $0x4c8] sm:$0xff]
    %v517 = vld [vmem:[#allocation2 + $0x4d0] sm:$0xff]
    %v518 = vld [vmem:[#allocation2 + $0x4d8] sm:$0xff]
    %v519 = vld [vmem:[#allocation2 + $0x4e0] sm:$0xff]
    %v520 = vld [vmem:[#allocation2 + $0x4e8] sm:$0xff]
    %v521 = vld [vmem:[#allocation2 + $0x4f0] sm:$0xff]
    %v522 = vld [vmem:[#allocation2 + $0x4f8] sm:$0xff]
    %v523 = vld [vmem:[#allocation2 + $0x500] sm:$0xff]
    %v524 = vld [vmem:[#allocation2 + $0x508] sm:$0xff]
    %v525 = vld [vmem:[#allocation2 + $0x510] sm:$0xff]
    %v526 = vld [vmem:[#allocation2 + $0x518] sm:$0xff]
    %v527 = vld [vmem:[#allocation2 + $0x520] sm:$0xff]
    %v528 = vld [vmem:[#allocation2 + $0x528] sm:$0xff]
    %v529 = vld [vmem:[#allocation2 + $0x530] sm:$0xff]
    %v530 = vld [vmem:[#allocation2 + $0x538] sm:$0xff]
    %v531 = vld [vmem:[#allocation2 + $0x540] sm:$0xff]
    %v532 = vld [vmem:[#allocation2 + $0x548] sm:$0xff]
    %v533 = vld [vmem:[#allocation2 + $0x550] sm:$0xff]
    %v534 = vld [vmem:[#allocation2 + $0x558] sm:$0xff]
    %v535 = vld [vmem:[#allocation2 + $0x560] sm:$0xff]
    %v536 = vld [vmem:[#allocation2 + $0x568] sm:$0xff]
    %v537 = vld [vmem:[#allocation2 + $0x570] sm:$0xff]
    %v538 = vld [vmem:[#allocation2 + $0x578] sm:$0xff]
    %v539 = vld [vmem:[#allocation2 + $0x580] sm:$0xff]
    %v540 = vld [vmem:[#allocation2 + $0x588] sm:$0xff]
    %v541 = vld [vmem:[#allocation2 + $0x590] sm:$0xff]
    %v542 = vld [vmem:[#allocation2 + $0x598] sm:$0xff]
    %v543 = vld [vmem:[#allocation2 + $0x5a0] sm:$0xff]
    %v544 = vld [vmem:[#allocation2 + $0x5a8] sm:$0xff]
    %v545 = vld [vmem:[#allocation2 + $0x5b0] sm:$0xff]
    %v546 = vld [vmem:[#allocation2 + $0x5b8] sm:$0xff]
    %v547 = vld [vmem:[#allocation2 + $0x5c0] sm:$0xff]
    %v548 = vld [vmem:[#allocation2 + $0x5c8] sm:$0xff]
    %v549 = vld [vmem:[#allocation2 + $0x5d0] sm:$0xff]
    %v550 = vld [vmem:[#allocation2 + $0x5d8] sm:$0xff]
    %v551 = vld [vmem:[#allocation2 + $0x5e0] sm:$0xff]
    %v552 = vld [vmem:[#allocation2 + $0x5e8] sm:$0xff]
    %v553 = vld [vmem:[#allocation2 + $0x5f0] sm:$0xff]
    %v554 = vld [vmem:[#allocation2 + $0x5f8] sm:$0xff]
    %v555 = vld [vmem:[#allocation2 + $0x600] sm:$0xff]
    %v556 = vld [vmem:[#allocation2 + $0x608] sm:$0xff]
    %v557 = vld [vmem:[#allocation2 + $0x610] sm:$0xff]
    %v558 = vld [vmem:[#allocation2 + $0x618] sm:$0xff]
    %v559 = vld [vmem:[#allocation2 + $0x620] sm:$0xff]
    %v560 = vld [vmem:[#allocation2 + $0x628] sm:$0xff]
    %v561 = vld [vmem:[#allocation2 + $0x630] sm:$0xff]
    %v562 = vld [vmem:[#allocation2 + $0x638] sm:$0xff]
    %v563 = vld [vmem:[#allocation2 + $0x640] sm:$0xff]
    %v564 = vld [vmem:[#allocation2 + $0x648] sm:$0xff]
    %v565 = vld [vmem:[#allocation2 + $0x650] sm:$0xff]
    %v566 = vld [vmem:[#allocation2 + $0x658] sm:$0xff]
    %v567 = vld [vmem:[#allocation2 + $0x660] sm:$0xff]
    %v568 = vld [vmem:[#allocation2 + $0x668] sm:$0xff]
    %v569 = vld [vmem:[#allocation2 + $0x670] sm:$0xff]
    %v570 = vld [vmem:[#allocation2 + $0x678] sm:$0xff]
    %v571 = vld [vmem:[#allocation2 + $0x680] sm:$0xff]
    %v572 = vld [vmem:[#allocation2 + $0x688] sm:$0xff]
    %v573 = vld [vmem:[#allocation2 + $0x690] sm:$0xff]
    %v574 = vld [vmem:[#allocation2 + $0x698] sm:$0xff]
    %v575 = vld [vmem:[#allocation2 + $0x6a0] sm:$0xff]
    %v576 = vld [vmem:[#allocation2 + $0x6a8] sm:$0xff]
    %v577 = vld [vmem:[#allocation2 + $0x6b0] sm:$0xff]
    %v578 = vld [vmem:[#allocation2 + $0x6b8] sm:$0xff]
    %v579 = vld [vmem:[#allocation2 + $0x6c0] sm:$0xff]
    %v580 = vld [vmem:[#allocation2 + $0x6c8] sm:$0xff]
    %v581 = vld [vmem:[#allocation2 + $0x6d0] sm:$0xff]
    %v582 = vld [vmem:[#allocation2 + $0x6d8] sm:$0xff]
    %v583 = vld [vmem:[#allocation2 + $0x6e0] sm:$0xff]
    %v584 = vld [vmem:[#allocation2 + $0x6e8] sm:$0xff]
    %v585 = vld [vmem:[#allocation2 + $0x6f0] sm:$0xff]
    %v586 = vld [vmem:[#allocation2 + $0x6f8] sm:$0xff]
    %v587 = vld [vmem:[#allocation2 + $0x700] sm:$0xff]
    %v588 = vld [vmem:[#allocation2 + $0x708] sm:$0xff]
    %v589 = vld [vmem:[#allocation2 + $0x710] sm:$0xff]
    %v590 = vld [vmem:[#allocation2 + $0x718] sm:$0xff]
    %v591 = vld [vmem:[#allocation2 + $0x720] sm:$0xff]
    %v592 = vld [vmem:[#allocation2 + $0x728] sm:$0xff]
    %v593 = vld [vmem:[#allocation2 + $0x730] sm:$0xff]
    %v594 = vld [vmem:[#allocation2 + $0x738] sm:$0xff]
    %v595 = vld [vmem:[#allocation2 + $0x740] sm:$0xff]
    %v596 = vld [vmem:[#allocation2 + $0x748] sm:$0xff]
    %v597 = vld [vmem:[#allocation2 + $0x750] sm:$0xff]
    %v598 = vld [vmem:[#allocation2 + $0x758] sm:$0xff]
    %v599 = vld [vmem:[#allocation2 + $0x760] sm:$0xff]
    %v600 = vld [vmem:[#allocation2 + $0x768] sm:$0xff]
    %v601 = vld [vmem:[#allocation2 + $0x770] sm:$0xff]
    %v602 = vld [vmem:[#allocation2 + $0x778] sm:$0xff]
    %v603 = vld [vmem:[#allocation2 + $0x780] sm:$0xff]
    %v604 = vld [vmem:[#allocation2 + $0x788] sm:$0xff]
    %v605 = vld [vmem:[#allocation2 + $0x790] sm:$0xff]
    %v606 = vld [vmem:[#allocation2 + $0x798] sm:$0xff]
    %v607 = vld [vmem:[#allocation2 + $0x7a0] sm:$0xff]
    %v608 = vld [vmem:[#allocation2 + $0x7a8] sm:$0xff]
    %v609 = vld [vmem:[#allocation2 + $0x7b0] sm:$0xff]
    %v610 = vld [vmem:[#allocation2 + $0x7b8] sm:$0xff]
    %v611 = vld [vmem:[#allocation2 + $0x7c0] sm:$0xff]
    %v612 = vld [vmem:[#allocation2 + $0x7c8] sm:$0xff]
    %v613 = vld [vmem:[#allocation2 + $0x7d0] sm:$0xff]
    %v614 = vld [vmem:[#allocation2 + $0x7d8] sm:$0xff]
    %v615 = vld [vmem:[#allocation2 + $0x7e0] sm:$0xff]
    %v616 = vld [vmem:[#allocation2 + $0x7e8] sm:$0xff]
    %v617 = vld [vmem:[#allocation2 + $0x7f0] sm:$0xff]
    %v618 = vld [vmem:[#allocation2 + $0x7f8] sm:$0xff]
    %v619 = vld [vmem:[%s6] sm:$0xf]
    %v621 = vperm.slane %v362, 0
    %v622 = vperm.slane %v362, 1
    %v623 = vperm.slane %v362, 2
    %v624 = vperm.slane %v362, 3
    %630 = vst [vmem:[#allocation1] ss:$4 sm:$0xff] %v105
    %v631 = vld.sshfl [vmem:[#allocation1] sm:$0xff pattern:$0x73625140]
    %v632 = vld.sshfl [vmem:[#allocation1 + $0x8] sm:$0xff pattern:$0x73625140]
    %v633 = vld.sshfl [vmem:[#allocation1 + $0x10] sm:$0xff pattern:$0x73625140]
    %v634 = vld.sshfl [vmem:[#allocation1 + $0x18] sm:$0xff pattern:$0x73625140]
    %639 = vmatpush.msra.mxu0 %v166
    %640 = vmatpush.msra.mxu0 %v162
    %641 = vmatpush.msra.mxu0 %v158
    %642 = vmatpush.msra.mxu0 %v154
    %643 = vmatpush.msra.mxu0 %v150
    %644 = vmatpush.msra.mxu0 %v146
    %645 = vmatpush.msra.mxu0 %v142
    %646 = vmatpush.msra.mxu0 %v138
    %647 = vmatpush.msra.mxu0 %v134
    %648 = vmatpush.msra.mxu0 %v130
    %649 = vmatpush.msra.mxu0 %v126
    %650 = vmatpush.msra.mxu0 %v122
    %651 = vmatpush.msra.mxu0 %v118
    %652 = vmatpush.msra.mxu0 %v114
    %653 = vmatpush.msra.mxu0 %v110
    %654 = vmatpush.msra.mxu0 %v106
    %655 = vmatmul.f32.gmra.mxu0 %v631
    %v656 = vpop.f32.mrf.mxu0
    %v657 = vadd.f32 %v621, %v656
    %658 = vdwg.mxu0
    %659 = vmatpush.msra.mxu0 %v230
    %660 = vmatpush.msra.mxu0 %v226
    %661 = vmatpush.msra.mxu0 %v222
    %662 = vmatpush.msra.mxu0 %v218
    %663 = vmatpush.msra.mxu0 %v214
    %664 = vmatpush.msra.mxu0 %v210
    %665 = vmatpush.msra.mxu0 %v206
    %666 = vmatpush.msra.mxu0 %v202
    %667 = vmatpush.msra.mxu0 %v198
    %668 = vmatpush.msra.mxu0 %v194
    %669 = vmatpush.msra.mxu0 %v190
    %670 = vmatpush.msra.mxu0 %v186
    %671 = vmatpush.msra.mxu0 %v182
    %672 = vmatpush.msra.mxu0 %v178
    %673 = vmatpush.msra.mxu0 %v174
    %674 = vmatpush.msra.mxu0 %v170
    %675 = vmatmul.f32.gmra.mxu0 %v632
    %v676 = vpop.f32.mrf.mxu0
    %v677 = vadd.f32 %v657, %v676
    %678 = vdwg.mxu0
    %679 = vmatpush.msra.mxu0 %v294
    %680 = vmatpush.msra.mxu0 %v290
    %681 = vmatpush.msra.mxu0 %v286
    %682 = vmatpush.msra.mxu0 %v282
    %683 = vmatpush.msra.mxu0 %v278
    %684 = vmatpush.msra.mxu0 %v274
    %685 = vmatpush.msra.mxu0 %v270
    %686 = vmatpush.msra.mxu0 %v266
    %687 = vmatpush.msra.mxu0 %v262
    %688 = vmatpush.msra.mxu0 %v258
    %689 = vmatpush.msra.mxu0 %v254
    %690 = vmatpush.msra.mxu0 %v250
    %691 = vmatpush.msra.mxu0 %v246
    %692 = vmatpush.msra.mxu0 %v242
    %693 = vmatpush.msra.mxu0 %v238
    %694 = vmatpush.msra.mxu0 %v234
    %695 = vmatmul.f32.gmra.mxu0 %v633
    %v696 = vpop.f32.mrf.mxu0
    %v697 = vadd.f32 %v677, %v696
    %698 = vdwg.mxu0
    %699 = vmatpush.msra.mxu0 %v358
    %700 = vmatpush.msra.mxu0 %v354
    %701 = vmatpush.msra.mxu0 %v350
    %702 = vmatpush.msra.mxu0 %v346
    %703 = vmatpush.msra.mxu0 %v342
    %704 = vmatpush.msra.mxu0 %v338
    %705 = vmatpush.msra.mxu0 %v334
    %706 = vmatpush.msra.mxu0 %v330
    %707 = vmatpush.msra.mxu0 %v326
    %708 = vmatpush.msra.mxu0 %v322
    %709 = vmatpush.msra.mxu0 %v318
    %710 = vmatpush.msra.mxu0 %v314
    %711 = vmatpush.msra.mxu0 %v310
    %712 = vmatpush.msra.mxu0 %v306
    %713 = vmatpush.msra.mxu0 %v302
    %714 = vmatpush.msra.mxu0 %v298
    %715 = vmatmul.f32.gmra.mxu0 %v634
    %v716 = vpop.f32.mrf.mxu0
    %v717 = vadd.f32 %v697, %v716
    %718 = vdwg.mxu0
    %719 = vmatpush.msra.mxu0 %v167
    %720 = vmatpush.msra.mxu0 %v163
    %721 = vmatpush.msra.mxu0 %v159
    %722 = vmatpush.msra.mxu0 %v155
    %723 = vmatpush.msra.mxu0 %v151
    %724 = vmatpush.msra.mxu0 %v147
    %725 = vmatpush.msra.mxu0 %v143
    %726 = vmatpush.msra.mxu0 %v139
    %727 = vmatpush.msra.mxu0 %v135
    %728 = vmatpush.msra.mxu0 %v131
    %729 = vmatpush.msra.mxu0 %v127
    %730 = vmatpush.msra.mxu0 %v123
    %731 = vmatpush.msra.mxu0 %v119
    %732 = vmatpush.msra.mxu0 %v115
    %733 = vmatpush.msra.mxu0 %v111
    %734 = vmatpush.msra.mxu0 %v107
    %735 = vmatmul.f32.gmra.mxu0 %v631
    %v736 = vpop.f32.mrf.mxu0
    %v737 = vadd.f32 %v622, %v736
    %738 = vdwg.mxu0
    %739 = vmatpush.msra.mxu0 %v231
    %740 = vmatpush.msra.mxu0 %v227
    %741 = vmatpush.msra.mxu0 %v223
    %742 = vmatpush.msra.mxu0 %v219
    %743 = vmatpush.msra.mxu0 %v215
    %744 = vmatpush.msra.mxu0 %v211
    %745 = vmatpush.msra.mxu0 %v207
    %746 = vmatpush.msra.mxu0 %v203
    %747 = vmatpush.msra.mxu0 %v199
    %748 = vmatpush.msra.mxu0 %v195
    %749 = vmatpush.msra.mxu0 %v191
    %750 = vmatpush.msra.mxu0 %v187
    %751 = vmatpush.msra.mxu0 %v183
    %752 = vmatpush.msra.mxu0 %v179
    %753 = vmatpush.msra.mxu0 %v175
    %754 = vmatpush.msra.mxu0 %v171
    %755 = vmatmul.f32.gmra.mxu0 %v632
    %v756 = vpop.f32.mrf.mxu0
    %v757 = vadd.f32 %v737, %v756
    %758 = vdwg.mxu0
    %759 = vmatpush.msra.mxu0 %v295
    %760 = vmatpush.msra.mxu0 %v291
    %761 = vmatpush.msra.mxu0 %v287
    %762 = vmatpush.msra.mxu0 %v283
    %763 = vmatpush.msra.mxu0 %v279
    %764 = vmatpush.msra.mxu0 %v275
    %765 = vmatpush.msra.mxu0 %v271
    %766 = vmatpush.msra.mxu0 %v267
    %767 = vmatpush.msra.mxu0 %v263
    %768 = vmatpush.msra.mxu0 %v259
    %769 = vmatpush.msra.mxu0 %v255
    %770 = vmatpush.msra.mxu0 %v251
    %771 = vmatpush.msra.mxu0 %v247
    %772 = vmatpush.msra.mxu0 %v243
    %773 = vmatpush.msra.mxu0 %v239
    %774 = vmatpush.msra.mxu0 %v235
    %775 = vmatmul.f32.gmra.mxu0 %v633
    %v776 = vpop.f32.mrf.mxu0
    %v777 = vadd.f32 %v757, %v776
    %778 = vdwg.mxu0
    %779 = vmatpush.msra.mxu0 %v359
    %780 = vmatpush.msra.mxu0 %v355
    %781 = vmatpush.msra.mxu0 %v351
    %782 = vmatpush.msra.mxu0 %v347
    %783 = vmatpush.msra.mxu0 %v343
    %784 = vmatpush.msra.mxu0 %v339
    %785 = vmatpush.msra.mxu0 %v335
    %786 = vmatpush.msra.mxu0 %v331
    %787 = vmatpush.msra.mxu0 %v327
    %788 = vmatpush.msra.mxu0 %v323
    %789 = vmatpush.msra.mxu0 %v319
    %790 = vmatpush.msra.mxu0 %v315
    %791 = vmatpush.msra.mxu0 %v311
    %792 = vmatpush.msra.mxu0 %v307
    %793 = vmatpush.msra.mxu0 %v303
    %794 = vmatpush.msra.mxu0 %v299
    %795 = vmatmul.f32.gmra.mxu0 %v634
    %v796 = vpop.f32.mrf.mxu0
    %v797 = vadd.f32 %v777, %v796
    %798 = vdwg.mxu0
    %799 = vmatpush.msra.mxu0 %v168
    %800 = vmatpush.msra.mxu0 %v164
    %801 = vmatpush.msra.mxu0 %v160
    %802 = vmatpush.msra.mxu0 %v156
    %803 = vmatpush.msra.mxu0 %v152
    %804 = vmatpush.msra.mxu0 %v148
    %805 = vmatpush.msra.mxu0 %v144
    %806 = vmatpush.msra.mxu0 %v140
    %807 = vmatpush.msra.mxu0 %v136
    %808 = vmatpush.msra.mxu0 %v132
    %809 = vmatpush.msra.mxu0 %v128
    %810 = vmatpush.msra.mxu0 %v124
    %811 = vmatpush.msra.mxu0 %v120
    %812 = vmatpush.msra.mxu0 %v116
    %813 = vmatpush.msra.mxu0 %v112
    %814 = vmatpush.msra.mxu0 %v108
    %815 = vmatmul.f32.gmra.mxu0 %v631
    %v816 = vpop.f32.mrf.mxu0
    %v817 = vadd.f32 %v623, %v816
    %818 = vdwg.mxu0
    %819 = vmatpush.msra.mxu0 %v232
    %820 = vmatpush.msra.mxu0 %v228
    %821 = vmatpush.msra.mxu0 %v224
    %822 = vmatpush.msra.mxu0 %v220
    %823 = vmatpush.msra.mxu0 %v216
    %824 = vmatpush.msra.mxu0 %v212
    %825 = vmatpush.msra.mxu0 %v208
    %826 = vmatpush.msra.mxu0 %v204
    %827 = vmatpush.msra.mxu0 %v200
    %828 = vmatpush.msra.mxu0 %v196
    %829 = vmatpush.msra.mxu0 %v192
    %830 = vmatpush.msra.mxu0 %v188
    %831 = vmatpush.msra.mxu0 %v184
    %832 = vmatpush.msra.mxu0 %v180
    %833 = vmatpush.msra.mxu0 %v176
    %834 = vmatpush.msra.mxu0 %v172
    %835 = vmatmul.f32.gmra.mxu0 %v632
    %v836 = vpop.f32.mrf.mxu0
    %v837 = vadd.f32 %v817, %v836
    %838 = vdwg.mxu0
    %839 = vmatpush.msra.mxu0 %v296
    %840 = vmatpush.msra.mxu0 %v292
    %841 = vmatpush.msra.mxu0 %v288
    %842 = vmatpush.msra.mxu0 %v284
    %843 = vmatpush.msra.mxu0 %v280
    %844 = vmatpush.msra.mxu0 %v276
    %845 = vmatpush.msra.mxu0 %v272
    %846 = vmatpush.msra.mxu0 %v268
    %847 = vmatpush.msra.mxu0 %v264
    %848 = vmatpush.msra.mxu0 %v260
    %849 = vmatpush.msra.mxu0 %v256
    %850 = vmatpush.msra.mxu0 %v252
    %851 = vmatpush.msra.mxu0 %v248
    %852 = vmatpush.msra.mxu0 %v244
    %853 = vmatpush.msra.mxu0 %v240
    %854 = vmatpush.msra.mxu0 %v236
    %855 = vmatmul.f32.gmra.mxu0 %v633
    %v856 = vpop.f32.mrf.mxu0
    %v857 = vadd.f32 %v837, %v856
    %858 = vdwg.mxu0
    %859 = vmatpush.msra.mxu0 %v360
    %860 = vmatpush.msra.mxu0 %v356
    %861 = vmatpush.msra.mxu0 %v352
    %862 = vmatpush.msra.mxu0 %v348
    %863 = vmatpush.msra.mxu0 %v344
    %864 = vmatpush.msra.mxu0 %v340
    %865 = vmatpush.msra.mxu0 %v336
    %866 = vmatpush.msra.mxu0 %v332
    %867 = vmatpush.msra.mxu0 %v328
    %868 = vmatpush.msra.mxu0 %v324
    %869 = vmatpush.msra.mxu0 %v320
    %870 = vmatpush.msra.mxu0 %v316
    %871 = vmatpush.msra.mxu0 %v312
    %872 = vmatpush.msra.mxu0 %v308
    %873 = vmatpush.msra.mxu0 %v304
    %874 = vmatpush.msra.mxu0 %v300
    %875 = vmatmul.f32.gmra.mxu0 %v634
    %v876 = vpop.f32.mrf.mxu0
    %v877 = vadd.f32 %v857, %v876
    %878 = vdwg.mxu0
    %879 = vmatpush.msra.mxu0 %v169
    %880 = vmatpush.msra.mxu0 %v165
    %881 = vmatpush.msra.mxu0 %v161
    %882 = vmatpush.msra.mxu0 %v157
    %883 = vmatpush.msra.mxu0 %v153
    %884 = vmatpush.msra.mxu0 %v149
    %885 = vmatpush.msra.mxu0 %v145
    %886 = vmatpush.msra.mxu0 %v141
    %887 = vmatpush.msra.mxu0 %v137
    %888 = vmatpush.msra.mxu0 %v133
    %889 = vmatpush.msra.mxu0 %v129
    %890 = vmatpush.msra.mxu0 %v125
    %891 = vmatpush.msra.mxu0 %v121
    %892 = vmatpush.msra.mxu0 %v117
    %893 = vmatpush.msra.mxu0 %v113
    %894 = vmatpush.msra.mxu0 %v109
    %895 = vmatmul.f32.gmra.mxu0 %v631
    %v896 = vpop.f32.mrf.mxu0
    %v897 = vadd.f32 %v624, %v896
    %898 = vdwg.mxu0
    %899 = vmatpush.msra.mxu0 %v233
    %900 = vmatpush.msra.mxu0 %v229
    %901 = vmatpush.msra.mxu0 %v225
    %902 = vmatpush.msra.mxu0 %v221
    %903 = vmatpush.msra.mxu0 %v217
    %904 = vmatpush.msra.mxu0 %v213
    %905 = vmatpush.msra.mxu0 %v209
    %906 = vmatpush.msra.mxu0 %v205
    %907 = vmatpush.msra.mxu0 %v201
    %908 = vmatpush.msra.mxu0 %v197
    %909 = vmatpush.msra.mxu0 %v193
    %910 = vmatpush.msra.mxu0 %v189
    %911 = vmatpush.msra.mxu0 %v185
    %912 = vmatpush.msra.mxu0 %v181
    %913 = vmatpush.msra.mxu0 %v177
    %914 = vmatpush.msra.mxu0 %v173
    %915 = vmatmul.f32.gmra.mxu0 %v632
    %v916 = vpop.f32.mrf.mxu0
    %v917 = vadd.f32 %v897, %v916
    %918 = vdwg.mxu0
    %919 = vmatpush.msra.mxu0 %v297
    %920 = vmatpush.msra.mxu0 %v293
    %921 = vmatpush.msra.mxu0 %v289
    %922 = vmatpush.msra.mxu0 %v285
    %923 = vmatpush.msra.mxu0 %v281
    %924 = vmatpush.msra.mxu0 %v277
    %925 = vmatpush.msra.mxu0 %v273
    %926 = vmatpush.msra.mxu0 %v269
    %927 = vmatpush.msra.mxu0 %v265
    %928 = vmatpush.msra.mxu0 %v261
    %929 = vmatpush.msra.mxu0 %v257
    %930 = vmatpush.msra.mxu0 %v253
    %931 = vmatpush.msra.mxu0 %v249
    %932 = vmatpush.msra.mxu0 %v245
    %933 = vmatpush.msra.mxu0 %v241
    %934 = vmatpush.msra.mxu0 %v237
    %935 = vmatmul.f32.gmra.mxu0 %v633
    %v936 = vpop.f32.mrf.mxu0
    %v937 = vadd.f32 %v917, %v936
    %938 = vdwg.mxu0
    %939 = vmatpush.msra.mxu0 %v361
    %940 = vmatpush.msra.mxu0 %v357
    %941 = vmatpush.msra.mxu0 %v353
    %942 = vmatpush.msra.mxu0 %v349
    %943 = vmatpush.msra.mxu0 %v345
    %944 = vmatpush.msra.mxu0 %v341
    %945 = vmatpush.msra.mxu0 %v337
    %946 = vmatpush.msra.mxu0 %v333
    %947 = vmatpush.msra.mxu0 %v329
    %948 = vmatpush.msra.mxu0 %v325
    %949 = vmatpush.msra.mxu0 %v321
    %950 = vmatpush.msra.mxu0 %v317
    %951 = vmatpush.msra.mxu0 %v313
    %952 = vmatpush.msra.mxu0 %v309
    %953 = vmatpush.msra.mxu0 %v305
    %954 = vmatpush.msra.mxu0 %v301
    %955 = vmatmul.f32.gmra.mxu0 %v634
    %v956 = vpop.f32.mrf.mxu0
    %v957 = vadd.f32 %v937, %v956
    %958 = vdwg.mxu0
    %v959 = vmax.f32 %v717, 0.0
    %v960 = vmax.f32 %v797, 0.0
    %v961 = vmax.f32 %v877, 0.0
    %v962 = vmax.f32 %v957, 0.0
    %v964 = vperm.slane %v619, 0
    %v965 = vperm.slane %v619, 1
    %v966 = vperm.slane %v619, 2
    %v967 = vperm.slane %v619, 3
    %972 = vmatpush.msra.mxu0 %v423
    %973 = vmatpush.msra.mxu0 %v419
    %974 = vmatpush.msra.mxu0 %v415
    %975 = vmatpush.msra.mxu0 %v411
    %976 = vmatpush.msra.mxu0 %v407
    %977 = vmatpush.msra.mxu0 %v403
    %978 = vmatpush.msra.mxu0 %v399
    %979 = vmatpush.msra.mxu0 %v395
    %980 = vmatpush.msra.mxu0 %v391
    %981 = vmatpush.msra.mxu0 %v387
    %982 = vmatpush.msra.mxu0 %v383
    %983 = vmatpush.msra.mxu0 %v379
    %984 = vmatpush.msra.mxu0 %v375
    %985 = vmatpush.msra.mxu0 %v371
    %986 = vmatpush.msra.mxu0 %v367
    %987 = vmatpush.msra.mxu0 %v363
    %988 = vmatmul.f32.gmra.mxu0 %v959
    %v989 = vpop.f32.mrf.mxu0
    %v990 = vadd.f32 %v964, %v989
    %991 = vdwg.mxu0
    %992 = vmatpush.msra.mxu0 %v487
    %993 = vmatpush.msra.mxu0 %v483
    %994 = vmatpush.msra.mxu0 %v479
    %995 = vmatpush.msra.mxu0 %v475
    %996 = vmatpush.msra.mxu0 %v471
    %997 = vmatpush.msra.mxu0 %v467
    %998 = vmatpush.msra.mxu0 %v463
    %999 = vmatpush.msra.mxu0 %v459
    %1000 = vmatpush.msra.mxu0 %v455
    %1001 = vmatpush.msra.mxu0 %v451
    %1002 = vmatpush.msra.mxu0 %v447
    %1003 = vmatpush.msra.mxu0 %v443
    %1004 = vmatpush.msra.mxu0 %v439
    %1005 = vmatpush.msra.mxu0 %v435
    %1006 = vmatpush.msra.mxu0 %v431
    %1007 = vmatpush.msra.mxu0 %v427
    %1008 = vmatmul.f32.gmra.mxu0 %v960
    %v1009 = vpop.f32.mrf.mxu0
    %v1010 = vadd.f32 %v990, %v1009
    %1011 = vdwg.mxu0
    %1012 = vmatpush.msra.mxu0 %v551
    %1013 = vmatpush.msra.mxu0 %v547
    %1014 = vmatpush.msra.mxu0 %v543
    %1015 = vmatpush.msra.mxu0 %v539
    %1016 = vmatpush.msra.mxu0 %v535
    %1017 = vmatpush.msra.mxu0 %v531
    %1018 = vmatpush.msra.mxu0 %v527
    %1019 = vmatpush.msra.mxu0 %v523
    %1020 = vmatpush.msra.mxu0 %v519
    %1021 = vmatpush.msra.mxu0 %v515
    %1022 = vmatpush.msra.mxu0 %v511
    %1023 = vmatpush.msra.mxu0 %v507
    %1024 = vmatpush.msra.mxu0 %v503
    %1025 = vmatpush.msra.mxu0 %v499
    %1026 = vmatpush.msra.mxu0 %v495
    %1027 = vmatpush.msra.mxu0 %v491
    %1028 = vmatmul.f32.gmra.mxu0 %v961
    %v1029 = vpop.f32.mrf.mxu0
    %v1030 = vadd.f32 %v1010, %v1029
    %1031 = vdwg.mxu0
    %1032 = vmatpush.msra.mxu0 %v615
    %1033 = vmatpush.msra.mxu0 %v611
    %1034 = vmatpush.msra.mxu0 %v607
    %1035 = vmatpush.msra.mxu0 %v603
    %1036 = vmatpush.msra.mxu0 %v599
    %1037 = vmatpush.msra.mxu0 %v595
    %1038 = vmatpush.msra.mxu0 %v591
    %1039 = vmatpush.msra.mxu0 %v587
    %1040 = vmatpush.msra.mxu0 %v583
    %1041 = vmatpush.msra.mxu0 %v579
    %1042 = vmatpush.msra.mxu0 %v575
    %1043 = vmatpush.msra.mxu0 %v571
    %1044 = vmatpush.msra.mxu0 %v567
    %1045 = vmatpush.msra.mxu0 %v563
    %1046 = vmatpush.msra.mxu0 %v559
    %1047 = vmatpush.msra.mxu0 %v555
    %1048 = vmatmul.f32.gmra.mxu0 %v962
    %v1049 = vpop.f32.mrf.mxu0
    %v1050 = vadd.f32 %v1030, %v1049
    %1051 = vdwg.mxu0
    %1052 = vmatpush.msra.mxu0 %v424
    %1053 = vmatpush.msra.mxu0 %v420
    %1054 = vmatpush.msra.mxu0 %v416
    %1055 = vmatpush.msra.mxu0 %v412
    %1056 = vmatpush.msra.mxu0 %v408
    %1057 = vmatpush.msra.mxu0 %v404
    %1058 = vmatpush.msra.mxu0 %v400
    %1059 = vmatpush.msra.mxu0 %v396
    %1060 = vmatpush.msra.mxu0 %v392
    %1061 = vmatpush.msra.mxu0 %v388
    %1062 = vmatpush.msra.mxu0 %v384
    %1063 = vmatpush.msra.mxu0 %v380
    %1064 = vmatpush.msra.mxu0 %v376
    %1065 = vmatpush.msra.mxu0 %v372
    %1066 = vmatpush.msra.mxu0 %v368
    %1067 = vmatpush.msra.mxu0 %v364
    %1068 = vmatmul.f32.gmra.mxu0 %v959
    %v1069 = vpop.f32.mrf.mxu0
    %v1070 = vadd.f32 %v965, %v1069
    %1071 = vdwg.mxu0
    %1072 = vmatpush.msra.mxu0 %v488
    %1073 = vmatpush.msra.mxu0 %v484
    %1074 = vmatpush.msra.mxu0 %v480
    %1075 = vmatpush.msra.mxu0 %v476
    %1076 = vmatpush.msra.mxu0 %v472
    %1077 = vmatpush.msra.mxu0 %v468
    %1078 = vmatpush.msra.mxu0 %v464
    %1079 = vmatpush.msra.mxu0 %v460
    %1080 = vmatpush.msra.mxu0 %v456
    %1081 = vmatpush.msra.mxu0 %v452
    %1082 = vmatpush.msra.mxu0 %v448
    %1083 = vmatpush.msra.mxu0 %v444
    %1084 = vmatpush.msra.mxu0 %v440
    %1085 = vmatpush.msra.mxu0 %v436
    %1086 = vmatpush.msra.mxu0 %v432
    %1087 = vmatpush.msra.mxu0 %v428
    %1088 = vmatmul.f32.gmra.mxu0 %v960
    %v1089 = vpop.f32.mrf.mxu0
    %v1090 = vadd.f32 %v1070, %v1089
    %1091 = vdwg.mxu0
    %1092 = vmatpush.msra.mxu0 %v552
    %1093 = vmatpush.msra.mxu0 %v548
    %1094 = vmatpush.msra.mxu0 %v544
    %1095 = vmatpush.msra.mxu0 %v540
    %1096 = vmatpush.msra.mxu0 %v536
    %1097 = vmatpush.msra.mxu0 %v532
    %1098 = vmatpush.msra.mxu0 %v528
    %1099 = vmatpush.msra.mxu0 %v524
    %1100 = vmatpush.msra.mxu0 %v520
    %1101 = vmatpush.msra.mxu0 %v516
    %1102 = vmatpush.msra.mxu0 %v512
    %1103 = vmatpush.msra.mxu0 %v508
    %1104 = vmatpush.msra.mxu0 %v504
    %1105 = vmatpush.msra.mxu0 %v500
    %1106 = vmatpush.msra.mxu0 %v496
    %1107 = vmatpush.msra.mxu0 %v492
    %1108 = vmatmul.f32.gmra.mxu0 %v961
    %v1109 = vpop.f32.mrf.mxu0
    %v1110 = vadd.f32 %v1090, %v1109
    %1111 = vdwg.mxu0
    %1112 = vmatpush.msra.mxu0 %v616
    %1113 = vmatpush.msra.mxu0 %v612
    %1114 = vmatpush.msra.mxu0 %v608
    %1115 = vmatpush.msra.mxu0 %v604
    %1116 = vmatpush.msra.mxu0 %v600
    %1117 = vmatpush.msra.mxu0 %v596
    %1118 = vmatpush.msra.mxu0 %v592
    %1119 = vmatpush.msra.mxu0 %v588
    %1120 = vmatpush.msra.mxu0 %v584
    %1121 = vmatpush.msra.mxu0 %v580
    %1122 = vmatpush.msra.mxu0 %v576
    %1123 = vmatpush.msra.mxu0 %v572
    %1124 = vmatpush.msra.mxu0 %v568
    %1125 = vmatpush.msra.mxu0 %v564
    %1126 = vmatpush.msra.mxu0 %v560
    %1127 = vmatpush.msra.mxu0 %v556
    %1128 = vmatmul.f32.gmra.mxu0 %v962
    %v1129 = vpop.f32.mrf.mxu0
    %v1130 = vadd.f32 %v1110, %v1129
    %1131 = vdwg.mxu0
    %1132 = vmatpush.msra.mxu0 %v425
    %1133 = vmatpush.msra.mxu0 %v421
    %1134 = vmatpush.msra.mxu0 %v417
    %1135 = vmatpush.msra.mxu0 %v413
    %1136 = vmatpush.msra.mxu0 %v409
    %1137 = vmatpush.msra.mxu0 %v405
    %1138 = vmatpush.msra.mxu0 %v401
    %1139 = vmatpush.msra.mxu0 %v397
    %1140 = vmatpush.msra.mxu0 %v393
    %1141 = vmatpush.msra.mxu0 %v389
    %1142 = vmatpush.msra.mxu0 %v385
    %1143 = vmatpush.msra.mxu0 %v381
    %1144 = vmatpush.msra.mxu0 %v377
    %1145 = vmatpush.msra.mxu0 %v373
    %1146 = vmatpush.msra.mxu0 %v369
    %1147 = vmatpush.msra.mxu0 %v365
    %1148 = vmatmul.f32.gmra.mxu0 %v959
    %v1149 = vpop.f32.mrf.mxu0
    %v1150 = vadd.f32 %v966, %v1149
    %1151 = vdwg.mxu0
    %1152 = vmatpush.msra.mxu0 %v489
    %1153 = vmatpush.msra.mxu0 %v485
    %1154 = vmatpush.msra.mxu0 %v481
    %1155 = vmatpush.msra.mxu0 %v477
    %1156 = vmatpush.msra.mxu0 %v473
    %1157 = vmatpush.msra.mxu0 %v469
    %1158 = vmatpush.msra.mxu0 %v465
    %1159 = vmatpush.msra.mxu0 %v461
    %1160 = vmatpush.msra.mxu0 %v457
    %1161 = vmatpush.msra.mxu0 %v453
    %1162 = vmatpush.msra.mxu0 %v449
    %1163 = vmatpush.msra.mxu0 %v445
    %1164 = vmatpush.msra.mxu0 %v441
    %1165 = vmatpush.msra.mxu0 %v437
    %1166 = vmatpush.msra.mxu0 %v433
    %1167 = vmatpush.msra.mxu0 %v429
    %1168 = vmatmul.f32.gmra.mxu0 %v960
    %v1169 = vpop.f32.mrf.mxu0
    %v1170 = vadd.f32 %v1150, %v1169
    %1171 = vdwg.mxu0
    %1172 = vmatpush.msra.mxu0 %v553
    %1173 = vmatpush.msra.mxu0 %v549
    %1174 = vmatpush.msra.mxu0 %v545
    %1175 = vmatpush.msra.mxu0 %v541
    %1176 = vmatpush.msra.mxu0 %v537
    %1177 = vmatpush.msra.mxu0 %v533
    %1178 = vmatpush.msra.mxu0 %v529
    %1179 = vmatpush.msra.mxu0 %v525
    %1180 = vmatpush.msra.mxu0 %v521
    %1181 = vmatpush.msra.mxu0 %v517
    %1182 = vmatpush.msra.mxu0 %v513
    %1183 = vmatpush.msra.mxu0 %v509
    %1184 = vmatpush.msra.mxu0 %v505
    %1185 = vmatpush.msra.mxu0 %v501
    %1186 = vmatpush.msra.mxu0 %v497
    %1187 = vmatpush.msra.mxu0 %v493
    %1188 = vmatmul.f32.gmra.mxu0 %v961
    %v1189 = vpop.f32.mrf.mxu0
    %v1190 = vadd.f32 %v1170, %v1189
    %1191 = vdwg.mxu0
    %1192 = vmatpush.msra.mxu0 %v617
    %1193 = vmatpush.msra.mxu0 %v613
    %1194 = vmatpush.msra.mxu0 %v609
    %1195 = vmatpush.msra.mxu0 %v605
    %1196 = vmatpush.msra.mxu0 %v601
    %1197 = vmatpush.msra.mxu0 %v597
    %1198 = vmatpush.msra.mxu0 %v593
    %1199 = vmatpush.msra.mxu0 %v589
    %1200 = vmatpush.msra.mxu0 %v585
    %1201 = vmatpush.msra.mxu0 %v581
    %1202 = vmatpush.msra.mxu0 %v577
    %1203 = vmatpush.msra.mxu0 %v573
    %1204 = vmatpush.msra.mxu0 %v569
    %1205 = vmatpush.msra.mxu0 %v565
    %1206 = vmatpush.msra.mxu0 %v561
    %1207 = vmatpush.msra.mxu0 %v557
    %1208 = vmatmul.f32.gmra.mxu0 %v962
    %v1209 = vpop.f32.mrf.mxu0
    %v1210 = vadd.f32 %v1190, %v1209
    %1211 = vdwg.mxu0
    %1212 = vmatpush.msra.mxu0 %v426
    %1213 = vmatpush.msra.mxu0 %v422
    %1214 = vmatpush.msra.mxu0 %v418
    %1215 = vmatpush.msra.mxu0 %v414
    %1216 = vmatpush.msra.mxu0 %v410
    %1217 = vmatpush.msra.mxu0 %v406
    %1218 = vmatpush.msra.mxu0 %v402
    %1219 = vmatpush.msra.mxu0 %v398
    %1220 = vmatpush.msra.mxu0 %v394
    %1221 = vmatpush.msra.mxu0 %v390
    %1222 = vmatpush.msra.mxu0 %v386
    %1223 = vmatpush.msra.mxu0 %v382
    %1224 = vmatpush.msra.mxu0 %v378
    %1225 = vmatpush.msra.mxu0 %v374
    %1226 = vmatpush.msra.mxu0 %v370
    %1227 = vmatpush.msra.mxu0 %v366
    %1228 = vmatmul.f32.gmra.mxu0 %v959
    %v1229 = vpop.f32.mrf.mxu0
    %v1230 = vadd.f32 %v967, %v1229
    %1231 = vdwg.mxu0
    %1232 = vmatpush.msra.mxu0 %v490
    %1233 = vmatpush.msra.mxu0 %v486
    %1234 = vmatpush.msra.mxu0 %v482
    %1235 = vmatpush.msra.mxu0 %v478
    %1236 = vmatpush.msra.mxu0 %v474
    %1237 = vmatpush.msra.mxu0 %v470
    %1238 = vmatpush.msra.mxu0 %v466
    %1239 = vmatpush.msra.mxu0 %v462
    %1240 = vmatpush.msra.mxu0 %v458
    %1241 = vmatpush.msra.mxu0 %v454
    %1242 = vmatpush.msra.mxu0 %v450
    %1243 = vmatpush.msra.mxu0 %v446
    %1244 = vmatpush.msra.mxu0 %v442
    %1245 = vmatpush.msra.mxu0 %v438
    %1246 = vmatpush.msra.mxu0 %v434
    %1247 = vmatpush.msra.mxu0 %v430
    %1248 = vmatmul.f32.gmra.mxu0 %v960
    %v1249 = vpop.f32.mrf.mxu0
    %v1250 = vadd.f32 %v1230, %v1249
    %1251 = vdwg.mxu0
    %1252 = vmatpush.msra.mxu0 %v554
    %1253 = vmatpush.msra.mxu0 %v550
    %1254 = vmatpush.msra.mxu0 %v546
    %1255 = vmatpush.msra.mxu0 %v542
    %1256 = vmatpush.msra.mxu0 %v538
    %1257 = vmatpush.msra.mxu0 %v534
    %1258 = vmatpush.msra.mxu0 %v530
    %1259 = vmatpush.msra.mxu0 %v526
    %1260 = vmatpush.msra.mxu0 %v522
    %1261 = vmatpush.msra.mxu0 %v518
    %1262 = vmatpush.msra.mxu0 %v514
    %1263 = vmatpush.msra.mxu0 %v510
    %1264 = vmatpush.msra.mxu0 %v506
    %1265 = vmatpush.msra.mxu0 %v502
    %1266 = vmatpush.msra.mxu0 %v498
    %1267 = vmatpush.msra.mxu0 %v494
    %1268 = vmatmul.f32.gmra.mxu0 %v961
    %v1269 = vpop.f32.mrf.mxu0
    %v1270 = vadd.f32 %v1250, %v1269
    %1271 = vdwg.mxu0
    %1272 = vmatpush.msra.mxu0 %v618
    %1273 = vmatpush.msra.mxu0 %v614
    %1274 = vmatpush.msra.mxu0 %v610
    %1275 = vmatpush.msra.mxu0 %v606
    %1276 = vmatpush.msra.mxu0 %v602
    %1277 = vmatpush.msra.mxu0 %v598
    %1278 = vmatpush.msra.mxu0 %v594
    %1279 = vmatpush.msra.mxu0 %v590
    %1280 = vmatpush.msra.mxu0 %v586
    %1281 = vmatpush.msra.mxu0 %v582
    %1282 = vmatpush.msra.mxu0 %v578
    %1283 = vmatpush.msra.mxu0 %v574
    %1284 = vmatpush.msra.mxu0 %v570
    %1285 = vmatpush.msra.mxu0 %v566
    %1286 = vmatpush.msra.mxu0 %v562
    %1287 = vmatpush.msra.mxu0 %v558
    %1288 = vmatmul.f32.gmra.mxu0 %v962
    %v1289 = vpop.f32.mrf.mxu0
    %v1290 = vadd.f32 %v1270, %v1289
    %1291 = vdwg.mxu0
    %v1292 = vld [vmem:[%s1] sm:$0x3f]
    %v1293 = vld [vmem:[#allocation5] sm:$0xff]
    %v1294 = vld [vmem:[#allocation5 + $0x8] sm:$0xff]
    %v1295 = vld [vmem:[#allocation5 + $0x10] sm:$0xff]
    %v1296 = vld [vmem:[#allocation5 + $0x18] sm:$0xff]
    %v1297 = vld [vmem:[#allocation5 + $0x20] sm:$0xff]
    %v1298 = vld [vmem:[#allocation5 + $0x28] sm:$0xff]
    %v1299 = vld [vmem:[#allocation5 + $0x30] sm:$0xff]
    %v1300 = vld [vmem:[#allocation5 + $0x38] sm:$0xff]
    %v1301 = vld [vmem:[#allocation5 + $0x40] sm:$0xff]
    %v1302 = vld [vmem:[#allocation5 + $0x48] sm:$0xff]
    %v1303 = vld [vmem:[#allocation5 + $0x50] sm:$0xff]
    %v1304 = vld [vmem:[#allocation5 + $0x58] sm:$0xff]
    %v1305 = vld [vmem:[#allocation5 + $0x60] sm:$0xff]
    %v1306 = vld [vmem:[#allocation5 + $0x68] sm:$0xff]
    %v1307 = vld [vmem:[#allocation5 + $0x70] sm:$0xff]
    %v1308 = vld [vmem:[#allocation5 + $0x78] sm:$0xff]
    %v1309 = vld [vmem:[#allocation5 + $0x80] sm:$0xff]
    %v1310 = vld [vmem:[#allocation5 + $0x88] sm:$0xff]
    %v1311 = vld [vmem:[#allocation5 + $0x90] sm:$0xff]
    %v1312 = vld [vmem:[#allocation5 + $0x98] sm:$0xff]
    %v1313 = vld [vmem:[#allocation5 + $0xa0] sm:$0xff]
    %v1314 = vld [vmem:[#allocation5 + $0xa8] sm:$0xff]
    %v1315 = vld [vmem:[#allocation5 + $0xb0] sm:$0xff]
    %v1316 = vld [vmem:[#allocation5 + $0xb8] sm:$0xff]
    %v1317 = vld [vmem:[#allocation5 + $0xc0] sm:$0xff]
    %v1318 = vld [vmem:[#allocation5 + $0xc8] sm:$0xff]
    %v1319 = vld [vmem:[#allocation5 + $0xd0] sm:$0xff]
    %v1320 = vld [vmem:[#allocation5 + $0xd8] sm:$0xff]
    %v1321 = vld [vmem:[#allocation5 + $0xe0] sm:$0xff]
    %v1322 = vld [vmem:[#allocation5 + $0xe8] sm:$0xff]
    %v1323 = vld [vmem:[#allocation5 + $0xf0] sm:$0xff]
    %v1324 = vld [vmem:[#allocation5 + $0xf8] sm:$0xff]
    %v1325 = vld [vmem:[#allocation5 + $0x100] sm:$0xff]
    %v1326 = vld [vmem:[#allocation5 + $0x108] sm:$0xff]
    %v1327 = vld [vmem:[#allocation5 + $0x110] sm:$0xff]
    %v1328 = vld [vmem:[#allocation5 + $0x118] sm:$0xff]
    %v1329 = vld [vmem:[#allocation5 + $0x120] sm:$0xff]
    %v1330 = vld [vmem:[#allocation5 + $0x128] sm:$0xff]
    %v1331 = vld [vmem:[#allocation5 + $0x130] sm:$0xff]
    %v1332 = vld [vmem:[#allocation5 + $0x138] sm:$0xff]
    %v1333 = vld [vmem:[#allocation5 + $0x140] sm:$0xff]
    %v1334 = vld [vmem:[#allocation5 + $0x148] sm:$0xff]
    %v1335 = vld [vmem:[#allocation5 + $0x150] sm:$0xff]
    %v1336 = vld [vmem:[#allocation5 + $0x158] sm:$0xff]
    %v1337 = vld [vmem:[#allocation5 + $0x160] sm:$0xff]
    %v1338 = vld [vmem:[#allocation5 + $0x168] sm:$0xff]
    %v1339 = vld [vmem:[#allocation5 + $0x170] sm:$0xff]
    %v1340 = vld [vmem:[#allocation5 + $0x178] sm:$0xff]
    %v1341 = vld [vmem:[#allocation5 + $0x180] sm:$0xff]
    %v1342 = vld [vmem:[#allocation5 + $0x188] sm:$0xff]
    %v1343 = vld [vmem:[#allocation5 + $0x190] sm:$0xff]
    %v1344 = vld [vmem:[#allocation5 + $0x198] sm:$0xff]
    %v1345 = vld [vmem:[#allocation5 + $0x1a0] sm:$0xff]
    %v1346 = vld [vmem:[#allocation5 + $0x1a8] sm:$0xff]
    %v1347 = vld [vmem:[#allocation5 + $0x1b0] sm:$0xff]
    %v1348 = vld [vmem:[#allocation5 + $0x1b8] sm:$0xff]
    %v1349 = vld [vmem:[#allocation5 + $0x1c0] sm:$0xff]
    %v1350 = vld [vmem:[#allocation5 + $0x1c8] sm:$0xff]
    %v1351 = vld [vmem:[#allocation5 + $0x1d0] sm:$0xff]
    %v1352 = vld [vmem:[#allocation5 + $0x1d8] sm:$0xff]
    %v1353 = vld [vmem:[#allocation5 + $0x1e0] sm:$0xff]
    %v1354 = vld [vmem:[#allocation5 + $0x1e8] sm:$0xff]
    %v1355 = vld [vmem:[#allocation5 + $0x1f0] sm:$0xff]
    %v1356 = vld [vmem:[#allocation5 + $0x1f8] sm:$0xff]
    %v1357 = vld [vmem:[#allocation5 + $0x200] sm:$0xff]
    %v1358 = vld [vmem:[#allocation5 + $0x208] sm:$0xff]
    %v1359 = vld [vmem:[#allocation5 + $0x210] sm:$0xff]
    %v1360 = vld [vmem:[#allocation5 + $0x218] sm:$0xff]
    %v1361 = vld [vmem:[#allocation5 + $0x220] sm:$0xff]
    %v1362 = vld [vmem:[#allocation5 + $0x228] sm:$0xff]
    %v1363 = vld [vmem:[#allocation5 + $0x230] sm:$0xff]
    %v1364 = vld [vmem:[#allocation5 + $0x238] sm:$0xff]
    %v1365 = vld [vmem:[#allocation5 + $0x240] sm:$0xff]
    %v1366 = vld [vmem:[#allocation5 + $0x248] sm:$0xff]
    %v1367 = vld [vmem:[#allocation5 + $0x250] sm:$0xff]
    %v1368 = vld [vmem:[#allocation5 + $0x258] sm:$0xff]
    %v1369 = vld [vmem:[#allocation5 + $0x260] sm:$0xff]
    %v1370 = vld [vmem:[#allocation5 + $0x268] sm:$0xff]
    %v1371 = vld [vmem:[#allocation5 + $0x270] sm:$0xff]
    %v1372 = vld [vmem:[#allocation5 + $0x278] sm:$0xff]
    %v1373 = vld [vmem:[#allocation5 + $0x280] sm:$0xff]
    %v1374 = vld [vmem:[#allocation5 + $0x288] sm:$0xff]
    %v1375 = vld [vmem:[#allocation5 + $0x290] sm:$0xff]
    %v1376 = vld [vmem:[#allocation5 + $0x298] sm:$0xff]
    %v1377 = vld [vmem:[#allocation5 + $0x2a0] sm:$0xff]
    %v1378 = vld [vmem:[#allocation5 + $0x2a8] sm:$0xff]
    %v1379 = vld [vmem:[#allocation5 + $0x2b0] sm:$0xff]
    %v1380 = vld [vmem:[#allocation5 + $0x2b8] sm:$0xff]
    %v1381 = vld [vmem:[#allocation5 + $0x2c0] sm:$0xff]
    %v1382 = vld [vmem:[#allocation5 + $0x2c8] sm:$0xff]
    %v1383 = vld [vmem:[#allocation5 + $0x2d0] sm:$0xff]
    %v1384 = vld [vmem:[#allocation5 + $0x2d8] sm:$0xff]
    %v1385 = vld [vmem:[#allocation5 + $0x2e0] sm:$0xff]
    %v1386 = vld [vmem:[#allocation5 + $0x2e8] sm:$0xff]
    %v1387 = vld [vmem:[#allocation5 + $0x2f0] sm:$0xff]
    %v1388 = vld [vmem:[#allocation5 + $0x2f8] sm:$0xff]
    %v1389 = vld [vmem:[#allocation5 + $0x300] sm:$0xff]
    %v1390 = vld [vmem:[#allocation5 + $0x308] sm:$0xff]
    %v1391 = vld [vmem:[#allocation5 + $0x310] sm:$0xff]
    %v1392 = vld [vmem:[#allocation5 + $0x318] sm:$0xff]
    %v1393 = vld [vmem:[#allocation5 + $0x320] sm:$0xff]
    %v1394 = vld [vmem:[#allocation5 + $0x328] sm:$0xff]
    %v1395 = vld [vmem:[#allocation5 + $0x330] sm:$0xff]
    %v1396 = vld [vmem:[#allocation5 + $0x338] sm:$0xff]
    %v1397 = vld [vmem:[#allocation5 + $0x340] sm:$0xff]
    %v1398 = vld [vmem:[#allocation5 + $0x348] sm:$0xff]
    %v1399 = vld [vmem:[#allocation5 + $0x350] sm:$0xff]
    %v1400 = vld [vmem:[#allocation5 + $0x358] sm:$0xff]
    %v1401 = vld [vmem:[#allocation5 + $0x360] sm:$0xff]
    %v1402 = vld [vmem:[#allocation5 + $0x368] sm:$0xff]
    %v1403 = vld [vmem:[#allocation5 + $0x370] sm:$0xff]
    %v1404 = vld [vmem:[#allocation5 + $0x378] sm:$0xff]
    %v1405 = vld [vmem:[#allocation5 + $0x380] sm:$0xff]
    %v1406 = vld [vmem:[#allocation5 + $0x388] sm:$0xff]
    %v1407 = vld [vmem:[#allocation5 + $0x390] sm:$0xff]
    %v1408 = vld [vmem:[#allocation5 + $0x398] sm:$0xff]
    %v1409 = vld [vmem:[#allocation5 + $0x3a0] sm:$0xff]
    %v1410 = vld [vmem:[#allocation5 + $0x3a8] sm:$0xff]
    %v1411 = vld [vmem:[#allocation5 + $0x3b0] sm:$0xff]
    %v1412 = vld [vmem:[#allocation5 + $0x3b8] sm:$0xff]
    %v1413 = vld [vmem:[#allocation5 + $0x3c0] sm:$0xff]
    %v1414 = vld [vmem:[#allocation5 + $0x3c8] sm:$0xff]
    %v1415 = vld [vmem:[#allocation5 + $0x3d0] sm:$0xff]
    %v1416 = vld [vmem:[#allocation5 + $0x3d8] sm:$0xff]
    %v1417 = vld [vmem:[#allocation5 + $0x3e0] sm:$0xff]
    %v1418 = vld [vmem:[#allocation5 + $0x3e8] sm:$0xff]
    %v1419 = vld [vmem:[#allocation5 + $0x3f0] sm:$0xff]
    %v1420 = vld [vmem:[#allocation5 + $0x3f8] sm:$0xff]
    %v1421 = vld [vmem:[#allocation5 + $0x400] sm:$0xff]
    %v1422 = vld [vmem:[#allocation5 + $0x408] sm:$0xff]
    %v1423 = vld [vmem:[#allocation5 + $0x410] sm:$0xff]
    %v1424 = vld [vmem:[#allocation5 + $0x418] sm:$0xff]
    %v1425 = vld [vmem:[#allocation5 + $0x420] sm:$0xff]
    %v1426 = vld [vmem:[#allocation5 + $0x428] sm:$0xff]
    %v1427 = vld [vmem:[#allocation5 + $0x430] sm:$0xff]
    %v1428 = vld [vmem:[#allocation5 + $0x438] sm:$0xff]
    %v1429 = vld [vmem:[#allocation5 + $0x440] sm:$0xff]
    %v1430 = vld [vmem:[#allocation5 + $0x448] sm:$0xff]
    %v1431 = vld [vmem:[#allocation5 + $0x450] sm:$0xff]
    %v1432 = vld [vmem:[#allocation5 + $0x458] sm:$0xff]
    %v1433 = vld [vmem:[#allocation5 + $0x460] sm:$0xff]
    %v1434 = vld [vmem:[#allocation5 + $0x468] sm:$0xff]
    %v1435 = vld [vmem:[#allocation5 + $0x470] sm:$0xff]
    %v1436 = vld [vmem:[#allocation5 + $0x478] sm:$0xff]
    %v1437 = vld [vmem:[#allocation5 + $0x480] sm:$0xff]
    %v1438 = vld [vmem:[#allocation5 + $0x488] sm:$0xff]
    %v1439 = vld [vmem:[#allocation5 + $0x490] sm:$0xff]
    %v1440 = vld [vmem:[#allocation5 + $0x498] sm:$0xff]
    %v1441 = vld [vmem:[#allocation5 + $0x4a0] sm:$0xff]
    %v1442 = vld [vmem:[#allocation5 + $0x4a8] sm:$0xff]
    %v1443 = vld [vmem:[#allocation5 + $0x4b0] sm:$0xff]
    %v1444 = vld [vmem:[#allocation5 + $0x4b8] sm:$0xff]
    %v1445 = vld [vmem:[#allocation5 + $0x4c0] sm:$0xff]
    %v1446 = vld [vmem:[#allocation5 + $0x4c8] sm:$0xff]
    %v1447 = vld [vmem:[#allocation5 + $0x4d0] sm:$0xff]
    %v1448 = vld [vmem:[#allocation5 + $0x4d8] sm:$0xff]
    %v1449 = vld [vmem:[#allocation5 + $0x4e0] sm:$0xff]
    %v1450 = vld [vmem:[#allocation5 + $0x4e8] sm:$0xff]
    %v1451 = vld [vmem:[#allocation5 + $0x4f0] sm:$0xff]
    %v1452 = vld [vmem:[#allocation5 + $0x4f8] sm:$0xff]
    %v1453 = vld [vmem:[#allocation5 + $0x500] sm:$0xff]
    %v1454 = vld [vmem:[#allocation5 + $0x508] sm:$0xff]
    %v1455 = vld [vmem:[#allocation5 + $0x510] sm:$0xff]
    %v1456 = vld [vmem:[#allocation5 + $0x518] sm:$0xff]
    %v1457 = vld [vmem:[#allocation5 + $0x520] sm:$0xff]
    %v1458 = vld [vmem:[#allocation5 + $0x528] sm:$0xff]
    %v1459 = vld [vmem:[#allocation5 + $0x530] sm:$0xff]
    %v1460 = vld [vmem:[#allocation5 + $0x538] sm:$0xff]
    %v1461 = vld [vmem:[#allocation5 + $0x540] sm:$0xff]
    %v1462 = vld [vmem:[#allocation5 + $0x548] sm:$0xff]
    %v1463 = vld [vmem:[#allocation5 + $0x550] sm:$0xff]
    %v1464 = vld [vmem:[#allocation5 + $0x558] sm:$0xff]
    %v1465 = vld [vmem:[#allocation5 + $0x560] sm:$0xff]
    %v1466 = vld [vmem:[#allocation5 + $0x568] sm:$0xff]
    %v1467 = vld [vmem:[#allocation5 + $0x570] sm:$0xff]
    %v1468 = vld [vmem:[#allocation5 + $0x578] sm:$0xff]
    %v1469 = vld [vmem:[#allocation5 + $0x580] sm:$0xff]
    %v1470 = vld [vmem:[#allocation5 + $0x588] sm:$0xff]
    %v1471 = vld [vmem:[#allocation5 + $0x590] sm:$0xff]
    %v1472 = vld [vmem:[#allocation5 + $0x598] sm:$0xff]
    %v1473 = vld [vmem:[#allocation5 + $0x5a0] sm:$0xff]
    %v1474 = vld [vmem:[#allocation5 + $0x5a8] sm:$0xff]
    %v1475 = vld [vmem:[#allocation5 + $0x5b0] sm:$0xff]
    %v1476 = vld [vmem:[#allocation5 + $0x5b8] sm:$0xff]
    %v1477 = vld [vmem:[#allocation5 + $0x5c0] sm:$0xff]
    %v1478 = vld [vmem:[#allocation5 + $0x5c8] sm:$0xff]
    %v1479 = vld [vmem:[#allocation5 + $0x5d0] sm:$0xff]
    %v1480 = vld [vmem:[#allocation5 + $0x5d8] sm:$0xff]
    %v1481 = vld [vmem:[#allocation5 + $0x5e0] sm:$0xff]
    %v1482 = vld [vmem:[#allocation5 + $0x5e8] sm:$0xff]
    %v1483 = vld [vmem:[#allocation5 + $0x5f0] sm:$0xff]
    %v1484 = vld [vmem:[#allocation5 + $0x5f8] sm:$0xff]
    %v1485 = vld [vmem:[%s8] sm:$0xf]
    %v1486 = vld [vmem:[#allocation7] sm:$0xff]
    %v1487 = vld [vmem:[#allocation7 + $0x8] sm:$0xff]
    %v1488 = vld [vmem:[#allocation7 + $0x10] sm:$0xff]
    %v1489 = vld [vmem:[#allocation7 + $0x18] sm:$0xff]
    %v1490 = vld [vmem:[#allocation7 + $0x20] sm:$0xff]
    %v1491 = vld [vmem:[#allocation7 + $0x28] sm:$0xff]
    %v1492 = vld [vmem:[#allocation7 + $0x30] sm:$0xff]
    %v1493 = vld [vmem:[#allocation7 + $0x38] sm:$0xff]
    %v1494 = vld [vmem:[#allocation7 + $0x40] sm:$0xff]
    %v1495 = vld [vmem:[#allocation7 + $0x48] sm:$0xff]
    %v1496 = vld [vmem:[#allocation7 + $0x50] sm:$0xff]
    %v1497 = vld [vmem:[#allocation7 + $0x58] sm:$0xff]
    %v1498 = vld [vmem:[#allocation7 + $0x60] sm:$0xff]
    %v1499 = vld [vmem:[#allocation7 + $0x68] sm:$0xff]
    %v1500 = vld [vmem:[#allocation7 + $0x70] sm:$0xff]
    %v1501 = vld [vmem:[#allocation7 + $0x78] sm:$0xff]
    %v1502 = vld [vmem:[#allocation7 + $0x80] sm:$0xff]
    %v1503 = vld [vmem:[#allocation7 + $0x88] sm:$0xff]
    %v1504 = vld [vmem:[#allocation7 + $0x90] sm:$0xff]
    %v1505 = vld [vmem:[#allocation7 + $0x98] sm:$0xff]
    %v1506 = vld [vmem:[#allocation7 + $0xa0] sm:$0xff]
    %v1507 = vld [vmem:[#allocation7 + $0xa8] sm:$0xff]
    %v1508 = vld [vmem:[#allocation7 + $0xb0] sm:$0xff]
    %v1509 = vld [vmem:[#allocation7 + $0xb8] sm:$0xff]
    %v1510 = vld [vmem:[#allocation7 + $0xc0] sm:$0xff]
    %v1511 = vld [vmem:[#allocation7 + $0xc8] sm:$0xff]
    %v1512 = vld [vmem:[#allocation7 + $0xd0] sm:$0xff]
    %v1513 = vld [vmem:[#allocation7 + $0xd8] sm:$0xff]
    %v1514 = vld [vmem:[#allocation7 + $0xe0] sm:$0xff]
    %v1515 = vld [vmem:[#allocation7 + $0xe8] sm:$0xff]
    %v1516 = vld [vmem:[#allocation7 + $0xf0] sm:$0xff]
    %v1517 = vld [vmem:[#allocation7 + $0xf8] sm:$0xff]
    %v1518 = vld [vmem:[#allocation7 + $0x100] sm:$0xff]
    %v1519 = vld [vmem:[#allocation7 + $0x108] sm:$0xff]
    %v1520 = vld [vmem:[#allocation7 + $0x110] sm:$0xff]
    %v1521 = vld [vmem:[#allocation7 + $0x118] sm:$0xff]
    %v1522 = vld [vmem:[#allocation7 + $0x120] sm:$0xff]
    %v1523 = vld [vmem:[#allocation7 + $0x128] sm:$0xff]
    %v1524 = vld [vmem:[#allocation7 + $0x130] sm:$0xff]
    %v1525 = vld [vmem:[#allocation7 + $0x138] sm:$0xff]
    %v1526 = vld [vmem:[#allocation7 + $0x140] sm:$0xff]
    %v1527 = vld [vmem:[#allocation7 + $0x148] sm:$0xff]
    %v1528 = vld [vmem:[#allocation7 + $0x150] sm:$0xff]
    %v1529 = vld [vmem:[#allocation7 + $0x158] sm:$0xff]
    %v1530 = vld [vmem:[#allocation7 + $0x160] sm:$0xff]
    %v1531 = vld [vmem:[#allocation7 + $0x168] sm:$0xff]
    %v1532 = vld [vmem:[#allocation7 + $0x170] sm:$0xff]
    %v1533 = vld [vmem:[#allocation7 + $0x178] sm:$0xff]
    %v1534 = vld [vmem:[#allocation7 + $0x180] sm:$0xff]
    %v1535 = vld [vmem:[#allocation7 + $0x188] sm:$0xff]
    %v1536 = vld [vmem:[#allocation7 + $0x190] sm:$0xff]
    %v1537 = vld [vmem:[#allocation7 + $0x198] sm:$0xff]
    %v1538 = vld [vmem:[#allocation7 + $0x1a0] sm:$0xff]
    %v1539 = vld [vmem:[#allocation7 + $0x1a8] sm:$0xff]
    %v1540 = vld [vmem:[#allocation7 + $0x1b0] sm:$0xff]
    %v1541 = vld [vmem:[#allocation7 + $0x1b8] sm:$0xff]
    %v1542 = vld [vmem:[#allocation7 + $0x1c0] sm:$0xff]
    %v1543 = vld [vmem:[#allocation7 + $0x1c8] sm:$0xff]
    %v1544 = vld [vmem:[#allocation7 + $0x1d0] sm:$0xff]
    %v1545 = vld [vmem:[#allocation7 + $0x1d8] sm:$0xff]
    %v1546 = vld [vmem:[#allocation7 + $0x1e0] sm:$0xff]
    %v1547 = vld [vmem:[#allocation7 + $0x1e8] sm:$0xff]
    %v1548 = vld [vmem:[#allocation7 + $0x1f0] sm:$0xff]
    %v1549 = vld [vmem:[#allocation7 + $0x1f8] sm:$0xff]
    %v1550 = vld [vmem:[#allocation7 + $0x200] sm:$0xff]
    %v1551 = vld [vmem:[#allocation7 + $0x208] sm:$0xff]
    %v1552 = vld [vmem:[#allocation7 + $0x210] sm:$0xff]
    %v1553 = vld [vmem:[#allocation7 + $0x218] sm:$0xff]
    %v1554 = vld [vmem:[#allocation7 + $0x220] sm:$0xff]
    %v1555 = vld [vmem:[#allocation7 + $0x228] sm:$0xff]
    %v1556 = vld [vmem:[#allocation7 + $0x230] sm:$0xff]
    %v1557 = vld [vmem:[#allocation7 + $0x238] sm:$0xff]
    %v1558 = vld [vmem:[#allocation7 + $0x240] sm:$0xff]
    %v1559 = vld [vmem:[#allocation7 + $0x248] sm:$0xff]
    %v1560 = vld [vmem:[#allocation7 + $0x250] sm:$0xff]
    %v1561 = vld [vmem:[#allocation7 + $0x258] sm:$0xff]
    %v1562 = vld [vmem:[#allocation7 + $0x260] sm:$0xff]
    %v1563 = vld [vmem:[#allocation7 + $0x268] sm:$0xff]
    %v1564 = vld [vmem:[#allocation7 + $0x270] sm:$0xff]
    %v1565 = vld [vmem:[#allocation7 + $0x278] sm:$0xff]
    %v1566 = vld [vmem:[#allocation7 + $0x280] sm:$0xff]
    %v1567 = vld [vmem:[#allocation7 + $0x288] sm:$0xff]
    %v1568 = vld [vmem:[#allocation7 + $0x290] sm:$0xff]
    %v1569 = vld [vmem:[#allocation7 + $0x298] sm:$0xff]
    %v1570 = vld [vmem:[#allocation7 + $0x2a0] sm:$0xff]
    %v1571 = vld [vmem:[#allocation7 + $0x2a8] sm:$0xff]
    %v1572 = vld [vmem:[#allocation7 + $0x2b0] sm:$0xff]
    %v1573 = vld [vmem:[#allocation7 + $0x2b8] sm:$0xff]
    %v1574 = vld [vmem:[#allocation7 + $0x2c0] sm:$0xff]
    %v1575 = vld [vmem:[#allocation7 + $0x2c8] sm:$0xff]
    %v1576 = vld [vmem:[#allocation7 + $0x2d0] sm:$0xff]
    %v1577 = vld [vmem:[#allocation7 + $0x2d8] sm:$0xff]
    %v1578 = vld [vmem:[#allocation7 + $0x2e0] sm:$0xff]
    %v1579 = vld [vmem:[#allocation7 + $0x2e8] sm:$0xff]
    %v1580 = vld [vmem:[#allocation7 + $0x2f0] sm:$0xff]
    %v1581 = vld [vmem:[#allocation7 + $0x2f8] sm:$0xff]
    %v1582 = vld [vmem:[#allocation7 + $0x300] sm:$0xff]
    %v1583 = vld [vmem:[#allocation7 + $0x308] sm:$0xff]
    %v1584 = vld [vmem:[#allocation7 + $0x310] sm:$0xff]
    %v1585 = vld [vmem:[#allocation7 + $0x318] sm:$0xff]
    %v1586 = vld [vmem:[#allocation7 + $0x320] sm:$0xff]
    %v1587 = vld [vmem:[#allocation7 + $0x328] sm:$0xff]
    %v1588 = vld [vmem:[#allocation7 + $0x330] sm:$0xff]
    %v1589 = vld [vmem:[#allocation7 + $0x338] sm:$0xff]
    %v1590 = vld [vmem:[#allocation7 + $0x340] sm:$0xff]
    %v1591 = vld [vmem:[#allocation7 + $0x348] sm:$0xff]
    %v1592 = vld [vmem:[#allocation7 + $0x350] sm:$0xff]
    %v1593 = vld [vmem:[#allocation7 + $0x358] sm:$0xff]
    %v1594 = vld [vmem:[#allocation7 + $0x360] sm:$0xff]
    %v1595 = vld [vmem:[#allocation7 + $0x368] sm:$0xff]
    %v1596 = vld [vmem:[#allocation7 + $0x370] sm:$0xff]
    %v1597 = vld [vmem:[#allocation7 + $0x378] sm:$0xff]
    %v1598 = vld [vmem:[#allocation7 + $0x380] sm:$0xff]
    %v1599 = vld [vmem:[#allocation7 + $0x388] sm:$0xff]
    %v1600 = vld [vmem:[#allocation7 + $0x390] sm:$0xff]
    %v1601 = vld [vmem:[#allocation7 + $0x398] sm:$0xff]
    %v1602 = vld [vmem:[#allocation7 + $0x3a0] sm:$0xff]
    %v1603 = vld [vmem:[#allocation7 + $0x3a8] sm:$0xff]
    %v1604 = vld [vmem:[#allocation7 + $0x3b0] sm:$0xff]
    %v1605 = vld [vmem:[#allocation7 + $0x3b8] sm:$0xff]
    %v1606 = vld [vmem:[#allocation7 + $0x3c0] sm:$0xff]
    %v1607 = vld [vmem:[#allocation7 + $0x3c8] sm:$0xff]
    %v1608 = vld [vmem:[#allocation7 + $0x3d0] sm:$0xff]
    %v1609 = vld [vmem:[#allocation7 + $0x3d8] sm:$0xff]
    %v1610 = vld [vmem:[#allocation7 + $0x3e0] sm:$0xff]
    %v1611 = vld [vmem:[#allocation7 + $0x3e8] sm:$0xff]
    %v1612 = vld [vmem:[#allocation7 + $0x3f0] sm:$0xff]
    %v1613 = vld [vmem:[#allocation7 + $0x3f8] sm:$0xff]
    %v1614 = vld [vmem:[#allocation7 + $0x400] sm:$0xff]
    %v1615 = vld [vmem:[#allocation7 + $0x408] sm:$0xff]
    %v1616 = vld [vmem:[#allocation7 + $0x410] sm:$0xff]
    %v1617 = vld [vmem:[#allocation7 + $0x418] sm:$0xff]
    %v1618 = vld [vmem:[#allocation7 + $0x420] sm:$0xff]
    %v1619 = vld [vmem:[#allocation7 + $0x428] sm:$0xff]
    %v1620 = vld [vmem:[#allocation7 + $0x430] sm:$0xff]
    %v1621 = vld [vmem:[#allocation7 + $0x438] sm:$0xff]
    %v1622 = vld [vmem:[#allocation7 + $0x440] sm:$0xff]
    %v1623 = vld [vmem:[#allocation7 + $0x448] sm:$0xff]
    %v1624 = vld [vmem:[#allocation7 + $0x450] sm:$0xff]
    %v1625 = vld [vmem:[#allocation7 + $0x458] sm:$0xff]
    %v1626 = vld [vmem:[#allocation7 + $0x460] sm:$0xff]
    %v1627 = vld [vmem:[#allocation7 + $0x468] sm:$0xff]
    %v1628 = vld [vmem:[#allocation7 + $0x470] sm:$0xff]
    %v1629 = vld [vmem:[#allocation7 + $0x478] sm:$0xff]
    %v1630 = vld [vmem:[#allocation7 + $0x480] sm:$0xff]
    %v1631 = vld [vmem:[#allocation7 + $0x488] sm:$0xff]
    %v1632 = vld [vmem:[#allocation7 + $0x490] sm:$0xff]
    %v1633 = vld [vmem:[#allocation7 + $0x498] sm:$0xff]
    %v1634 = vld [vmem:[#allocation7 + $0x4a0] sm:$0xff]
    %v1635 = vld [vmem:[#allocation7 + $0x4a8] sm:$0xff]
    %v1636 = vld [vmem:[#allocation7 + $0x4b0] sm:$0xff]
    %v1637 = vld [vmem:[#allocation7 + $0x4b8] sm:$0xff]
    %v1638 = vld [vmem:[#allocation7 + $0x4c0] sm:$0xff]
    %v1639 = vld [vmem:[#allocation7 + $0x4c8] sm:$0xff]
    %v1640 = vld [vmem:[#allocation7 + $0x4d0] sm:$0xff]
    %v1641 = vld [vmem:[#allocation7 + $0x4d8] sm:$0xff]
    %v1642 = vld [vmem:[#allocation7 + $0x4e0] sm:$0xff]
    %v1643 = vld [vmem:[#allocation7 + $0x4e8] sm:$0xff]
    %v1644 = vld [vmem:[#allocation7 + $0x4f0] sm:$0xff]
    %v1645 = vld [vmem:[#allocation7 + $0x4f8] sm:$0xff]
    %v1646 = vld [vmem:[#allocation7 + $0x500] sm:$0xff]
    %v1647 = vld [vmem:[#allocation7 + $0x508] sm:$0xff]
    %v1648 = vld [vmem:[#allocation7 + $0x510] sm:$0xff]
    %v1649 = vld [vmem:[#allocation7 + $0x518] sm:$0xff]
    %v1650 = vld [vmem:[#allocation7 + $0x520] sm:$0xff]
    %v1651 = vld [vmem:[#allocation7 + $0x528] sm:$0xff]
    %v1652 = vld [vmem:[#allocation7 + $0x530] sm:$0xff]
    %v1653 = vld [vmem:[#allocation7 + $0x538] sm:$0xff]
    %v1654 = vld [vmem:[#allocation7 + $0x540] sm:$0xff]
    %v1655 = vld [vmem:[#allocation7 + $0x548] sm:$0xff]
    %v1656 = vld [vmem:[#allocation7 + $0x550] sm:$0xff]
    %v1657 = vld [vmem:[#allocation7 + $0x558] sm:$0xff]
    %v1658 = vld [vmem:[#allocation7 + $0x560] sm:$0xff]
    %v1659 = vld [vmem:[#allocation7 + $0x568] sm:$0xff]
    %v1660 = vld [vmem:[#allocation7 + $0x570] sm:$0xff]
    %v1661 = vld [vmem:[#allocation7 + $0x578] sm:$0xff]
    %v1662 = vld [vmem:[#allocation7 + $0x580] sm:$0xff]
    %v1663 = vld [vmem:[#allocation7 + $0x588] sm:$0xff]
    %v1664 = vld [vmem:[#allocation7 + $0x590] sm:$0xff]
    %v1665 = vld [vmem:[#allocation7 + $0x598] sm:$0xff]
    %v1666 = vld [vmem:[#allocation7 + $0x5a0] sm:$0xff]
    %v1667 = vld [vmem:[#allocation7 + $0x5a8] sm:$0xff]
    %v1668 = vld [vmem:[#allocation7 + $0x5b0] sm:$0xff]
    %v1669 = vld [vmem:[#allocation7 + $0x5b8] sm:$0xff]
    %v1670 = vld [vmem:[#allocation7 + $0x5c0] sm:$0xff]
    %v1671 = vld [vmem:[#allocation7 + $0x5c8] sm:$0xff]
    %v1672 = vld [vmem:[#allocation7 + $0x5d0] sm:$0xff]
    %v1673 = vld [vmem:[#allocation7 + $0x5d8] sm:$0xff]
    %v1674 = vld [vmem:[#allocation7 + $0x5e0] sm:$0xff]
    %v1675 = vld [vmem:[#allocation7 + $0x5e8] sm:$0xff]
    %v1676 = vld [vmem:[#allocation7 + $0x5f0] sm:$0xff]
    %v1677 = vld [vmem:[#allocation7 + $0x5f8] sm:$0xff]
    %v1678 = vld [vmem:[#allocation7 + $0x600] sm:$0xff]
    %v1679 = vld [vmem:[#allocation7 + $0x608] sm:$0xff]
    %v1680 = vld [vmem:[#allocation7 + $0x610] sm:$0xff]
    %v1681 = vld [vmem:[#allocation7 + $0x618] sm:$0xff]
    %v1682 = vld [vmem:[#allocation7 + $0x620] sm:$0xff]
    %v1683 = vld [vmem:[#allocation7 + $0x628] sm:$0xff]
    %v1684 = vld [vmem:[#allocation7 + $0x630] sm:$0xff]
    %v1685 = vld [vmem:[#allocation7 + $0x638] sm:$0xff]
    %v1686 = vld [vmem:[#allocation7 + $0x640] sm:$0xff]
    %v1687 = vld [vmem:[#allocation7 + $0x648] sm:$0xff]
    %v1688 = vld [vmem:[#allocation7 + $0x650] sm:$0xff]
    %v1689 = vld [vmem:[#allocation7 + $0x658] sm:$0xff]
    %v1690 = vld [vmem:[#allocation7 + $0x660] sm:$0xff]
    %v1691 = vld [vmem:[#allocation7 + $0x668] sm:$0xff]
    %v1692 = vld [vmem:[#allocation7 + $0x670] sm:$0xff]
    %v1693 = vld [vmem:[#allocation7 + $0x678] sm:$0xff]
    %v1694 = vld [vmem:[#allocation7 + $0x680] sm:$0xff]
    %v1695 = vld [vmem:[#allocation7 + $0x688] sm:$0xff]
    %v1696 = vld [vmem:[#allocation7 + $0x690] sm:$0xff]
    %v1697 = vld [vmem:[#allocation7 + $0x698] sm:$0xff]
    %v1698 = vld [vmem:[#allocation7 + $0x6a0] sm:$0xff]
    %v1699 = vld [vmem:[#allocation7 + $0x6a8] sm:$0xff]
    %v1700 = vld [vmem:[#allocation7 + $0x6b0] sm:$0xff]
    %v1701 = vld [vmem:[#allocation7 + $0x6b8] sm:$0xff]
    %v1702 = vld [vmem:[#allocation7 + $0x6c0] sm:$0xff]
    %v1703 = vld [vmem:[#allocation7 + $0x6c8] sm:$0xff]
    %v1704 = vld [vmem:[#allocation7 + $0x6d0] sm:$0xff]
    %v1705 = vld [vmem:[#allocation7 + $0x6d8] sm:$0xff]
    %v1706 = vld [vmem:[#allocation7 + $0x6e0] sm:$0xff]
    %v1707 = vld [vmem:[#allocation7 + $0x6e8] sm:$0xff]
    %v1708 = vld [vmem:[#allocation7 + $0x6f0] sm:$0xff]
    %v1709 = vld [vmem:[#allocation7 + $0x6f8] sm:$0xff]
    %v1710 = vld [vmem:[#allocation7 + $0x700] sm:$0xff]
    %v1711 = vld [vmem:[#allocation7 + $0x708] sm:$0xff]
    %v1712 = vld [vmem:[#allocation7 + $0x710] sm:$0xff]
    %v1713 = vld [vmem:[#allocation7 + $0x718] sm:$0xff]
    %v1714 = vld [vmem:[#allocation7 + $0x720] sm:$0xff]
    %v1715 = vld [vmem:[#allocation7 + $0x728] sm:$0xff]
    %v1716 = vld [vmem:[#allocation7 + $0x730] sm:$0xff]
    %v1717 = vld [vmem:[#allocation7 + $0x738] sm:$0xff]
    %v1718 = vld [vmem:[#allocation7 + $0x740] sm:$0xff]
    %v1719 = vld [vmem:[#allocation7 + $0x748] sm:$0xff]
    %v1720 = vld [vmem:[#allocation7 + $0x750] sm:$0xff]
    %v1721 = vld [vmem:[#allocation7 + $0x758] sm:$0xff]
    %v1722 = vld [vmem:[#allocation7 + $0x760] sm:$0xff]
    %v1723 = vld [vmem:[#allocation7 + $0x768] sm:$0xff]
    %v1724 = vld [vmem:[#allocation7 + $0x770] sm:$0xff]
    %v1725 = vld [vmem:[#allocation7 + $0x778] sm:$0xff]
    %v1726 = vld [vmem:[#allocation7 + $0x780] sm:$0xff]
    %v1727 = vld [vmem:[#allocation7 + $0x788] sm:$0xff]
    %v1728 = vld [vmem:[#allocation7 + $0x790] sm:$0xff]
    %v1729 = vld [vmem:[#allocation7 + $0x798] sm:$0xff]
    %v1730 = vld [vmem:[#allocation7 + $0x7a0] sm:$0xff]
    %v1731 = vld [vmem:[#allocation7 + $0x7a8] sm:$0xff]
    %v1732 = vld [vmem:[#allocation7 + $0x7b0] sm:$0xff]
    %v1733 = vld [vmem:[#allocation7 + $0x7b8] sm:$0xff]
    %v1734 = vld [vmem:[#allocation7 + $0x7c0] sm:$0xff]
    %v1735 = vld [vmem:[#allocation7 + $0x7c8] sm:$0xff]
    %v1736 = vld [vmem:[#allocation7 + $0x7d0] sm:$0xff]
    %v1737 = vld [vmem:[#allocation7 + $0x7d8] sm:$0xff]
    %v1738 = vld [vmem:[#allocation7 + $0x7e0] sm:$0xff]
    %v1739 = vld [vmem:[#allocation7 + $0x7e8] sm:$0xff]
    %v1740 = vld [vmem:[#allocation7 + $0x7f0] sm:$0xff]
    %v1741 = vld [vmem:[#allocation7 + $0x7f8] sm:$0xff]
    %v1742 = vld [vmem:[%s10] sm:$0xf]
    %v1744 = vperm.slane %v1485, 0
    %v1745 = vperm.slane %v1485, 1
    %v1746 = vperm.slane %v1485, 2
    %v1747 = vperm.slane %v1485, 3
    %1753 = vst [vmem:[#allocation1] ss:$4 sm:$0xff] %v1292
    %v1754 = vld.sshfl [vmem:[#allocation1] sm:$0xff pattern:$0x73625140]
    %v1755 = vld.sshfl [vmem:[#allocation1 + $0x8] sm:$0xff pattern:$0x73625140]
    %v1756 = vld.sshfl [vmem:[#allocation1 + $0x10] sm:$0xff pattern:$0x73625140]
    %1760 = vmatpush.msra.mxu0 %v1353
    %1761 = vmatpush.msra.mxu0 %v1349
    %1762 = vmatpush.msra.mxu0 %v1345
    %1763 = vmatpush.msra.mxu0 %v1341
    %1764 = vmatpush.msra.mxu0 %v1337
    %1765 = vmatpush.msra.mxu0 %v1333
    %1766 = vmatpush.msra.mxu0 %v1329
    %1767 = vmatpush.msra.mxu0 %v1325
    %1768 = vmatpush.msra.mxu0 %v1321
    %1769 = vmatpush.msra.mxu0 %v1317
    %1770 = vmatpush.msra.mxu0 %v1313
    %1771 = vmatpush.msra.mxu0 %v1309
    %1772 = vmatpush.msra.mxu0 %v1305
    %1773 = vmatpush.msra.mxu0 %v1301
    %1774 = vmatpush.msra.mxu0 %v1297
    %1775 = vmatpush.msra.mxu0 %v1293
    %1776 = vmatmul.f32.gmra.mxu0 %v1754
    %v1777 = vpop.f32.mrf.mxu0
    %v1778 = vadd.f32 %v1744, %v1777
    %1779 = vdwg.mxu0
    %1780 = vmatpush.msra.mxu0 %v1417
    %1781 = vmatpush.msra.mxu0 %v1413
    %1782 = vmatpush.msra.mxu0 %v1409
    %1783 = vmatpush.msra.mxu0 %v1405
    %1784 = vmatpush.msra.mxu0 %v1401
    %1785 = vmatpush.msra.mxu0 %v1397
    %1786 = vmatpush.msra.mxu0 %v1393
    %1787 = vmatpush.msra.mxu0 %v1389
    %1788 = vmatpush.msra.mxu0 %v1385
    %1789 = vmatpush.msra.mxu0 %v1381
    %1790 = vmatpush.msra.mxu0 %v1377
    %1791 = vmatpush.msra.mxu0 %v1373
    %1792 = vmatpush.msra.mxu0 %v1369
    %1793 = vmatpush.msra.mxu0 %v1365
    %1794 = vmatpush.msra.mxu0 %v1361
    %1795 = vmatpush.msra.mxu0 %v1357
    %1796 = vmatmul.f32.gmra.mxu0 %v1755
    %v1797 = vpop.f32.mrf.mxu0
    %v1798 = vadd.f32 %v1778, %v1797
    %1799 = vdwg.mxu0
    %1800 = vmatpush.msra.mxu0 %v1481
    %1801 = vmatpush.msra.mxu0 %v1477
    %1802 = vmatpush.msra.mxu0 %v1473
    %1803 = vmatpush.msra.mxu0 %v1469
    %1804 = vmatpush.msra.mxu0 %v1465
    %1805 = vmatpush.msra.mxu0 %v1461
    %1806 = vmatpush.msra.mxu0 %v1457
    %1807 = vmatpush.msra.mxu0 %v1453
    %1808 = vmatpush.msra.mxu0 %v1449
    %1809 = vmatpush.msra.mxu0 %v1445
    %1810 = vmatpush.msra.mxu0 %v1441
    %1811 = vmatpush.msra.mxu0 %v1437
    %1812 = vmatpush.msra.mxu0 %v1433
    %1813 = vmatpush.msra.mxu0 %v1429
    %1814 = vmatpush.msra.mxu0 %v1425
    %1815 = vmatpush.msra.mxu0 %v1421
    %1816 = vmatmul.f32.gmra.mxu0 %v1756
    %v1817 = vpop.f32.mrf.mxu0
    %v1818 = vadd.f32 %v1798, %v1817
    %1819 = vdwg.mxu0
    %1820 = vmatpush.msra.mxu0 %v1354
    %1821 = vmatpush.msra.mxu0 %v1350
    %1822 = vmatpush.msra.mxu0 %v1346
    %1823 = vmatpush.msra.mxu0 %v1342
    %1824 = vmatpush.msra.mxu0 %v1338
    %1825 = vmatpush.msra.mxu0 %v1334
    %1826 = vmatpush.msra.mxu0 %v1330
    %1827 = vmatpush.msra.mxu0 %v1326
    %1828 = vmatpush.msra.mxu0 %v1322
    %1829 = vmatpush.msra.mxu0 %v1318
    %1830 = vmatpush.msra.mxu0 %v1314
    %1831 = vmatpush.msra.mxu0 %v1310
    %1832 = vmatpush.msra.mxu0 %v1306
    %1833 = vmatpush.msra.mxu0 %v1302
    %1834 = vmatpush.msra.mxu0 %v1298
    %1835 = vmatpush.msra.mxu0 %v1294
    %1836 = vmatmul.f32.gmra.mxu0 %v1754
    %v1837 = vpop.f32.mrf.mxu0
    %v1838 = vadd.f32 %v1745, %v1837
    %1839 = vdwg.mxu0
    %1840 = vmatpush.msra.mxu0 %v1418
    %1841 = vmatpush.msra.mxu0 %v1414
    %1842 = vmatpush.msra.mxu0 %v1410
    %1843 = vmatpush.msra.mxu0 %v1406
    %1844 = vmatpush.msra.mxu0 %v1402
    %1845 = vmatpush.msra.mxu0 %v1398
    %1846 = vmatpush.msra.mxu0 %v1394
    %1847 = vmatpush.msra.mxu0 %v1390
    %1848 = vmatpush.msra.mxu0 %v1386
    %1849 = vmatpush.msra.mxu0 %v1382
    %1850 = vmatpush.msra.mxu0 %v1378
    %1851 = vmatpush.msra.mxu0 %v1374
    %1852 = vmatpush.msra.mxu0 %v1370
    %1853 = vmatpush.msra.mxu0 %v1366
    %1854 = vmatpush.msra.mxu0 %v1362
    %1855 = vmatpush.msra.mxu0 %v1358
    %1856 = vmatmul.f32.gmra.mxu0 %v1755
    %v1857 = vpop.f32.mrf.mxu0
    %v1858 = vadd.f32 %v1838, %v1857
    %1859 = vdwg.mxu0
    %1860 = vmatpush.msra.mxu0 %v1482
    %1861 = vmatpush.msra.mxu0 %v1478
    %1862 = vmatpush.msra.mxu0 %v1474
    %1863 = vmatpush.msra.mxu0 %v1470
    %1864 = vmatpush.msra.mxu0 %v1466
    %1865 = vmatpush.msra.mxu0 %v1462
    %1866 = vmatpush.msra.mxu0 %v1458
    %1867 = vmatpush.msra.mxu0 %v1454
    %1868 = vmatpush.msra.mxu0 %v1450
    %1869 = vmatpush.msra.mxu0 %v1446
    %1870 = vmatpush.msra.mxu0 %v1442
    %1871 = vmatpush.msra.mxu0 %v1438
    %1872 = vmatpush.msra.mxu0 %v1434
    %1873 = vmatpush.msra.mxu0 %v1430
    %1874 = vmatpush.msra.mxu0 %v1426
    %1875 = vmatpush.msra.mxu0 %v1422
    %1876 = vmatmul.f32.gmra.mxu0 %v1756
    %v1877 = vpop.f32.mrf.mxu0
    %v1878 = vadd.f32 %v1858, %v1877
    %1879 = vdwg.mxu0
    %1880 = vmatpush.msra.mxu0 %v1355
    %1881 = vmatpush.msra.mxu0 %v1351
    %1882 = vmatpush.msra.mxu0 %v1347
    %1883 = vmatpush.msra.mxu0 %v1343
    %1884 = vmatpush.msra.mxu0 %v1339
    %1885 = vmatpush.msra.mxu0 %v1335
    %1886 = vmatpush.msra.mxu0 %v1331
    %1887 = vmatpush.msra.mxu0 %v1327
    %1888 = vmatpush.msra.mxu0 %v1323
    %1889 = vmatpush.msra.mxu0 %v1319
    %1890 = vmatpush.msra.mxu0 %v1315
    %1891 = vmatpush.msra.mxu0 %v1311
    %1892 = vmatpush.msra.mxu0 %v1307
    %1893 = vmatpush.msra.mxu0 %v1303
    %1894 = vmatpush.msra.mxu0 %v1299
    %1895 = vmatpush.msra.mxu0 %v1295
    %1896 = vmatmul.f32.gmra.mxu0 %v1754
    %v1897 = vpop.f32.mrf.mxu0
    %v1898 = vadd.f32 %v1746, %v1897
    %1899 = vdwg.mxu0
    %1900 = vmatpush.msra.mxu0 %v1419
    %1901 = vmatpush.msra.mxu0 %v1415
    %1902 = vmatpush.msra.mxu0 %v1411
    %1903 = vmatpush.msra.mxu0 %v1407
    %1904 = vmatpush.msra.mxu0 %v1403
    %1905 = vmatpush.msra.mxu0 %v1399
    %1906 = vmatpush.msra.mxu0 %v1395
    %1907 = vmatpush.msra.mxu0 %v1391
    %1908 = vmatpush.msra.mxu0 %v1387
    %1909 = vmatpush.msra.mxu0 %v1383
    %1910 = vmatpush.msra.mxu0 %v1379
    %1911 = vmatpush.msra.mxu0 %v1375
    %1912 = vmatpush.msra.mxu0 %v1371
    %1913 = vmatpush.msra.mxu0 %v1367
    %1914 = vmatpush.msra.mxu0 %v1363
    %1915 = vmatpush.msra.mxu0 %v1359
    %1916 = vmatmul.f32.gmra.mxu0 %v1755
    %v1917 = vpop.f32.mrf.mxu0
    %v1918 = vadd.f32 %v1898, %v1917
    %1919 = vdwg.mxu0
    %1920 = vmatpush.msra.mxu0 %v1483
    %1921 = vmatpush.msra.mxu0 %v1479
    %1922 = vmatpush.msra.mxu0 %v1475
    %1923 = vmatpush.msra.mxu0 %v1471
    %1924 = vmatpush.msra.mxu0 %v1467
    %1925 = vmatpush.msra.mxu0 %v1463
    %1926 = vmatpush.msra.mxu0 %v1459
    %1927 = vmatpush.msra.mxu0 %v1455
    %1928 = vmatpush.msra.mxu0 %v1451
    %1929 = vmatpush.msra.mxu0 %v1447
    %1930 = vmatpush.msra.mxu0 %v1443
    %1931 = vmatpush.msra.mxu0 %v1439
    %1932 = vmatpush.msra.mxu0 %v1435
    %1933 = vmatpush.msra.mxu0 %v1431
    %1934 = vmatpush.msra.mxu0 %v1427
    %1935 = vmatpush.msra.mxu0 %v1423
    %1936 = vmatmul.f32.gmra.mxu0 %v1756
    %v1937 = vpop.f32.mrf.mxu0
    %v1938 = vadd.f32 %v1918, %v1937
    %1939 = vdwg.mxu0
    %1940 = vmatpush.msra.mxu0 %v1356
    %1941 = vmatpush.msra.mxu0 %v1352
    %1942 = vmatpush.msra.mxu0 %v1348
    %1943 = vmatpush.msra.mxu0 %v1344
    %1944 = vmatpush.msra.mxu0 %v1340
    %1945 = vmatpush.msra.mxu0 %v1336
    %1946 = vmatpush.msra.mxu0 %v1332
    %1947 = vmatpush.msra.mxu0 %v1328
    %1948 = vmatpush.msra.mxu0 %v1324
    %1949 = vmatpush.msra.mxu0 %v1320
    %1950 = vmatpush.msra.mxu0 %v1316
    %1951 = vmatpush.msra.mxu0 %v1312
    %1952 = vmatpush.msra.mxu0 %v1308
    %1953 = vmatpush.msra.mxu0 %v1304
    %1954 = vmatpush.msra.mxu0 %v1300
    %1955 = vmatpush.msra.mxu0 %v1296
    %1956 = vmatmul.f32.gmra.mxu0 %v1754
    %v1957 = vpop.f32.mrf.mxu0
    %v1958 = vadd.f32 %v1747, %v1957
    %1959 = vdwg.mxu0
    %1960 = vmatpush.msra.mxu0 %v1420
    %1961 = vmatpush.msra.mxu0 %v1416
    %1962 = vmatpush.msra.mxu0 %v1412
    %1963 = vmatpush.msra.mxu0 %v1408
    %1964 = vmatpush.msra.mxu0 %v1404
    %1965 = vmatpush.msra.mxu0 %v1400
    %1966 = vmatpush.msra.mxu0 %v1396
    %1967 = vmatpush.msra.mxu0 %v1392
    %1968 = vmatpush.msra.mxu0 %v1388
    %1969 = vmatpush.msra.mxu0 %v1384
    %1970 = vmatpush.msra.mxu0 %v1380
    %1971 = vmatpush.msra.mxu0 %v1376
    %1972 = vmatpush.msra.mxu0 %v1372
    %1973 = vmatpush.msra.mxu0 %v1368
    %1974 = vmatpush.msra.mxu0 %v1364
    %1975 = vmatpush.msra.mxu0 %v1360
    %1976 = vmatmul.f32.gmra.mxu0 %v1755
    %v1977 = vpop.f32.mrf.mxu0
    %v1978 = vadd.f32 %v1958, %v1977
    %1979 = vdwg.mxu0
    %1980 = vmatpush.msra.mxu0 %v1484
    %1981 = vmatpush.msra.mxu0 %v1480
    %1982 = vmatpush.msra.mxu0 %v1476
    %1983 = vmatpush.msra.mxu0 %v1472
    %1984 = vmatpush.msra.mxu0 %v1468
    %1985 = vmatpush.msra.mxu0 %v1464
    %1986 = vmatpush.msra.mxu0 %v1460
    %1987 = vmatpush.msra.mxu0 %v1456
    %1988 = vmatpush.msra.mxu0 %v1452
    %1989 = vmatpush.msra.mxu0 %v1448
    %1990 = vmatpush.msra.mxu0 %v1444
    %1991 = vmatpush.msra.mxu0 %v1440
    %1992 = vmatpush.msra.mxu0 %v1436
    %1993 = vmatpush.msra.mxu0 %v1432
    %1994 = vmatpush.msra.mxu0 %v1428
    %1995 = vmatpush.msra.mxu0 %v1424
    %1996 = vmatmul.f32.gmra.mxu0 %v1756
    %v1997 = vpop.f32.mrf.mxu0
    %v1998 = vadd.f32 %v1978, %v1997
    %1999 = vdwg.mxu0
    %v2000 = vmax.f32 %v1818, 0.0
    %v2001 = vmax.f32 %v1878, 0.0
    %v2002 = vmax.f32 %v1938, 0.0
    %v2003 = vmax.f32 %v1998, 0.0
    %v2005 = vperm.slane %v1742, 0
    %v2006 = vperm.slane %v1742, 1
    %v2007 = vperm.slane %v1742, 2
    %v2008 = vperm.slane %v1742, 3
    %2013 = vmatpush.msra.mxu0 %v1546
    %2014 = vmatpush.msra.mxu0 %v1542
    %2015 = vmatpush.msra.mxu0 %v1538
    %2016 = vmatpush.msra.mxu0 %v1534
    %2017 = vmatpush.msra.mxu0 %v1530
    %2018 = vmatpush.msra.mxu0 %v1526
    %2019 = vmatpush.msra.mxu0 %v1522
    %2020 = vmatpush.msra.mxu0 %v1518
    %2021 = vmatpush.msra.mxu0 %v1514
    %2022 = vmatpush.msra.mxu0 %v1510
    %2023 = vmatpush.msra.mxu0 %v1506
    %2024 = vmatpush.msra.mxu0 %v1502
    %2025 = vmatpush.msra.mxu0 %v1498
    %2026 = vmatpush.msra.mxu0 %v1494
    %2027 = vmatpush.msra.mxu0 %v1490
    %2028 = vmatpush.msra.mxu0 %v1486
    %2029 = vmatmul.f32.gmra.mxu0 %v2000
    %v2030 = vpop.f32.mrf.mxu0
    %v2031 = vadd.f32 %v2005, %v2030
    %2032 = vdwg.mxu0
    %2033 = vmatpush.msra.mxu0 %v1610
    %2034 = vmatpush.msra.mxu0 %v1606
    %2035 = vmatpush.msra.mxu0 %v1602
    %2036 = vmatpush.msra.mxu0 %v1598
    %2037 = vmatpush.msra.mxu0 %v1594
    %2038 = vmatpush.msra.mxu0 %v1590
    %2039 = vmatpush.msra.mxu0 %v1586
    %2040 = vmatpush.msra.mxu0 %v1582
    %2041 = vmatpush.msra.mxu0 %v1578
    %2042 = vmatpush.msra.mxu0 %v1574
    %2043 = vmatpush.msra.mxu0 %v1570
    %2044 = vmatpush.msra.mxu0 %v1566
    %2045 = vmatpush.msra.mxu0 %v1562
    %2046 = vmatpush.msra.mxu0 %v1558
    %2047 = vmatpush.msra.mxu0 %v1554
    %2048 = vmatpush.msra.mxu0 %v1550
    %2049 = vmatmul.f32.gmra.mxu0 %v2001
    %v2050 = vpop.f32.mrf.mxu0
    %v2051 = vadd.f32 %v2031, %v2050
    %2052 = vdwg.mxu0
    %2053 = vmatpush.msra.mxu0 %v1674
    %2054 = vmatpush.msra.mxu0 %v1670
    %2055 = vmatpush.msra.mxu0 %v1666
    %2056 = vmatpush.msra.mxu0 %v1662
    %2057 = vmatpush.msra.mxu0 %v1658
    %2058 = vmatpush.msra.mxu0 %v1654
    %2059 = vmatpush.msra.mxu0 %v1650
    %2060 = vmatpush.msra.mxu0 %v1646
    %2061 = vmatpush.msra.mxu0 %v1642
    %2062 = vmatpush.msra.mxu0 %v1638
    %2063 = vmatpush.msra.mxu0 %v1634
    %2064 = vmatpush.msra.mxu0 %v1630
    %2065 = vmatpush.msra.mxu0 %v1626
    %2066 = vmatpush.msra.mxu0 %v1622
    %2067 = vmatpush.msra.mxu0 %v1618
    %2068 = vmatpush.msra.mxu0 %v1614
    %2069 = vmatmul.f32.gmra.mxu0 %v2002
    %v2070 = vpop.f32.mrf.mxu0
    %v2071 = vadd.f32 %v2051, %v2070
    %2072 = vdwg.mxu0
    %2073 = vmatpush.msra.mxu0 %v1738
    %2074 = vmatpush.msra.mxu0 %v1734
    %2075 = vmatpush.msra.mxu0 %v1730
    %2076 = vmatpush.msra.mxu0 %v1726
    %2077 = vmatpush.msra.mxu0 %v1722
    %2078 = vmatpush.msra.mxu0 %v1718
    %2079 = vmatpush.msra.mxu0 %v1714
    %2080 = vmatpush.msra.mxu0 %v1710
    %2081 = vmatpush.msra.mxu0 %v1706
    %2082 = vmatpush.msra.mxu0 %v1702
    %2083 = vmatpush.msra.mxu0 %v1698
    %2084 = vmatpush.msra.mxu0 %v1694
    %2085 = vmatpush.msra.mxu0 %v1690
    %2086 = vmatpush.msra.mxu0 %v1686
    %2087 = vmatpush.msra.mxu0 %v1682
    %2088 = vmatpush.msra.mxu0 %v1678
    %2089 = vmatmul.f32.gmra.mxu0 %v2003
    %v2090 = vpop.f32.mrf.mxu0
    %v2091 = vadd.f32 %v2071, %v2090
    %2092 = vdwg.mxu0
    %2093 = vmatpush.msra.mxu0 %v1547
    %2094 = vmatpush.msra.mxu0 %v1543
    %2095 = vmatpush.msra.mxu0 %v1539
    %2096 = vmatpush.msra.mxu0 %v1535
    %2097 = vmatpush.msra.mxu0 %v1531
    %2098 = vmatpush.msra.mxu0 %v1527
    %2099 = vmatpush.msra.mxu0 %v1523
    %2100 = vmatpush.msra.mxu0 %v1519
    %2101 = vmatpush.msra.mxu0 %v1515
    %2102 = vmatpush.msra.mxu0 %v1511
    %2103 = vmatpush.msra.mxu0 %v1507
    %2104 = vmatpush.msra.mxu0 %v1503
    %2105 = vmatpush.msra.mxu0 %v1499
    %2106 = vmatpush.msra.mxu0 %v1495
    %2107 = vmatpush.msra.mxu0 %v1491
    %2108 = vmatpush.msra.mxu0 %v1487
    %2109 = vmatmul.f32.gmra.mxu0 %v2000
    %v2110 = vpop.f32.mrf.mxu0
    %v2111 = vadd.f32 %v2006, %v2110
    %2112 = vdwg.mxu0
    %2113 = vmatpush.msra.mxu0 %v1611
    %2114 = vmatpush.msra.mxu0 %v1607
    %2115 = vmatpush.msra.mxu0 %v1603
    %2116 = vmatpush.msra.mxu0 %v1599
    %2117 = vmatpush.msra.mxu0 %v1595
    %2118 = vmatpush.msra.mxu0 %v1591
    %2119 = vmatpush.msra.mxu0 %v1587
    %2120 = vmatpush.msra.mxu0 %v1583
    %2121 = vmatpush.msra.mxu0 %v1579
    %2122 = vmatpush.msra.mxu0 %v1575
    %2123 = vmatpush.msra.mxu0 %v1571
    %2124 = vmatpush.msra.mxu0 %v1567
    %2125 = vmatpush.msra.mxu0 %v1563
    %2126 = vmatpush.msra.mxu0 %v1559
    %2127 = vmatpush.msra.mxu0 %v1555
    %2128 = vmatpush.msra.mxu0 %v1551
    %2129 = vmatmul.f32.gmra.mxu0 %v2001
    %v2130 = vpop.f32.mrf.mxu0
    %v2131 = vadd.f32 %v2111, %v2130
    %2132 = vdwg.mxu0
    %2133 = vmatpush.msra.mxu0 %v1675
    %2134 = vmatpush.msra.mxu0 %v1671
    %2135 = vmatpush.msra.mxu0 %v1667
    %2136 = vmatpush.msra.mxu0 %v1663
    %2137 = vmatpush.msra.mxu0 %v1659
    %2138 = vmatpush.msra.mxu0 %v1655
    %2139 = vmatpush.msra.mxu0 %v1651
    %2140 = vmatpush.msra.mxu0 %v1647
    %2141 = vmatpush.msra.mxu0 %v1643
    %2142 = vmatpush.msra.mxu0 %v1639
    %2143 = vmatpush.msra.mxu0 %v1635
    %2144 = vmatpush.msra.mxu0 %v1631
    %2145 = vmatpush.msra.mxu0 %v1627
    %2146 = vmatpush.msra.mxu0 %v1623
    %2147 = vmatpush.msra.mxu0 %v1619
    %2148 = vmatpush.msra.mxu0 %v1615
    %2149 = vmatmul.f32.gmra.mxu0 %v2002
    %v2150 = vpop.f32.mrf.mxu0
    %v2151 = vadd.f32 %v2131, %v2150
    %2152 = vdwg.mxu0
    %2153 = vmatpush.msra.mxu0 %v1739
    %2154 = vmatpush.msra.mxu0 %v1735
    %2155 = vmatpush.msra.mxu0 %v1731
    %2156 = vmatpush.msra.mxu0 %v1727
    %2157 = vmatpush.msra.mxu0 %v1723
    %2158 = vmatpush.msra.mxu0 %v1719
    %2159 = vmatpush.msra.mxu0 %v1715
    %2160 = vmatpush.msra.mxu0 %v1711
    %2161 = vmatpush.msra.mxu0 %v1707
    %2162 = vmatpush.msra.mxu0 %v1703
    %2163 = vmatpush.msra.mxu0 %v1699
    %2164 = vmatpush.msra.mxu0 %v1695
    %2165 = vmatpush.msra.mxu0 %v1691
    %2166 = vmatpush.msra.mxu0 %v1687
    %2167 = vmatpush.msra.mxu0 %v1683
    %2168 = vmatpush.msra.mxu0 %v1679
    %2169 = vmatmul.f32.gmra.mxu0 %v2003
    %v2170 = vpop.f32.mrf.mxu0
    %v2171 = vadd.f32 %v2151, %v2170
    %2172 = vdwg.mxu0
    %2173 = vmatpush.msra.mxu0 %v1548
    %2174 = vmatpush.msra.mxu0 %v1544
    %2175 = vmatpush.msra.mxu0 %v1540
    %2176 = vmatpush.msra.mxu0 %v1536
    %2177 = vmatpush.msra.mxu0 %v1532
    %2178 = vmatpush.msra.mxu0 %v1528
    %2179 = vmatpush.msra.mxu0 %v1524
    %2180 = vmatpush.msra.mxu0 %v1520
    %2181 = vmatpush.msra.mxu0 %v1516
    %2182 = vmatpush.msra.mxu0 %v1512
    %2183 = vmatpush.msra.mxu0 %v1508
    %2184 = vmatpush.msra.mxu0 %v1504
    %2185 = vmatpush.msra.mxu0 %v1500
    %2186 = vmatpush.msra.mxu0 %v1496
    %2187 = vmatpush.msra.mxu0 %v1492
    %2188 = vmatpush.msra.mxu0 %v1488
    %2189 = vmatmul.f32.gmra.mxu0 %v2000
    %v2190 = vpop.f32.mrf.mxu0
    %v2191 = vadd.f32 %v2007, %v2190
    %2192 = vdwg.mxu0
    %2193 = vmatpush.msra.mxu0 %v1612
    %2194 = vmatpush.msra.mxu0 %v1608
    %2195 = vmatpush.msra.mxu0 %v1604
    %2196 = vmatpush.msra.mxu0 %v1600
    %2197 = vmatpush.msra.mxu0 %v1596
    %2198 = vmatpush.msra.mxu0 %v1592
    %2199 = vmatpush.msra.mxu0 %v1588
    %2200 = vmatpush.msra.mxu0 %v1584
    %2201 = vmatpush.msra.mxu0 %v1580
    %2202 = vmatpush.msra.mxu0 %v1576
    %2203 = vmatpush.msra.mxu0 %v1572
    %2204 = vmatpush.msra.mxu0 %v1568
    %2205 = vmatpush.msra.mxu0 %v1564
    %2206 = vmatpush.msra.mxu0 %v1560
    %2207 = vmatpush.msra.mxu0 %v1556
    %2208 = vmatpush.msra.mxu0 %v1552
    %2209 = vmatmul.f32.gmra.mxu0 %v2001
    %v2210 = vpop.f32.mrf.mxu0
    %v2211 = vadd.f32 %v2191, %v2210
    %2212 = vdwg.mxu0
    %2213 = vmatpush.msra.mxu0 %v1676
    %2214 = vmatpush.msra.mxu0 %v1672
    %2215 = vmatpush.msra.mxu0 %v1668
    %2216 = vmatpush.msra.mxu0 %v1664
    %2217 = vmatpush.msra.mxu0 %v1660
    %2218 = vmatpush.msra.mxu0 %v1656
    %2219 = vmatpush.msra.mxu0 %v1652
    %2220 = vmatpush.msra.mxu0 %v1648
    %2221 = vmatpush.msra.mxu0 %v1644
    %2222 = vmatpush.msra.mxu0 %v1640
    %2223 = vmatpush.msra.mxu0 %v1636
    %2224 = vmatpush.msra.mxu0 %v1632
    %2225 = vmatpush.msra.mxu0 %v1628
    %2226 = vmatpush.msra.mxu0 %v1624
    %2227 = vmatpush.msra.mxu0 %v1620
    %2228 = vmatpush.msra.mxu0 %v1616
    %2229 = vmatmul.f32.gmra.mxu0 %v2002
    %v2230 = vpop.f32.mrf.mxu0
    %v2231 = vadd.f32 %v2211, %v2230
    %2232 = vdwg.mxu0
    %2233 = vmatpush.msra.mxu0 %v1740
    %2234 = vmatpush.msra.mxu0 %v1736
    %2235 = vmatpush.msra.mxu0 %v1732
    %2236 = vmatpush.msra.mxu0 %v1728
    %2237 = vmatpush.msra.mxu0 %v1724
    %2238 = vmatpush.msra.mxu0 %v1720
    %2239 = vmatpush.msra.mxu0 %v1716
    %2240 = vmatpush.msra.mxu0 %v1712
    %2241 = vmatpush.msra.mxu0 %v1708
    %2242 = vmatpush.msra.mxu0 %v1704
    %2243 = vmatpush.msra.mxu0 %v1700
    %2244 = vmatpush.msra.mxu0 %v1696
    %2245 = vmatpush.msra.mxu0 %v1692
    %2246 = vmatpush.msra.mxu0 %v1688
    %2247 = vmatpush.msra.mxu0 %v1684
    %2248 = vmatpush.msra.mxu0 %v1680
    %2249 = vmatmul.f32.gmra.mxu0 %v2003
    %v2250 = vpop.f32.mrf.mxu0
    %v2251 = vadd.f32 %v2231, %v2250
    %2252 = vdwg.mxu0
    %2253 = vmatpush.msra.mxu0 %v1549
    %2254 = vmatpush.msra.mxu0 %v1545
    %2255 = vmatpush.msra.mxu0 %v1541
    %2256 = vmatpush.msra.mxu0 %v1537
    %2257 = vmatpush.msra.mxu0 %v1533
    %2258 = vmatpush.msra.mxu0 %v1529
    %2259 = vmatpush.msra.mxu0 %v1525
    %2260 = vmatpush.msra.mxu0 %v1521
    %2261 = vmatpush.msra.mxu0 %v1517
    %2262 = vmatpush.msra.mxu0 %v1513
    %2263 = vmatpush.msra.mxu0 %v1509
    %2264 = vmatpush.msra.mxu0 %v1505
    %2265 = vmatpush.msra.mxu0 %v1501
    %2266 = vmatpush.msra.mxu0 %v1497
    %2267 = vmatpush.msra.mxu0 %v1493
    %2268 = vmatpush.msra.mxu0 %v1489
    %2269 = vmatmul.f32.gmra.mxu0 %v2000
    %v2270 = vpop.f32.mrf.mxu0
    %v2271 = vadd.f32 %v2008, %v2270
    %2272 = vdwg.mxu0
    %2273 = vmatpush.msra.mxu0 %v1613
    %2274 = vmatpush.msra.mxu0 %v1609
    %2275 = vmatpush.msra.mxu0 %v1605
    %2276 = vmatpush.msra.mxu0 %v1601
    %2277 = vmatpush.msra.mxu0 %v1597
    %2278 = vmatpush.msra.mxu0 %v1593
    %2279 = vmatpush.msra.mxu0 %v1589
    %2280 = vmatpush.msra.mxu0 %v1585
    %2281 = vmatpush.msra.mxu0 %v1581
    %2282 = vmatpush.msra.mxu0 %v1577
    %2283 = vmatpush.msra.mxu0 %v1573
    %2284 = vmatpush.msra.mxu0 %v1569
    %2285 = vmatpush.msra.mxu0 %v1565
    %2286 = vmatpush.msra.mxu0 %v1561
    %2287 = vmatpush.msra.mxu0 %v1557
    %2288 = vmatpush.msra.mxu0 %v1553
    %2289 = vmatmul.f32.gmra.mxu0 %v2001
    %v2290 = vpop.f32.mrf.mxu0
    %v2291 = vadd.f32 %v2271, %v2290
    %2292 = vdwg.mxu0
    %2293 = vmatpush.msra.mxu0 %v1677
    %2294 = vmatpush.msra.mxu0 %v1673
    %2295 = vmatpush.msra.mxu0 %v1669
    %2296 = vmatpush.msra.mxu0 %v1665
    %2297 = vmatpush.msra.mxu0 %v1661
    %2298 = vmatpush.msra.mxu0 %v1657
    %2299 = vmatpush.msra.mxu0 %v1653
    %2300 = vmatpush.msra.mxu0 %v1649
    %2301 = vmatpush.msra.mxu0 %v1645
    %2302 = vmatpush.msra.mxu0 %v1641
    %2303 = vmatpush.msra.mxu0 %v1637
    %2304 = vmatpush.msra.mxu0 %v1633
    %2305 = vmatpush.msra.mxu0 %v1629
    %2306 = vmatpush.msra.mxu0 %v1625
    %2307 = vmatpush.msra.mxu0 %v1621
    %2308 = vmatpush.msra.mxu0 %v1617
    %2309 = vmatmul.f32.gmra.mxu0 %v2002
    %v2310 = vpop.f32.mrf.mxu0
    %v2311 = vadd.f32 %v2291, %v2310
    %2312 = vdwg.mxu0
    %2313 = vmatpush.msra.mxu0 %v1741
    %2314 = vmatpush.msra.mxu0 %v1737
    %2315 = vmatpush.msra.mxu0 %v1733
    %2316 = vmatpush.msra.mxu0 %v1729
    %2317 = vmatpush.msra.mxu0 %v1725
    %2318 = vmatpush.msra.mxu0 %v1721
    %2319 = vmatpush.msra.mxu0 %v1717
    %2320 = vmatpush.msra.mxu0 %v1713
    %2321 = vmatpush.msra.mxu0 %v1709
    %2322 = vmatpush.msra.mxu0 %v1705
    %2323 = vmatpush.msra.mxu0 %v1701
    %2324 = vmatpush.msra.mxu0 %v1697
    %2325 = vmatpush.msra.mxu0 %v1693
    %2326 = vmatpush.msra.mxu0 %v1689
    %2327 = vmatpush.msra.mxu0 %v1685
    %2328 = vmatpush.msra.mxu0 %v1681
    %2329 = vmatmul.f32.gmra.mxu0 %v2003
    %v2330 = vpop.f32.mrf.mxu0
    %v2331 = vadd.f32 %v2311, %v2330
    %2332 = vdwg.mxu0
    %v2333 = vld [vmem:[%s11] sm:$0xff]
    %v2334 = vld [vmem:[%s11 + $0x8] sm:$0xff]
    %v2335 = vld [vmem:[%s11 + $0x10] sm:$0xff]
    %v2336 = vld [vmem:[%s11 + $0x18] sm:$0xff]
    %v2337 = vld [vmem:[%s11 + $0x20] sm:$0xff]
    %v2338 = vld [vmem:[%s11 + $0x28] sm:$0xff]
    %v2339 = vld [vmem:[%s11 + $0x30] sm:$0xff]
    %v2340 = vld [vmem:[%s11 + $0x38] sm:$0xff]
    %v2341 = vld [vmem:[%s11 + $0x40] sm:$0xff]
    %v2342 = vld [vmem:[%s11 + $0x48] sm:$0xff]
    %v2343 = vld [vmem:[%s11 + $0x50] sm:$0xff]
    %v2344 = vld [vmem:[%s11 + $0x58] sm:$0xff]
    %v2345 = vld [vmem:[%s11 + $0x60] sm:$0xff]
    %v2346 = vld [vmem:[%s11 + $0x68] sm:$0xff]
    %v2347 = vld [vmem:[%s11 + $0x70] sm:$0xff]
    %v2348 = vld [vmem:[%s11 + $0x78] sm:$0xff]
    %v2349 = vld [vmem:[%s11 + $0x80] sm:$0xff]
    %v2350 = vld [vmem:[%s11 + $0x88] sm:$0xff]
    %v2351 = vld [vmem:[%s11 + $0x90] sm:$0xff]
    %v2352 = vld [vmem:[%s11 + $0x98] sm:$0xff]
    %v2353 = vld [vmem:[%s11 + $0xa0] sm:$0xff]
    %v2354 = vld [vmem:[%s11 + $0xa8] sm:$0xff]
    %v2355 = vld [vmem:[%s11 + $0xb0] sm:$0xff]
    %v2356 = vld [vmem:[%s11 + $0xb8] sm:$0xff]
    %v2357 = vld [vmem:[%s11 + $0xc0] sm:$0xff]
    %v2358 = vld [vmem:[%s11 + $0xc8] sm:$0xff]
    %v2359 = vld [vmem:[%s11 + $0xd0] sm:$0xff]
    %v2360 = vld [vmem:[%s11 + $0xd8] sm:$0xff]
    %v2361 = vld [vmem:[%s11 + $0xe0] sm:$0xff]
    %v2362 = vld [vmem:[%s11 + $0xe8] sm:$0xff]
    %v2363 = vld [vmem:[%s11 + $0xf0] sm:$0xff]
    %v2364 = vld [vmem:[%s11 + $0xf8] sm:$0xff]
    %v2365 = vld [vmem:[%s11 + $0x100] sm:$0xff]
    %v2366 = vld [vmem:[%s11 + $0x108] sm:$0xff]
    %v2367 = vld [vmem:[%s11 + $0x110] sm:$0xff]
    %v2368 = vld [vmem:[%s11 + $0x118] sm:$0xff]
    %v2369 = vld [vmem:[%s11 + $0x120] sm:$0xff]
    %v2370 = vld [vmem:[%s11 + $0x128] sm:$0xff]
    %v2371 = vld [vmem:[%s11 + $0x130] sm:$0xff]
    %v2372 = vld [vmem:[%s11 + $0x138] sm:$0xff]
    %v2373 = vld [vmem:[%s11 + $0x140] sm:$0xff]
    %v2374 = vld [vmem:[%s11 + $0x148] sm:$0xff]
    %v2375 = vld [vmem:[%s11 + $0x150] sm:$0xff]
    %v2376 = vld [vmem:[%s11 + $0x158] sm:$0xff]
    %v2377 = vld [vmem:[%s11 + $0x160] sm:$0xff]
    %v2378 = vld [vmem:[%s11 + $0x168] sm:$0xff]
    %v2379 = vld [vmem:[%s11 + $0x170] sm:$0xff]
    %v2380 = vld [vmem:[%s11 + $0x178] sm:$0xff]
    %v2381 = vld [vmem:[%s11 + $0x180] sm:$0xff]
    %v2382 = vld [vmem:[%s11 + $0x188] sm:$0xff]
    %v2383 = vld [vmem:[%s11 + $0x190] sm:$0xff]
    %v2384 = vld [vmem:[%s11 + $0x198] sm:$0xff]
    %v2385 = vld [vmem:[%s11 + $0x1a0] sm:$0xff]
    %v2386 = vld [vmem:[%s11 + $0x1a8] sm:$0xff]
    %v2387 = vld [vmem:[%s11 + $0x1b0] sm:$0xff]
    %v2388 = vld [vmem:[%s11 + $0x1b8] sm:$0xff]
    %v2389 = vld [vmem:[%s11 + $0x1c0] sm:$0xff]
    %v2390 = vld [vmem:[%s11 + $0x1c8] sm:$0xff]
    %v2391 = vld [vmem:[%s11 + $0x1d0] sm:$0xff]
    %v2392 = vld [vmem:[%s11 + $0x1d8] sm:$0xff]
    %v2393 = vld [vmem:[%s11 + $0x1e0] sm:$0xff]
    %v2394 = vld [vmem:[%s11 + $0x1e8] sm:$0xff]
    %v2395 = vld [vmem:[%s11 + $0x1f0] sm:$0xff]
    %v2396 = vld [vmem:[%s11 + $0x1f8] sm:$0xff]
    %v2397 = vld [vmem:[%s11 + $0x200] sm:$0xff]
    %v2398 = vld [vmem:[%s11 + $0x208] sm:$0xff]
    %v2399 = vld [vmem:[%s11 + $0x210] sm:$0xff]
    %v2400 = vld [vmem:[%s11 + $0x218] sm:$0xff]
    %v2401 = vld [vmem:[%s11 + $0x220] sm:$0xff]
    %v2402 = vld [vmem:[%s11 + $0x228] sm:$0xff]
    %v2403 = vld [vmem:[%s11 + $0x230] sm:$0xff]
    %v2404 = vld [vmem:[%s11 + $0x238] sm:$0xff]
    %v2405 = vld [vmem:[%s11 + $0x240] sm:$0xff]
    %v2406 = vld [vmem:[%s11 + $0x248] sm:$0xff]
    %v2407 = vld [vmem:[%s11 + $0x250] sm:$0xff]
    %v2408 = vld [vmem:[%s11 + $0x258] sm:$0xff]
    %v2409 = vld [vmem:[%s11 + $0x260] sm:$0xff]
    %v2410 = vld [vmem:[%s11 + $0x268] sm:$0xff]
    %v2411 = vld [vmem:[%s11 + $0x270] sm:$0xff]
    %v2412 = vld [vmem:[%s11 + $0x278] sm:$0xff]
    %v2413 = vld [vmem:[%s11 + $0x280] sm:$0xff]
    %v2414 = vld [vmem:[%s11 + $0x288] sm:$0xff]
    %v2415 = vld [vmem:[%s11 + $0x290] sm:$0xff]
    %v2416 = vld [vmem:[%s11 + $0x298] sm:$0xff]
    %v2417 = vld [vmem:[%s11 + $0x2a0] sm:$0xff]
    %v2418 = vld [vmem:[%s11 + $0x2a8] sm:$0xff]
    %v2419 = vld [vmem:[%s11 + $0x2b0] sm:$0xff]
    %v2420 = vld [vmem:[%s11 + $0x2b8] sm:$0xff]
    %v2421 = vld [vmem:[%s11 + $0x2c0] sm:$0xff]
    %v2422 = vld [vmem:[%s11 + $0x2c8] sm:$0xff]
    %v2423 = vld [vmem:[%s11 + $0x2d0] sm:$0xff]
    %v2424 = vld [vmem:[%s11 + $0x2d8] sm:$0xff]
    %v2425 = vld [vmem:[%s11 + $0x2e0] sm:$0xff]
    %v2426 = vld [vmem:[%s11 + $0x2e8] sm:$0xff]
    %v2427 = vld [vmem:[%s11 + $0x2f0] sm:$0xff]
    %v2428 = vld [vmem:[%s11 + $0x2f8] sm:$0xff]
    %v2429 = vld [vmem:[%s11 + $0x300] sm:$0xff]
    %v2430 = vld [vmem:[%s11 + $0x308] sm:$0xff]
    %v2431 = vld [vmem:[%s11 + $0x310] sm:$0xff]
    %v2432 = vld [vmem:[%s11 + $0x318] sm:$0xff]
    %v2433 = vld [vmem:[%s11 + $0x320] sm:$0xff]
    %v2434 = vld [vmem:[%s11 + $0x328] sm:$0xff]
    %v2435 = vld [vmem:[%s11 + $0x330] sm:$0xff]
    %v2436 = vld [vmem:[%s11 + $0x338] sm:$0xff]
    %v2437 = vld [vmem:[%s11 + $0x340] sm:$0xff]
    %v2438 = vld [vmem:[%s11 + $0x348] sm:$0xff]
    %v2439 = vld [vmem:[%s11 + $0x350] sm:$0xff]
    %v2440 = vld [vmem:[%s11 + $0x358] sm:$0xff]
    %v2441 = vld [vmem:[%s11 + $0x360] sm:$0xff]
    %v2442 = vld [vmem:[%s11 + $0x368] sm:$0xff]
    %v2443 = vld [vmem:[%s11 + $0x370] sm:$0xff]
    %v2444 = vld [vmem:[%s11 + $0x378] sm:$0xff]
    %v2445 = vld [vmem:[%s11 + $0x380] sm:$0xff]
    %v2446 = vld [vmem:[%s11 + $0x388] sm:$0xff]
    %v2447 = vld [vmem:[%s11 + $0x390] sm:$0xff]
    %v2448 = vld [vmem:[%s11 + $0x398] sm:$0xff]
    %v2449 = vld [vmem:[%s11 + $0x3a0] sm:$0xff]
    %v2450 = vld [vmem:[%s11 + $0x3a8] sm:$0xff]
    %v2451 = vld [vmem:[%s11 + $0x3b0] sm:$0xff]
    %v2452 = vld [vmem:[%s11 + $0x3b8] sm:$0xff]
    %v2453 = vld [vmem:[%s11 + $0x3c0] sm:$0xff]
    %v2454 = vld [vmem:[%s11 + $0x3c8] sm:$0xff]
    %v2455 = vld [vmem:[%s11 + $0x3d0] sm:$0xff]
    %v2456 = vld [vmem:[%s11 + $0x3d8] sm:$0xff]
    %v2457 = vld [vmem:[%s11 + $0x3e0] sm:$0xff]
    %v2458 = vld [vmem:[%s11 + $0x3e8] sm:$0xff]
    %v2459 = vld [vmem:[%s11 + $0x3f0] sm:$0xff]
    %v2460 = vld [vmem:[%s11 + $0x3f8] sm:$0xff]
    %v2461 = vld [vmem:[%s11 + $0x400] sm:$0xff]
    %v2462 = vld [vmem:[%s11 + $0x408] sm:$0xff]
    %v2463 = vld [vmem:[%s11 + $0x410] sm:$0xff]
    %v2464 = vld [vmem:[%s11 + $0x418] sm:$0xff]
    %v2465 = vld [vmem:[%s11 + $0x420] sm:$0xff]
    %v2466 = vld [vmem:[%s11 + $0x428] sm:$0xff]
    %v2467 = vld [vmem:[%s11 + $0x430] sm:$0xff]
    %v2468 = vld [vmem:[%s11 + $0x438] sm:$0xff]
    %v2469 = vld [vmem:[%s11 + $0x440] sm:$0xff]
    %v2470 = vld [vmem:[%s11 + $0x448] sm:$0xff]
    %v2471 = vld [vmem:[%s11 + $0x450] sm:$0xff]
    %v2472 = vld [vmem:[%s11 + $0x458] sm:$0xff]
    %v2473 = vld [vmem:[%s11 + $0x460] sm:$0xff]
    %v2474 = vld [vmem:[%s11 + $0x468] sm:$0xff]
    %v2475 = vld [vmem:[%s11 + $0x470] sm:$0xff]
    %v2476 = vld [vmem:[%s11 + $0x478] sm:$0xff]
    %v2477 = vld [vmem:[%s11 + $0x480] sm:$0xff]
    %v2478 = vld [vmem:[%s11 + $0x488] sm:$0xff]
    %v2479 = vld [vmem:[%s11 + $0x490] sm:$0xff]
    %v2480 = vld [vmem:[%s11 + $0x498] sm:$0xff]
    %v2481 = vld [vmem:[%s11 + $0x4a0] sm:$0xff]
    %v2482 = vld [vmem:[%s11 + $0x4a8] sm:$0xff]
    %v2483 = vld [vmem:[%s11 + $0x4b0] sm:$0xff]
    %v2484 = vld [vmem:[%s11 + $0x4b8] sm:$0xff]
    %v2485 = vld [vmem:[%s11 + $0x4c0] sm:$0xff]
    %v2486 = vld [vmem:[%s11 + $0x4c8] sm:$0xff]
    %v2487 = vld [vmem:[%s11 + $0x4d0] sm:$0xff]
    %v2488 = vld [vmem:[%s11 + $0x4d8] sm:$0xff]
    %v2489 = vld [vmem:[%s11 + $0x4e0] sm:$0xff]
    %v2490 = vld [vmem:[%s11 + $0x4e8] sm:$0xff]
    %v2491 = vld [vmem:[%s11 + $0x4f0] sm:$0xff]
    %v2492 = vld [vmem:[%s11 + $0x4f8] sm:$0xff]
    %v2493 = vld [vmem:[%s11 + $0x500] sm:$0xff]
    %v2494 = vld [vmem:[%s11 + $0x508] sm:$0xff]
    %v2495 = vld [vmem:[%s11 + $0x510] sm:$0xff]
    %v2496 = vld [vmem:[%s11 + $0x518] sm:$0xff]
    %v2497 = vld [vmem:[%s11 + $0x520] sm:$0xff]
    %v2498 = vld [vmem:[%s11 + $0x528] sm:$0xff]
    %v2499 = vld [vmem:[%s11 + $0x530] sm:$0xff]
    %v2500 = vld [vmem:[%s11 + $0x538] sm:$0xff]
    %v2501 = vld [vmem:[%s11 + $0x540] sm:$0xff]
    %v2502 = vld [vmem:[%s11 + $0x548] sm:$0xff]
    %v2503 = vld [vmem:[%s11 + $0x550] sm:$0xff]
    %v2504 = vld [vmem:[%s11 + $0x558] sm:$0xff]
    %v2505 = vld [vmem:[%s11 + $0x560] sm:$0xff]
    %v2506 = vld [vmem:[%s11 + $0x568] sm:$0xff]
    %v2507 = vld [vmem:[%s11 + $0x570] sm:$0xff]
    %v2508 = vld [vmem:[%s11 + $0x578] sm:$0xff]
    %v2509 = vld [vmem:[%s11 + $0x580] sm:$0xff]
    %v2510 = vld [vmem:[%s11 + $0x588] sm:$0xff]
    %v2511 = vld [vmem:[%s11 + $0x590] sm:$0xff]
    %v2512 = vld [vmem:[%s11 + $0x598] sm:$0xff]
    %v2513 = vld [vmem:[%s11 + $0x5a0] sm:$0xff]
    %v2514 = vld [vmem:[%s11 + $0x5a8] sm:$0xff]
    %v2515 = vld [vmem:[%s11 + $0x5b0] sm:$0xff]
    %v2516 = vld [vmem:[%s11 + $0x5b8] sm:$0xff]
    %v2517 = vld [vmem:[%s11 + $0x5c0] sm:$0xff]
    %v2518 = vld [vmem:[%s11 + $0x5c8] sm:$0xff]
    %v2519 = vld [vmem:[%s11 + $0x5d0] sm:$0xff]
    %v2520 = vld [vmem:[%s11 + $0x5d8] sm:$0xff]
    %v2521 = vld [vmem:[%s11 + $0x5e0] sm:$0xff]
    %v2522 = vld [vmem:[%s11 + $0x5e8] sm:$0xff]
    %v2523 = vld [vmem:[%s11 + $0x5f0] sm:$0xff]
    %v2524 = vld [vmem:[%s11 + $0x5f8] sm:$0xff]
    %v2525 = vmul.f32 %v2333, 0.999
    %v2526 = vmul.f32 %v2334, 0.999
    %v2527 = vmul.f32 %v2335, 0.999
    %v2528 = vmul.f32 %v2336, 0.999
    %v2529 = vmul.f32 %v2337, 0.999
    %v2530 = vmul.f32 %v2338, 0.999
    %v2531 = vmul.f32 %v2339, 0.999
    %v2532 = vmul.f32 %v2340, 0.999
    %v2533 = vmul.f32 %v2341, 0.999
    %v2534 = vmul.f32 %v2342, 0.999
    %v2535 = vmul.f32 %v2343, 0.999
    %v2536 = vmul.f32 %v2344, 0.999
    %v2537 = vmul.f32 %v2345, 0.999
    %v2538 = vmul.f32 %v2346, 0.999
    %v2539 = vmul.f32 %v2347, 0.999
    %v2540 = vmul.f32 %v2348, 0.999
    %v2541 = vmul.f32 %v2349, 0.999
    %v2542 = vmul.f32 %v2350, 0.999
    %v2543 = vmul.f32 %v2351, 0.999
    %v2544 = vmul.f32 %v2352, 0.999
    %v2545 = vmul.f32 %v2353, 0.999
    %v2546 = vmul.f32 %v2354, 0.999
    %v2547 = vmul.f32 %v2355, 0.999
    %v2548 = vmul.f32 %v2356, 0.999
    %v2549 = vmul.f32 %v2357, 0.999
    %v2550 = vmul.f32 %v2358, 0.999
    %v2551 = vmul.f32 %v2359, 0.999
    %v2552 = vmul.f32 %v2360, 0.999
    %v2553 = vmul.f32 %v2361, 0.999
    %v2554 = vmul.f32 %v2362, 0.999
    %v2555 = vmul.f32 %v2363, 0.999
    %v2556 = vmul.f32 %v2364, 0.999
    %v2557 = vmul.f32 %v2365, 0.999
    %v2558 = vmul.f32 %v2366, 0.999
    %v2559 = vmul.f32 %v2367, 0.999
    %v2560 = vmul.f32 %v2368, 0.999
    %v2561 = vmul.f32 %v2369, 0.999
    %v2562 = vmul.f32 %v2370, 0.999
    %v2563 = vmul.f32 %v2371, 0.999
    %v2564 = vmul.f32 %v2372, 0.999
    %v2565 = vmul.f32 %v2373, 0.999
    %v2566 = vmul.f32 %v2374, 0.999
    %v2567 = vmul.f32 %v2375, 0.999
    %v2568 = vmul.f32 %v2376, 0.999
    %v2569 = vmul.f32 %v2377, 0.999
    %v2570 = vmul.f32 %v2378, 0.999
    %v2571 = vmul.f32 %v2379, 0.999
    %v2572 = vmul.f32 %v2380, 0.999
    %v2573 = vmul.f32 %v2381, 0.999
    %v2574 = vmul.f32 %v2382, 0.999
    %v2575 = vmul.f32 %v2383, 0.999
    %v2576 = vmul.f32 %v2384, 0.999
    %v2577 = vmul.f32 %v2385, 0.999
    %v2578 = vmul.f32 %v2386, 0.999
    %v2579 = vmul.f32 %v2387, 0.999
    %v2580 = vmul.f32 %v2388, 0.999
    %v2581 = vmul.f32 %v2389, 0.999
    %v2582 = vmul.f32 %v2390, 0.999
    %v2583 = vmul.f32 %v2391, 0.999
    %v2584 = vmul.f32 %v2392, 0.999
    %v2585 = vmul.f32 %v2393, 0.999
    %v2586 = vmul.f32 %v2394, 0.999
    %v2587 = vmul.f32 %v2395, 0.999
    %v2588 = vmul.f32 %v2396, 0.999
    %v2589 = vmul.f32 %v2397, 0.999
    %v2590 = vmul.f32 %v2398, 0.999
    %v2591 = vmul.f32 %v2399, 0.999
    %v2592 = vmul.f32 %v2400, 0.999
    %v2593 = vmul.f32 %v2401, 0.999
    %v2594 = vmul.f32 %v2402, 0.999
    %v2595 = vmul.f32 %v2403, 0.999
    %v2596 = vmul.f32 %v2404, 0.999
    %v2597 = vmul.f32 %v2405, 0.999
    %v2598 = vmul.f32 %v2406, 0.999
    %v2599 = vmul.f32 %v2407, 0.999
    %v2600 = vmul.f32 %v2408, 0.999
    %v2601 = vmul.f32 %v2409, 0.999
    %v2602 = vmul.f32 %v2410, 0.999
    %v2603 = vmul.f32 %v2411, 0.999
    %v2604 = vmul.f32 %v2412, 0.999
    %v2605 = vmul.f32 %v2413, 0.999
    %v2606 = vmul.f32 %v2414, 0.999
    %v2607 = vmul.f32 %v2415, 0.999
    %v2608 = vmul.f32 %v2416, 0.999
    %v2609 = vmul.f32 %v2417, 0.999
    %v2610 = vmul.f32 %v2418, 0.999
    %v2611 = vmul.f32 %v2419, 0.999
    %v2612 = vmul.f32 %v2420, 0.999
    %v2613 = vmul.f32 %v2421, 0.999
    %v2614 = vmul.f32 %v2422, 0.999
    %v2615 = vmul.f32 %v2423, 0.999
    %v2616 = vmul.f32 %v2424, 0.999
    %v2617 = vmul.f32 %v2425, 0.999
    %v2618 = vmul.f32 %v2426, 0.999
    %v2619 = vmul.f32 %v2427, 0.999
    %v2620 = vmul.f32 %v2428, 0.999
    %v2621 = vmul.f32 %v2429, 0.999
    %v2622 = vmul.f32 %v2430, 0.999
    %v2623 = vmul.f32 %v2431, 0.999
    %v2624 = vmul.f32 %v2432, 0.999
    %v2625 = vmul.f32 %v2433, 0.999
    %v2626 = vmul.f32 %v2434, 0.999
    %v2627 = vmul.f32 %v2435, 0.999
    %v2628 = vmul.f32 %v2436, 0.999
    %v2629 = vmul.f32 %v2437, 0.999
    %v2630 = vmul.f32 %v2438, 0.999
    %v2631 = vmul.f32 %v2439, 0.999
    %v2632 = vmul.f32 %v2440, 0.999
    %v2633 = vmul.f32 %v2441, 0.999
    %v2634 = vmul.f32 %v2442, 0.999
    %v2635 = vmul.f32 %v2443, 0.999
    %v2636 = vmul.f32 %v2444, 0.999
    %v2637 = vmul.f32 %v2445, 0.999
    %v2638 = vmul.f32 %v2446, 0.999
    %v2639 = vmul.f32 %v2447, 0.999
    %v2640 = vmul.f32 %v2448, 0.999
    %v2641 = vmul.f32 %v2449, 0.999
    %v2642 = vmul.f32 %v2450, 0.999
    %v2643 = vmul.f32 %v2451, 0.999
    %v2644 = vmul.f32 %v2452, 0.999
    %v2645 = vmul.f32 %v2453, 0.999
    %v2646 = vmul.f32 %v2454, 0.999
    %v2647 = vmul.f32 %v2455, 0.999
    %v2648 = vmul.f32 %v2456, 0.999
    %v2649 = vmul.f32 %v2457, 0.999
    %v2650 = vmul.f32 %v2458, 0.999
    %v2651 = vmul.f32 %v2459, 0.999
    %v2652 = vmul.f32 %v2460, 0.999
    %v2653 = vmul.f32 %v2461, 0.999
    %v2654 = vmul.f32 %v2462, 0.999
    %v2655 = vmul.f32 %v2463, 0.999
    %v2656 = vmul.f32 %v2464, 0.999
    %v2657 = vmul.f32 %v2465, 0.999
    %v2658 = vmul.f32 %v2466, 0.999
    %v2659 = vmul.f32 %v2467, 0.999
    %v2660 = vmul.f32 %v2468, 0.999
    %v2661 = vmul.f32 %v2469, 0.999
    %v2662 = vmul.f32 %v2470, 0.999
    %v2663 = vmul.f32 %v2471, 0.999
    %v2664 = vmul.f32 %v2472, 0.999
    %v2665 = vmul.f32 %v2473, 0.999
    %v2666 = vmul.f32 %v2474, 0.999
    %v2667 = vmul.f32 %v2475, 0.999
    %v2668 = vmul.f32 %v2476, 0.999
    %v2669 = vmul.f32 %v2477, 0.999
    %v2670 = vmul.f32 %v2478, 0.999
    %v2671 = vmul.f32 %v2479, 0.999
    %v2672 = vmul.f32 %v2480, 0.999
    %v2673 = vmul.f32 %v2481, 0.999
    %v2674 = vmul.f32 %v2482, 0.999
    %v2675 = vmul.f32 %v2483, 0.999
    %v2676 = vmul.f32 %v2484, 0.999
    %v2677 = vmul.f32 %v2485, 0.999
    %v2678 = vmul.f32 %v2486, 0.999
    %v2679 = vmul.f32 %v2487, 0.999
    %v2680 = vmul.f32 %v2488, 0.999
    %v2681 = vmul.f32 %v2489, 0.999
    %v2682 = vmul.f32 %v2490, 0.999
    %v2683 = vmul.f32 %v2491, 0.999
    %v2684 = vmul.f32 %v2492, 0.999
    %v2685 = vmul.f32 %v2493, 0.999
    %v2686 = vmul.f32 %v2494, 0.999
    %v2687 = vmul.f32 %v2495, 0.999
    %v2688 = vmul.f32 %v2496, 0.999
    %v2689 = vmul.f32 %v2497, 0.999
    %v2690 = vmul.f32 %v2498, 0.999
    %v2691 = vmul.f32 %v2499, 0.999
    %v2692 = vmul.f32 %v2500, 0.999
    %v2693 = vmul.f32 %v2501, 0.999
    %v2694 = vmul.f32 %v2502, 0.999
    %v2695 = vmul.f32 %v2503, 0.999
    %v2696 = vmul.f32 %v2504, 0.999
    %v2697 = vmul.f32 %v2505, 0.999
    %v2698 = vmul.f32 %v2506, 0.999
    %v2699 = vmul.f32 %v2507, 0.999
    %v2700 = vmul.f32 %v2508, 0.999
    %v2701 = vmul.f32 %v2509, 0.999
    %v2702 = vmul.f32 %v2510, 0.999
    %v2703 = vmul.f32 %v2511, 0.999
    %v2704 = vmul.f32 %v2512, 0.999
    %v2705 = vmul.f32 %v2513, 0.999
    %v2706 = vmul.f32 %v2514, 0.999
    %v2707 = vmul.f32 %v2515, 0.999
    %v2708 = vmul.f32 %v2516, 0.999
    %v2709 = vmul.f32 %v2517, 0.999
    %v2710 = vmul.f32 %v2518, 0.999
    %v2711 = vmul.f32 %v2519, 0.999
    %v2712 = vmul.f32 %v2520, 0.999
    %v2713 = vmul.f32 %v2521, 0.999
    %v2714 = vmul.f32 %v2522, 0.999
    %v2715 = vmul.f32 %v2523, 0.999
    %v2716 = vmul.f32 %v2524, 0.999
    %v2717 = vmul.f32 %v1293, 0.001
    %v2718 = vmul.f32 %v1294, 0.001
    %v2719 = vmul.f32 %v1295, 0.001
    %v2720 = vmul.f32 %v1296, 0.001
    %v2721 = vmul.f32 %v1297, 0.001
    %v2722 = vmul.f32 %v1298, 0.001
    %v2723 = vmul.f32 %v1299, 0.001
    %v2724 = vmul.f32 %v1300, 0.001
    %v2725 = vmul.f32 %v1301, 0.001
    %v2726 = vmul.f32 %v1302, 0.001
    %v2727 = vmul.f32 %v1303, 0.001
    %v2728 = vmul.f32 %v1304, 0.001
    %v2729 = vmul.f32 %v1305, 0.001
    %v2730 = vmul.f32 %v1306, 0.001
    %v2731 = vmul.f32 %v1307, 0.001
    %v2732 = vmul.f32 %v1308, 0.001
    %v2733 = vmul.f32 %v1309, 0.001
    %v2734 = vmul.f32 %v1310, 0.001
    %v2735 = vmul.f32 %v1311, 0.001
    %v2736 = vmul.f32 %v1312, 0.001
    %v2737 = vmul.f32 %v1313, 0.001
    %v2738 = vmul.f32 %v1314, 0.001
    %v2739 = vmul.f32 %v1315, 0.001
    %v2740 = vmul.f32 %v1316, 0.001
    %v2741 = vmul.f32 %v1317, 0.001
    %v2742 = vmul.f32 %v1318, 0.001
    %v2743 = vmul.f32 %v1319, 0.001
    %v2744 = vmul.f32 %v1320, 0.001
    %v2745 = vmul.f32 %v1321, 0.001
    %v2746 = vmul.f32 %v1322, 0.001
    %v2747 = vmul.f32 %v1323, 0.001
    %v2748 = vmul.f32 %v1324, 0.001
    %v2749 = vmul.f32 %v1325, 0.001
    %v2750 = vmul.f32 %v1326, 0.001
    %v2751 = vmul.f32 %v1327, 0.001
    %v2752 = vmul.f32 %v1328, 0.001
    %v2753 = vmul.f32 %v1329, 0.001
    %v2754 = vmul.f32 %v1330, 0.001
    %v2755 = vmul.f32 %v1331, 0.001
    %v2756 = vmul.f32 %v1332, 0.001
    %v2757 = vmul.f32 %v1333, 0.001
    %v2758 = vmul.f32 %v1334, 0.001
    %v2759 = vmul.f32 %v1335, 0.001
    %v2760 = vmul.f32 %v1336, 0.001
    %v2761 = vmul.f32 %v1337, 0.001
    %v2762 = vmul.f32 %v1338, 0.001
    %v2763 = vmul.f32 %v1339, 0.001
    %v2764 = vmul.f32 %v1340, 0.001
    %v2765 = vmul.f32 %v1341, 0.001
    %v2766 = vmul.f32 %v1342, 0.001
    %v2767 = vmul.f32 %v1343, 0.001
    %v2768 = vmul.f32 %v1344, 0.001
    %v2769 = vmul.f32 %v1345, 0.001
    %v2770 = vmul.f32 %v1346, 0.001
    %v2771 = vmul.f32 %v1347, 0.001
    %v2772 = vmul.f32 %v1348, 0.001
    %v2773 = vmul.f32 %v1349, 0.001
    %v2774 = vmul.f32 %v1350, 0.001
    %v2775 = vmul.f32 %v1351, 0.001
    %v2776 = vmul.f32 %v1352, 0.001
    %v2777 = vmul.f32 %v1353, 0.001
    %v2778 = vmul.f32 %v1354, 0.001
    %v2779 = vmul.f32 %v1355, 0.001
    %v2780 = vmul.f32 %v1356, 0.001
    %v2781 = vmul.f32 %v1357, 0.001
    %v2782 = vmul.f32 %v1358, 0.001
    %v2783 = vmul.f32 %v1359, 0.001
    %v2784 = vmul.f32 %v1360, 0.001
    %v2785 = vmul.f32 %v1361, 0.001
    %v2786 = vmul.f32 %v1362, 0.001
    %v2787 = vmul.f32 %v1363, 0.001
    %v2788 = vmul.f32 %v1364, 0.001
    %v2789 = vmul.f32 %v1365, 0.001
    %v2790 = vmul.f32 %v1366, 0.001
    %v2791 = vmul.f32 %v1367, 0.001
    %v2792 = vmul.f32 %v1368, 0.001
    %v2793 = vmul.f32 %v1369, 0.001
    %v2794 = vmul.f32 %v1370, 0.001
    %v2795 = vmul.f32 %v1371, 0.001
    %v2796 = vmul.f32 %v1372, 0.001
    %v2797 = vmul.f32 %v1373, 0.001
    %v2798 = vmul.f32 %v1374, 0.001
    %v2799 = vmul.f32 %v1375, 0.001
    %v2800 = vmul.f32 %v1376, 0.001
    %v2801 = vmul.f32 %v1377, 0.001
    %v2802 = vmul.f32 %v1378, 0.001
    %v2803 = vmul.f32 %v1379, 0.001
    %v2804 = vmul.f32 %v1380, 0.001
    %v2805 = vmul.f32 %v1381, 0.001
    %v2806 = vmul.f32 %v1382, 0.001
    %v2807 = vmul.f32 %v1383, 0.001
    %v2808 = vmul.f32 %v1384, 0.001
    %v2809 = vmul.f32 %v1385, 0.001
    %v2810 = vmul.f32 %v1386, 0.001
    %v2811 = vmul.f32 %v1387, 0.001
    %v2812 = vmul.f32 %v1388, 0.001
    %v2813 = vmul.f32 %v1389, 0.001
    %v2814 = vmul.f32 %v1390, 0.001
    %v2815 = vmul.f32 %v1391, 0.001
    %v2816 = vmul.f32 %v1392, 0.001
    %v2817 = vmul.f32 %v1393, 0.001
    %v2818 = vmul.f32 %v1394, 0.001
    %v2819 = vmul.f32 %v1395, 0.001
    %v2820 = vmul.f32 %v1396, 0.001
    %v2821 = vmul.f32 %v1397, 0.001
    %v2822 = vmul.f32 %v1398, 0.001
    %v2823 = vmul.f32 %v1399, 0.001
    %v2824 = vmul.f32 %v1400, 0.001
    %v2825 = vmul.f32 %v1401, 0.001
    %v2826 = vmul.f32 %v1402, 0.001
    %v2827 = vmul.f32 %v1403, 0.001
    %v2828 = vmul.f32 %v1404, 0.001
    %v2829 = vmul.f32 %v1405, 0.001
    %v2830 = vmul.f32 %v1406, 0.001
    %v2831 = vmul.f32 %v1407, 0.001
    %v2832 = vmul.f32 %v1408, 0.001
    %v2833 = vmul.f32 %v1409, 0.001
    %v2834 = vmul.f32 %v1410, 0.001
    %v2835 = vmul.f32 %v1411, 0.001
    %v2836 = vmul.f32 %v1412, 0.001
    %v2837 = vmul.f32 %v1413, 0.001
    %v2838 = vmul.f32 %v1414, 0.001
    %v2839 = vmul.f32 %v1415, 0.001
    %v2840 = vmul.f32 %v1416, 0.001
    %v2841 = vmul.f32 %v1417, 0.001
    %v2842 = vmul.f32 %v1418, 0.001
    %v2843 = vmul.f32 %v1419, 0.001
    %v2844 = vmul.f32 %v1420, 0.001
    %v2845 = vmul.f32 %v1421, 0.001
    %v2846 = vmul.f32 %v1422, 0.001
    %v2847 = vmul.f32 %v1423, 0.001
    %v2848 = vmul.f32 %v1424, 0.001
    %v2849 = vmul.f32 %v1425, 0.001
    %v2850 = vmul.f32 %v1426, 0.001
    %v2851 = vmul.f32 %v1427, 0.001
    %v2852 = vmul.f32 %v1428, 0.001
    %v2853 = vmul.f32 %v1429, 0.001
    %v2854 = vmul.f32 %v1430, 0.001
    %v2855 = vmul.f32 %v1431, 0.001
    %v2856 = vmul.f32 %v1432, 0.001
    %v2857 = vmul.f32 %v1433, 0.001
    %v2858 = vmul.f32 %v1434, 0.001
    %v2859 = vmul.f32 %v1435, 0.001
    %v2860 = vmul.f32 %v1436, 0.001
    %v2861 = vmul.f32 %v1437, 0.001
    %v2862 = vmul.f32 %v1438, 0.001
    %v2863 = vmul.f32 %v1439, 0.001
    %v2864 = vmul.f32 %v1440, 0.001
    %v2865 = vmul.f32 %v1441, 0.001
    %v2866 = vmul.f32 %v1442, 0.001
    %v2867 = vmul.f32 %v1443, 0.001
    %v2868 = vmul.f32 %v1444, 0.001
    %v2869 = vmul.f32 %v1445, 0.001
    %v2870 = vmul.f32 %v1446, 0.001
    %v2871 = vmul.f32 %v1447, 0.001
    %v2872 = vmul.f32 %v1448, 0.001
    %v2873 = vmul.f32 %v1449, 0.001
    %v2874 = vmul.f32 %v1450, 0.001
    %v2875 = vmul.f32 %v1451, 0.001
    %v2876 = vmul.f32 %v1452, 0.001
    %v2877 = vmul.f32 %v1453, 0.001
    %v2878 = vmul.f32 %v1454, 0.001
    %v2879 = vmul.f32 %v1455, 0.001
    %v2880 = vmul.f32 %v1456, 0.001
    %v2881 = vmul.f32 %v1457, 0.001
    %v2882 = vmul.f32 %v1458, 0.001
    %v2883 = vmul.f32 %v1459, 0.001
    %v2884 = vmul.f32 %v1460, 0.001
    %v2885 = vmul.f32 %v1461, 0.001
    %v2886 = vmul.f32 %v1462, 0.001
    %v2887 = vmul.f32 %v1463, 0.001
    %v2888 = vmul.f32 %v1464, 0.001
    %v2889 = vmul.f32 %v1465, 0.001
    %v2890 = vmul.f32 %v1466, 0.001
    %v2891 = vmul.f32 %v1467, 0.001
    %v2892 = vmul.f32 %v1468, 0.001
    %v2893 = vmul.f32 %v1469, 0.001
    %v2894 = vmul.f32 %v1470, 0.001
    %v2895 = vmul.f32 %v1471, 0.001
    %v2896 = vmul.f32 %v1472, 0.001
    %v2897 = vmul.f32 %v1473, 0.001
    %v2898 = vmul.f32 %v1474, 0.001
    %v2899 = vmul.f32 %v1475, 0.001
    %v2900 = vmul.f32 %v1476, 0.001
    %v2901 = vmul.f32 %v1477, 0.001
    %v2902 = vmul.f32 %v1478, 0.001
    %v2903 = vmul.f32 %v1479, 0.001
    %v2904 = vmul.f32 %v1480, 0.001
    %v2905 = vmul.f32 %v1481, 0.001
    %v2906 = vmul.f32 %v1482, 0.001
    %v2907 = vmul.f32 %v1483, 0.001
    %v2908 = vmul.f32 %v1484, 0.001
    %v2909 = vadd.f32 %v2525, %v2717
    %v2910 = vadd.f32 %v2526, %v2718
    %v2911 = vadd.f32 %v2527, %v2719
    %v2912 = vadd.f32 %v2528, %v2720
    %v2913 = vadd.f32 %v2529, %v2721
    %v2914 = vadd.f32 %v2530, %v2722
    %v2915 = vadd.f32 %v2531, %v2723
    %v2916 = vadd.f32 %v2532, %v2724
    %v2917 = vadd.f32 %v2533, %v2725
    %v2918 = vadd.f32 %v2534, %v2726
    %v2919 = vadd.f32 %v2535, %v2727
    %v2920 = vadd.f32 %v2536, %v2728
    %v2921 = vadd.f32 %v2537, %v2729
    %v2922 = vadd.f32 %v2538, %v2730
    %v2923 = vadd.f32 %v2539, %v2731
    %v2924 = vadd.f32 %v2540, %v2732
    %v2925 = vadd.f32 %v2541, %v2733
    %v2926 = vadd.f32 %v2542, %v2734
    %v2927 = vadd.f32 %v2543, %v2735
    %v2928 = vadd.f32 %v2544, %v2736
    %v2929 = vadd.f32 %v2545, %v2737
    %v2930 = vadd.f32 %v2546, %v2738
    %v2931 = vadd.f32 %v2547, %v2739
    %v2932 = vadd.f32 %v2548, %v2740
    %v2933 = vadd.f32 %v2549, %v2741
    %v2934 = vadd.f32 %v2550, %v2742
    %v2935 = vadd.f32 %v2551, %v2743
    %v2936 = vadd.f32 %v2552, %v2744
    %v2937 = vadd.f32 %v2553, %v2745
    %v2938 = vadd.f32 %v2554, %v2746
    %v2939 = vadd.f32 %v2555, %v2747
    %v2940 = vadd.f32 %v2556, %v2748
    %v2941 = vadd.f32 %v2557, %v2749
    %v2942 = vadd.f32 %v2558, %v2750
    %v2943 = vadd.f32 %v2559, %v2751
    %v2944 = vadd.f32 %v2560, %v2752
    %v2945 = vadd.f32 %v2561, %v2753
    %v2946 = vadd.f32 %v2562, %v2754
    %v2947 = vadd.f32 %v2563, %v2755
    %v2948 = vadd.f32 %v2564, %v2756
    %v2949 = vadd.f32 %v2565, %v2757
    %v2950 = vadd.f32 %v2566, %v2758
    %v2951 = vadd.f32 %v2567, %v2759
    %v2952 = vadd.f32 %v2568, %v2760
    %v2953 = vadd.f32 %v2569, %v2761
    %v2954 = vadd.f32 %v2570, %v2762
    %v2955 = vadd.f32 %v2571, %v2763
    %v2956 = vadd.f32 %v2572, %v2764
    %v2957 = vadd.f32 %v2573, %v2765
    %v2958 = vadd.f32 %v2574, %v2766
    %v2959 = vadd.f32 %v2575, %v2767
    %v2960 = vadd.f32 %v2576, %v2768
    %v2961 = vadd.f32 %v2577, %v2769
    %v2962 = vadd.f32 %v2578, %v2770
    %v2963 = vadd.f32 %v2579, %v2771
    %v2964 = vadd.f32 %v2580, %v2772
    %v2965 = vadd.f32 %v2581, %v2773
    %v2966 = vadd.f32 %v2582, %v2774
    %v2967 = vadd.f32 %v2583, %v2775
    %v2968 = vadd.f32 %v2584, %v2776
    %v2969 = vadd.f32 %v2585, %v2777
    %v2970 = vadd.f32 %v2586, %v2778
    %v2971 = vadd.f32 %v2587, %v2779
    %v2972 = vadd.f32 %v2588, %v2780
    %v2973 = vadd.f32 %v2589, %v2781
    %v2974 = vadd.f32 %v2590, %v2782
    %v2975 = vadd.f32 %v2591, %v2783
    %v2976 = vadd.f32 %v2592, %v2784
    %v2977 = vadd.f32 %v2593, %v2785
    %v2978 = vadd.f32 %v2594, %v2786
    %v2979 = vadd.f32 %v2595, %v2787
    %v2980 = vadd.f32 %v2596, %v2788
    %v2981 = vadd.f32 %v2597, %v2789
    %v2982 = vadd.f32 %v2598, %v2790
    %v2983 = vadd.f32 %v2599, %v2791
    %v2984 = vadd.f32 %v2600, %v2792
    %v2985 = vadd.f32 %v2601, %v2793
    %v2986 = vadd.f32 %v2602, %v2794
    %v2987 = vadd.f32 %v2603, %v2795
    %v2988 = vadd.f32 %v2604, %v2796
    %v2989 = vadd.f32 %v2605, %v2797
    %v2990 = vadd.f32 %v2606, %v2798
    %v2991 = vadd.f32 %v2607, %v2799
    %v2992 = vadd.f32 %v2608, %v2800
    %v2993 = vadd.f32 %v2609, %v2801
    %v2994 = vadd.f32 %v2610, %v2802
    %v2995 = vadd.f32 %v2611, %v2803
    %v2996 = vadd.f32 %v2612, %v2804
    %v2997 = vadd.f32 %v2613, %v2805
    %v2998 = vadd.f32 %v2614, %v2806
    %v2999 = vadd.f32 %v2615, %v2807
    %v3000 = vadd.f32 %v2616, %v2808
    %v3001 = vadd.f32 %v2617, %v2809
    %v3002 = vadd.f32 %v2618, %v2810
    %v3003 = vadd.f32 %v2619, %v2811
    %v3004 = vadd.f32 %v2620, %v2812
    %v3005 = vadd.f32 %v2621, %v2813
    %v3006 = vadd.f32 %v2622, %v2814
    %v3007 = vadd.f32 %v2623, %v2815
    %v3008 = vadd.f32 %v2624, %v2816
    %v3009 = vadd.f32 %v2625, %v2817
    %v3010 = vadd.f32 %v2626, %v2818
    %v3011 = vadd.f32 %v2627, %v2819
    %v3012 = vadd.f32 %v2628, %v2820
    %v3013 = vadd.f32 %v2629, %v2821
    %v3014 = vadd.f32 %v2630, %v2822
    %v3015 = vadd.f32 %v2631, %v2823
    %v3016 = vadd.f32 %v2632, %v2824
    %v3017 = vadd.f32 %v2633, %v2825
    %v3018 = vadd.f32 %v2634, %v2826
    %v3019 = vadd.f32 %v2635, %v2827
    %v3020 = vadd.f32 %v2636, %v2828
    %v3021 = vadd.f32 %v2637, %v2829
    %v3022 = vadd.f32 %v2638, %v2830
    %v3023 = vadd.f32 %v2639, %v2831
    %v3024 = vadd.f32 %v2640, %v2832
    %v3025 = vadd.f32 %v2641, %v2833
    %v3026 = vadd.f32 %v2642, %v2834
    %v3027 = vadd.f32 %v2643, %v2835
    %v3028 = vadd.f32 %v2644, %v2836
    %v3029 = vadd.f32 %v2645, %v2837
    %v3030 = vadd.f32 %v2646, %v2838
    %v3031 = vadd.f32 %v2647, %v2839
    %v3032 = vadd.f32 %v2648, %v2840
    %v3033 = vadd.f32 %v2649, %v2841
    %v3034 = vadd.f32 %v2650, %v2842
    %v3035 = vadd.f32 %v2651, %v2843
    %v3036 = vadd.f32 %v2652, %v2844
    %v3037 = vadd.f32 %v2653, %v2845
    %v3038 = vadd.f32 %v2654, %v2846
    %v3039 = vadd.f32 %v2655, %v2847
    %v3040 = vadd.f32 %v2656, %v2848
    %v3041 = vadd.f32 %v2657, %v2849
    %v3042 = vadd.f32 %v2658, %v2850
    %v3043 = vadd.f32 %v2659, %v2851
    %v3044 = vadd.f32 %v2660, %v2852
    %v3045 = vadd.f32 %v2661, %v2853
    %v3046 = vadd.f32 %v2662, %v2854
    %v3047 = vadd.f32 %v2663, %v2855
    %v3048 = vadd.f32 %v2664, %v2856
    %v3049 = vadd.f32 %v2665, %v2857
    %v3050 = vadd.f32 %v2666, %v2858
    %v3051 = vadd.f32 %v2667, %v2859
    %v3052 = vadd.f32 %v2668, %v2860
    %v3053 = vadd.f32 %v2669, %v2861
    %v3054 = vadd.f32 %v2670, %v2862
    %v3055 = vadd.f32 %v2671, %v2863
    %v3056 = vadd.f32 %v2672, %v2864
    %v3057 = vadd.f32 %v2673, %v2865
    %v3058 = vadd.f32 %v2674, %v2866
    %v3059 = vadd.f32 %v2675, %v2867
    %v3060 = vadd.f32 %v2676, %v2868
    %v3061 = vadd.f32 %v2677, %v2869
    %v3062 = vadd.f32 %v2678, %v2870
    %v3063 = vadd.f32 %v2679, %v2871
    %v3064 = vadd.f32 %v2680, %v2872
    %v3065 = vadd.f32 %v2681, %v2873
    %v3066 = vadd.f32 %v2682, %v2874
    %v3067 = vadd.f32 %v2683, %v2875
    %v3068 = vadd.f32 %v2684, %v2876
    %v3069 = vadd.f32 %v2685, %v2877
    %v3070 = vadd.f32 %v2686, %v2878
    %v3071 = vadd.f32 %v2687, %v2879
    %v3072 = vadd.f32 %v2688, %v2880
    %v3073 = vadd.f32 %v2689, %v2881
    %v3074 = vadd.f32 %v2690, %v2882
    %v3075 = vadd.f32 %v2691, %v2883
    %v3076 = vadd.f32 %v2692, %v2884
    %v3077 = vadd.f32 %v2693, %v2885
    %v3078 = vadd.f32 %v2694, %v2886
    %v3079 = vadd.f32 %v2695, %v2887
    %v3080 = vadd.f32 %v2696, %v2888
    %v3081 = vadd.f32 %v2697, %v2889
    %v3082 = vadd.f32 %v2698, %v2890
    %v3083 = vadd.f32 %v2699, %v2891
    %v3084 = vadd.f32 %v2700, %v2892
    %v3085 = vadd.f32 %v2701, %v2893
    %v3086 = vadd.f32 %v2702, %v2894
    %v3087 = vadd.f32 %v2703, %v2895
    %v3088 = vadd.f32 %v2704, %v2896
    %v3089 = vadd.f32 %v2705, %v2897
    %v3090 = vadd.f32 %v2706, %v2898
    %v3091 = vadd.f32 %v2707, %v2899
    %v3092 = vadd.f32 %v2708, %v2900
    %v3093 = vadd.f32 %v2709, %v2901
    %v3094 = vadd.f32 %v2710, %v2902
    %v3095 = vadd.f32 %v2711, %v2903
    %v3096 = vadd.f32 %v2712, %v2904
    %v3097 = vadd.f32 %v2713, %v2905
    %v3098 = vadd.f32 %v2714, %v2906
    %v3099 = vadd.f32 %v2715, %v2907
    %v3100 = vadd.f32 %v2716, %v2908
    %v3101 = vld [vmem:[%s12] sm:$0xf]
    %v3102 = vmul.f32 %v3101, 0.999
    %v3103 = vmul.f32 %v1485, 0.001
    %v3104 = vadd.f32 %v3102, %v3103
    %v3105 = vld [vmem:[%s13] sm:$0xff]
    %v3106 = vld [vmem:[%s13 + $0x8] sm:$0xff]
    %v3107 = vld [vmem:[%s13 + $0x10] sm:$0xff]
    %v3108 = vld [vmem:[%s13 + $0x18] sm:$0xff]
    %v3109 = vld [vmem:[%s13 + $0x20] sm:$0xff]
    %v3110 = vld [vmem:[%s13 + $0x28] sm:$0xff]
    %v3111 = vld [vmem:[%s13 + $0x30] sm:$0xff]
    %v3112 = vld [vmem:[%s13 + $0x38] sm:$0xff]
    %v3113 = vld [vmem:[%s13 + $0x40] sm:$0xff]
    %v3114 = vld [vmem:[%s13 + $0x48] sm:$0xff]
    %v3115 = vld [vmem:[%s13 + $0x50] sm:$0xff]
    %v3116 = vld [vmem:[%s13 + $0x58] sm:$0xff]
    %v3117 = vld [vmem:[%s13 + $0x60] sm:$0xff]
    %v3118 = vld [vmem:[%s13 + $0x68] sm:$0xff]
    %v3119 = vld [vmem:[%s13 + $0x70] sm:$0xff]
    %v3120 = vld [vmem:[%s13 + $0x78] sm:$0xff]
    %v3121 = vld [vmem:[%s13 + $0x80] sm:$0xff]
    %v3122 = vld [vmem:[%s13 + $0x88] sm:$0xff]
    %v3123 = vld [vmem:[%s13 + $0x90] sm:$0xff]
    %v3124 = vld [vmem:[%s13 + $0x98] sm:$0xff]
    %v3125 = vld [vmem:[%s13 + $0xa0] sm:$0xff]
    %v3126 = vld [vmem:[%s13 + $0xa8] sm:$0xff]
    %v3127 = vld [vmem:[%s13 + $0xb0] sm:$0xff]
    %v3128 = vld [vmem:[%s13 + $0xb8] sm:$0xff]
    %v3129 = vld [vmem:[%s13 + $0xc0] sm:$0xff]
    %v3130 = vld [vmem:[%s13 + $0xc8] sm:$0xff]
    %v3131 = vld [vmem:[%s13 + $0xd0] sm:$0xff]
    %v3132 = vld [vmem:[%s13 + $0xd8] sm:$0xff]
    %v3133 = vld [vmem:[%s13 + $0xe0] sm:$0xff]
    %v3134 = vld [vmem:[%s13 + $0xe8] sm:$0xff]
    %v3135 = vld [vmem:[%s13 + $0xf0] sm:$0xff]
    %v3136 = vld [vmem:[%s13 + $0xf8] sm:$0xff]
    %v3137 = vld [vmem:[%s13 + $0x100] sm:$0xff]
    %v3138 = vld [vmem:[%s13 + $0x108] sm:$0xff]
    %v3139 = vld [vmem:[%s13 + $0x110] sm:$0xff]
    %v3140 = vld [vmem:[%s13 + $0x118] sm:$0xff]
    %v3141 = vld [vmem:[%s13 + $0x120] sm:$0xff]
    %v3142 = vld [vmem:[%s13 + $0x128] sm:$0xff]
    %v3143 = vld [vmem:[%s13 + $0x130] sm:$0xff]
    %v3144 = vld [vmem:[%s13 + $0x138] sm:$0xff]
    %v3145 = vld [vmem:[%s13 + $0x140] sm:$0xff]
    %v3146 = vld [vmem:[%s13 + $0x148] sm:$0xff]
    %v3147 = vld [vmem:[%s13 + $0x150] sm:$0xff]
    %v3148 = vld [vmem:[%s13 + $0x158] sm:$0xff]
    %v3149 = vld [vmem:[%s13 + $0x160] sm:$0xff]
    %v3150 = vld [vmem:[%s13 + $0x168] sm:$0xff]
    %v3151 = vld [vmem:[%s13 + $0x170] sm:$0xff]
    %v3152 = vld [vmem:[%s13 + $0x178] sm:$0xff]
    %v3153 = vld [vmem:[%s13 + $0x180] sm:$0xff]
    %v3154 = vld [vmem:[%s13 + $0x188] sm:$0xff]
    %v3155 = vld [vmem:[%s13 + $0x190] sm:$0xff]
    %v3156 = vld [vmem:[%s13 + $0x198] sm:$0xff]
    %v3157 = vld [vmem:[%s13 + $0x1a0] sm:$0xff]
    %v3158 = vld [vmem:[%s13 + $0x1a8] sm:$0xff]
    %v3159 = vld [vmem:[%s13 + $0x1b0] sm:$0xff]
    %v3160 = vld [vmem:[%s13 + $0x1b8] sm:$0xff]
    %v3161 = vld [vmem:[%s13 + $0x1c0] sm:$0xff]
    %v3162 = vld [vmem:[%s13 + $0x1c8] sm:$0xff]
    %v3163 = vld [vmem:[%s13 + $0x1d0] sm:$0xff]
    %v3164 = vld [vmem:[%s13 + $0x1d8] sm:$0xff]
    %v3165 = vld [vmem:[%s13 + $0x1e0] sm:$0xff]
    %v3166 = vld [vmem:[%s13 + $0x1e8] sm:$0xff]
    %v3167 = vld [vmem:[%s13 + $0x1f0] sm:$0xff]
    %v3168 = vld [vmem:[%s13 + $0x1f8] sm:$0xff]
    %v3169 = vld [vmem:[%s13 + $0x200] sm:$0xff]
    %v3170 = vld [vmem:[%s13 + $0x208] sm:$0xff]
    %v3171 = vld [vmem:[%s13 + $0x210] sm:$0xff]
    %v3172 = vld [vmem:[%s13 + $0x218] sm:$0xff]
    %v3173 = vld [vmem:[%s13 + $0x220] sm:$0xff]
    %v3174 = vld [vmem:[%s13 + $0x228] sm:$0xff]
    %v3175 = vld [vmem:[%s13 + $0x230] sm:$0xff]
    %v3176 = vld [vmem:[%s13 + $0x238] sm:$0xff]
    %v3177 = vld [vmem:[%s13 + $0x240] sm:$0xff]
    %v3178 = vld [vmem:[%s13 + $0x248] sm:$0xff]
    %v3179 = vld [vmem:[%s13 + $0x250] sm:$0xff]
    %v3180 = vld [vmem:[%s13 + $0x258] sm:$0xff]
    %v3181 = vld [vmem:[%s13 + $0x260] sm:$0xff]
    %v3182 = vld [vmem:[%s13 + $0x268] sm:$0xff]
    %v3183 = vld [vmem:[%s13 + $0x270] sm:$0xff]
    %v3184 = vld [vmem:[%s13 + $0x278] sm:$0xff]
    %v3185 = vld [vmem:[%s13 + $0x280] sm:$0xff]
    %v3186 = vld [vmem:[%s13 + $0x288] sm:$0xff]
    %v3187 = vld [vmem:[%s13 + $0x290] sm:$0xff]
    %v3188 = vld [vmem:[%s13 + $0x298] sm:$0xff]
    %v3189 = vld [vmem:[%s13 + $0x2a0] sm:$0xff]
    %v3190 = vld [vmem:[%s13 + $0x2a8] sm:$0xff]
    %v3191 = vld [vmem:[%s13 + $0x2b0] sm:$0xff]
    %v3192 = vld [vmem:[%s13 + $0x2b8] sm:$0xff]
    %v3193 = vld [vmem:[%s13 + $0x2c0] sm:$0xff]
    %v3194 = vld [vmem:[%s13 + $0x2c8] sm:$0xff]
    %v3195 = vld [vmem:[%s13 + $0x2d0] sm:$0xff]
    %v3196 = vld [vmem:[%s13 + $0x2d8] sm:$0xff]
    %v3197 = vld [vmem:[%s13 + $0x2e0] sm:$0xff]
    %v3198 = vld [vmem:[%s13 + $0x2e8] sm:$0xff]
    %v3199 = vld [vmem:[%s13 + $0x2f0] sm:$0xff]
    %v3200 = vld [vmem:[%s13 + $0x2f8] sm:$0xff]
    %v3201 = vld [vmem:[%s13 + $0x300] sm:$0xff]
    %v3202 = vld [vmem:[%s13 + $0x308] sm:$0xff]
    %v3203 = vld [vmem:[%s13 + $0x310] sm:$0xff]
    %v3204 = vld [vmem:[%s13 + $0x318] sm:$0xff]
    %v3205 = vld [vmem:[%s13 + $0x320] sm:$0xff]
    %v3206 = vld [vmem:[%s13 + $0x328] sm:$0xff]
    %v3207 = vld [vmem:[%s13 + $0x330] sm:$0xff]
    %v3208 = vld [vmem:[%s13 + $0x338] sm:$0xff]
    %v3209 = vld [vmem:[%s13 + $0x340] sm:$0xff]
    %v3210 = vld [vmem:[%s13 + $0x348] sm:$0xff]
    %v3211 = vld [vmem:[%s13 + $0x350] sm:$0xff]
    %v3212 = vld [vmem:[%s13 + $0x358] sm:$0xff]
    %v3213 = vld [vmem:[%s13 + $0x360] sm:$0xff]
    %v3214 = vld [vmem:[%s13 + $0x368] sm:$0xff]
    %v3215 = vld [vmem:[%s13 + $0x370] sm:$0xff]
    %v3216 = vld [vmem:[%s13 + $0x378] sm:$0xff]
    %v3217 = vld [vmem:[%s13 + $0x380] sm:$0xff]
    %v3218 = vld [vmem:[%s13 + $0x388] sm:$0xff]
    %v3219 = vld [vmem:[%s13 + $0x390] sm:$0xff]
    %v3220 = vld [vmem:[%s13 + $0x398] sm:$0xff]
    %v3221 = vld [vmem:[%s13 + $0x3a0] sm:$0xff]
    %v3222 = vld [vmem:[%s13 + $0x3a8] sm:$0xff]
    %v3223 = vld [vmem:[%s13 + $0x3b0] sm:$0xff]
    %v3224 = vld [vmem:[%s13 + $0x3b8] sm:$0xff]
    %v3225 = vld [vmem:[%s13 + $0x3c0] sm:$0xff]
    %v3226 = vld [vmem:[%s13 + $0x3c8] sm:$0xff]
    %v3227 = vld [vmem:[%s13 + $0x3d0] sm:$0xff]
    %v3228 = vld [vmem:[%s13 + $0x3d8] sm:$0xff]
    %v3229 = vld [vmem:[%s13 + $0x3e0] sm:$0xff]
    %v3230 = vld [vmem:[%s13 + $0x3e8] sm:$0xff]
    %v3231 = vld [vmem:[%s13 + $0x3f0] sm:$0xff]
    %v3232 = vld [vmem:[%s13 + $0x3f8] sm:$0xff]
    %v3233 = vld [vmem:[%s13 + $0x400] sm:$0xff]
    %v3234 = vld [vmem:[%s13 + $0x408] sm:$0xff]
    %v3235 = vld [vmem:[%s13 + $0x410] sm:$0xff]
    %v3236 = vld [vmem:[%s13 + $0x418] sm:$0xff]
    %v3237 = vld [vmem:[%s13 + $0x420] sm:$0xff]
    %v3238 = vld [vmem:[%s13 + $0x428] sm:$0xff]
    %v3239 = vld [vmem:[%s13 + $0x430] sm:$0xff]
    %v3240 = vld [vmem:[%s13 + $0x438] sm:$0xff]
    %v3241 = vld [vmem:[%s13 + $0x440] sm:$0xff]
    %v3242 = vld [vmem:[%s13 + $0x448] sm:$0xff]
    %v3243 = vld [vmem:[%s13 + $0x450] sm:$0xff]
    %v3244 = vld [vmem:[%s13 + $0x458] sm:$0xff]
    %v3245 = vld [vmem:[%s13 + $0x460] sm:$0xff]
    %v3246 = vld [vmem:[%s13 + $0x468] sm:$0xff]
    %v3247 = vld [vmem:[%s13 + $0x470] sm:$0xff]
    %v3248 = vld [vmem:[%s13 + $0x478] sm:$0xff]
    %v3249 = vld [vmem:[%s13 + $0x480] sm:$0xff]
    %v3250 = vld [vmem:[%s13 + $0x488] sm:$0xff]
    %v3251 = vld [vmem:[%s13 + $0x490] sm:$0xff]
    %v3252 = vld [vmem:[%s13 + $0x498] sm:$0xff]
    %v3253 = vld [vmem:[%s13 + $0x4a0] sm:$0xff]
    %v3254 = vld [vmem:[%s13 + $0x4a8] sm:$0xff]
    %v3255 = vld [vmem:[%s13 + $0x4b0] sm:$0xff]
    %v3256 = vld [vmem:[%s13 + $0x4b8] sm:$0xff]
    %v3257 = vld [vmem:[%s13 + $0x4c0] sm:$0xff]
    %v3258 = vld [vmem:[%s13 + $0x4c8] sm:$0xff]
    %v3259 = vld [vmem:[%s13 + $0x4d0] sm:$0xff]
    %v3260 = vld [vmem:[%s13 + $0x4d8] sm:$0xff]
    %v3261 = vld [vmem:[%s13 + $0x4e0] sm:$0xff]
    %v3262 = vld [vmem:[%s13 + $0x4e8] sm:$0xff]
    %v3263 = vld [vmem:[%s13 + $0x4f0] sm:$0xff]
    %v3264 = vld [vmem:[%s13 + $0x4f8] sm:$0xff]
    %v3265 = vld [vmem:[%s13 + $0x500] sm:$0xff]
    %v3266 = vld [vmem:[%s13 + $0x508] sm:$0xff]
    %v3267 = vld [vmem:[%s13 + $0x510] sm:$0xff]
    %v3268 = vld [vmem:[%s13 + $0x518] sm:$0xff]
    %v3269 = vld [vmem:[%s13 + $0x520] sm:$0xff]
    %v3270 = vld [vmem:[%s13 + $0x528] sm:$0xff]
    %v3271 = vld [vmem:[%s13 + $0x530] sm:$0xff]
    %v3272 = vld [vmem:[%s13 + $0x538] sm:$0xff]
    %v3273 = vld [vmem:[%s13 + $0x540] sm:$0xff]
    %v3274 = vld [vmem:[%s13 + $0x548] sm:$0xff]
    %v3275 = vld [vmem:[%s13 + $0x550] sm:$0xff]
    %v3276 = vld [vmem:[%s13 + $0x558] sm:$0xff]
    %v3277 = vld [vmem:[%s13 + $0x560] sm:$0xff]
    %v3278 = vld [vmem:[%s13 + $0x568] sm:$0xff]
    %v3279 = vld [vmem:[%s13 + $0x570] sm:$0xff]
    %v3280 = vld [vmem:[%s13 + $0x578] sm:$0xff]
    %v3281 = vld [vmem:[%s13 + $0x580] sm:$0xff]
    %v3282 = vld [vmem:[%s13 + $0x588] sm:$0xff]
    %v3283 = vld [vmem:[%s13 + $0x590] sm:$0xff]
    %v3284 = vld [vmem:[%s13 + $0x598] sm:$0xff]
    %v3285 = vld [vmem:[%s13 + $0x5a0] sm:$0xff]
    %v3286 = vld [vmem:[%s13 + $0x5a8] sm:$0xff]
    %v3287 = vld [vmem:[%s13 + $0x5b0] sm:$0xff]
    %v3288 = vld [vmem:[%s13 + $0x5b8] sm:$0xff]
    %v3289 = vld [vmem:[%s13 + $0x5c0] sm:$0xff]
    %v3290 = vld [vmem:[%s13 + $0x5c8] sm:$0xff]
    %v3291 = vld [vmem:[%s13 + $0x5d0] sm:$0xff]
    %v3292 = vld [vmem:[%s13 + $0x5d8] sm:$0xff]
    %v3293 = vld [vmem:[%s13 + $0x5e0] sm:$0xff]
    %v3294 = vld [vmem:[%s13 + $0x5e8] sm:$0xff]
    %v3295 = vld [vmem:[%s13 + $0x5f0] sm:$0xff]
    %v3296 = vld [vmem:[%s13 + $0x5f8] sm:$0xff]
    %v3297 = vld [vmem:[%s13 + $0x600] sm:$0xff]
    %v3298 = vld [vmem:[%s13 + $0x608] sm:$0xff]
    %v3299 = vld [vmem:[%s13 + $0x610] sm:$0xff]
    %v3300 = vld [vmem:[%s13 + $0x618] sm:$0xff]
    %v3301 = vld [vmem:[%s13 + $0x620] sm:$0xff]
    %v3302 = vld [vmem:[%s13 + $0x628] sm:$0xff]
    %v3303 = vld [vmem:[%s13 + $0x630] sm:$0xff]
    %v3304 = vld [vmem:[%s13 + $0x638] sm:$0xff]
    %v3305 = vld [vmem:[%s13 + $0x640] sm:$0xff]
    %v3306 = vld [vmem:[%s13 + $0x648] sm:$0xff]
    %v3307 = vld [vmem:[%s13 + $0x650] sm:$0xff]
    %v3308 = vld [vmem:[%s13 + $0x658] sm:$0xff]
    %v3309 = vld [vmem:[%s13 + $0x660] sm:$0xff]
    %v3310 = vld [vmem:[%s13 + $0x668] sm:$0xff]
    %v3311 = vld [vmem:[%s13 + $0x670] sm:$0xff]
    %v3312 = vld [vmem:[%s13 + $0x678] sm:$0xff]
    %v3313 = vld [vmem:[%s13 + $0x680] sm:$0xff]
    %v3314 = vld [vmem:[%s13 + $0x688] sm:$0xff]
    %v3315 = vld [vmem:[%s13 + $0x690] sm:$0xff]
    %v3316 = vld [vmem:[%s13 + $0x698] sm:$0xff]
    %v3317 = vld [vmem:[%s13 + $0x6a0] sm:$0xff]
    %v3318 = vld [vmem:[%s13 + $0x6a8] sm:$0xff]
    %v3319 = vld [vmem:[%s13 + $0x6b0] sm:$0xff]
    %v3320 = vld [vmem:[%s13 + $0x6b8] sm:$0xff]
    %v3321 = vld [vmem:[%s13 + $0x6c0] sm:$0xff]
    %v3322 = vld [vmem:[%s13 + $0x6c8] sm:$0xff]
    %v3323 = vld [vmem:[%s13 + $0x6d0] sm:$0xff]
    %v3324 = vld [vmem:[%s13 + $0x6d8] sm:$0xff]
    %v3325 = vld [vmem:[%s13 + $0x6e0] sm:$0xff]
    %v3326 = vld [vmem:[%s13 + $0x6e8] sm:$0xff]
    %v3327 = vld [vmem:[%s13 + $0x6f0] sm:$0xff]
    %v3328 = vld [vmem:[%s13 + $0x6f8] sm:$0xff]
    %v3329 = vld [vmem:[%s13 + $0x700] sm:$0xff]
    %v3330 = vld [vmem:[%s13 + $0x708] sm:$0xff]
    %v3331 = vld [vmem:[%s13 + $0x710] sm:$0xff]
    %v3332 = vld [vmem:[%s13 + $0x718] sm:$0xff]
    %v3333 = vld [vmem:[%s13 + $0x720] sm:$0xff]
    %v3334 = vld [vmem:[%s13 + $0x728] sm:$0xff]
    %v3335 = vld [vmem:[%s13 + $0x730] sm:$0xff]
    %v3336 = vld [vmem:[%s13 + $0x738] sm:$0xff]
    %v3337 = vld [vmem:[%s13 + $0x740] sm:$0xff]
    %v3338 = vld [vmem:[%s13 + $0x748] sm:$0xff]
    %v3339 = vld [vmem:[%s13 + $0x750] sm:$0xff]
    %v3340 = vld [vmem:[%s13 + $0x758] sm:$0xff]
    %v3341 = vld [vmem:[%s13 + $0x760] sm:$0xff]
    %v3342 = vld [vmem:[%s13 + $0x768] sm:$0xff]
    %v3343 = vld [vmem:[%s13 + $0x770] sm:$0xff]
    %v3344 = vld [vmem:[%s13 + $0x778] sm:$0xff]
    %v3345 = vld [vmem:[%s13 + $0x780] sm:$0xff]
    %v3346 = vld [vmem:[%s13 + $0x788] sm:$0xff]
    %v3347 = vld [vmem:[%s13 + $0x790] sm:$0xff]
    %v3348 = vld [vmem:[%s13 + $0x798] sm:$0xff]
    %v3349 = vld [vmem:[%s13 + $0x7a0] sm:$0xff]
    %v3350 = vld [vmem:[%s13 + $0x7a8] sm:$0xff]
    %v3351 = vld [vmem:[%s13 + $0x7b0] sm:$0xff]
    %v3352 = vld [vmem:[%s13 + $0x7b8] sm:$0xff]
    %v3353 = vld [vmem:[%s13 + $0x7c0] sm:$0xff]
    %v3354 = vld [vmem:[%s13 + $0x7c8] sm:$0xff]
    %v3355 = vld [vmem:[%s13 + $0x7d0] sm:$0xff]
    %v3356 = vld [vmem:[%s13 + $0x7d8] sm:$0xff]
    %v3357 = vld [vmem:[%s13 + $0x7e0] sm:$0xff]
    %v3358 = vld [vmem:[%s13 + $0x7e8] sm:$0xff]
    %v3359 = vld [vmem:[%s13 + $0x7f0] sm:$0xff]
    %v3360 = vld [vmem:[%s13 + $0x7f8] sm:$0xff]
    %v3361 = vmul.f32 %v3105, 0.999
    %v3362 = vmul.f32 %v3106, 0.999
    %v3363 = vmul.f32 %v3107, 0.999
    %v3364 = vmul.f32 %v3108, 0.999
    %v3365 = vmul.f32 %v3109, 0.999
    %v3366 = vmul.f32 %v3110, 0.999
    %v3367 = vmul.f32 %v3111, 0.999
    %v3368 = vmul.f32 %v3112, 0.999
    %v3369 = vmul.f32 %v3113, 0.999
    %v3370 = vmul.f32 %v3114, 0.999
    %v3371 = vmul.f32 %v3115, 0.999
    %v3372 = vmul.f32 %v3116, 0.999
    %v3373 = vmul.f32 %v3117, 0.999
    %v3374 = vmul.f32 %v3118, 0.999
    %v3375 = vmul.f32 %v3119, 0.999
    %v3376 = vmul.f32 %v3120, 0.999
    %v3377 = vmul.f32 %v3121, 0.999
    %v3378 = vmul.f32 %v3122, 0.999
    %v3379 = vmul.f32 %v3123, 0.999
    %v3380 = vmul.f32 %v3124, 0.999
    %v3381 = vmul.f32 %v3125, 0.999
    %v3382 = vmul.f32 %v3126, 0.999
    %v3383 = vmul.f32 %v3127, 0.999
    %v3384 = vmul.f32 %v3128, 0.999
    %v3385 = vmul.f32 %v3129, 0.999
    %v3386 = vmul.f32 %v3130, 0.999
    %v3387 = vmul.f32 %v3131, 0.999
    %v3388 = vmul.f32 %v3132, 0.999
    %v3389 = vmul.f32 %v3133, 0.999
    %v3390 = vmul.f32 %v3134, 0.999
    %v3391 = vmul.f32 %v3135, 0.999
    %v3392 = vmul.f32 %v3136, 0.999
    %v3393 = vmul.f32 %v3137, 0.999
    %v3394 = vmul.f32 %v3138, 0.999
    %v3395 = vmul.f32 %v3139, 0.999
    %v3396 = vmul.f32 %v3140, 0.999
    %v3397 = vmul.f32 %v3141, 0.999
    %v3398 = vmul.f32 %v3142, 0.999
    %v3399 = vmul.f32 %v3143, 0.999
    %v3400 = vmul.f32 %v3144, 0.999
    %v3401 = vmul.f32 %v3145, 0.999
    %v3402 = vmul.f32 %v3146, 0.999
    %v3403 = vmul.f32 %v3147, 0.999
    %v3404 = vmul.f32 %v3148, 0.999
    %v3405 = vmul.f32 %v3149, 0.999
    %v3406 = vmul.f32 %v3150, 0.999
    %v3407 = vmul.f32 %v3151, 0.999
    %v3408 = vmul.f32 %v3152, 0.999
    %v3409 = vmul.f32 %v3153, 0.999
    %v3410 = vmul.f32 %v3154, 0.999
    %v3411 = vmul.f32 %v3155, 0.999
    %v3412 = vmul.f32 %v3156, 0.999
    %v3413 = vmul.f32 %v3157, 0.999
    %v3414 = vmul.f32 %v3158, 0.999
    %v3415 = vmul.f32 %v3159, 0.999
    %v3416 = vmul.f32 %v3160, 0.999
    %v3417 = vmul.f32 %v3161, 0.999
    %v3418 = vmul.f32 %v3162, 0.999
    %v3419 = vmul.f32 %v3163, 0.999
    %v3420 = vmul.f32 %v3164, 0.999
    %v3421 = vmul.f32 %v3165, 0.999
    %v3422 = vmul.f32 %v3166, 0.999
    %v3423 = vmul.f32 %v3167, 0.999
    %v3424 = vmul.f32 %v3168, 0.999
    %v3425 = vmul.f32 %v3169, 0.999
    %v3426 = vmul.f32 %v3170, 0.999
    %v3427 = vmul.f32 %v3171, 0.999
    %v3428 = vmul.f32 %v3172, 0.999
    %v3429 = vmul.f32 %v3173, 0.999
    %v3430 = vmul.f32 %v3174, 0.999
    %v3431 = vmul.f32 %v3175, 0.999
    %v3432 = vmul.f32 %v3176, 0.999
    %v3433 = vmul.f32 %v3177, 0.999
    %v3434 = vmul.f32 %v3178, 0.999
    %v3435 = vmul.f32 %v3179, 0.999
    %v3436 = vmul.f32 %v3180, 0.999
    %v3437 = vmul.f32 %v3181, 0.999
    %v3438 = vmul.f32 %v3182, 0.999
    %v3439 = vmul.f32 %v3183, 0.999
    %v3440 = vmul.f32 %v3184, 0.999
    %v3441 = vmul.f32 %v3185, 0.999
    %v3442 = vmul.f32 %v3186, 0.999
    %v3443 = vmul.f32 %v3187, 0.999
    %v3444 = vmul.f32 %v3188, 0.999
    %v3445 = vmul.f32 %v3189, 0.999
    %v3446 = vmul.f32 %v3190, 0.999
    %v3447 = vmul.f32 %v3191, 0.999
    %v3448 = vmul.f32 %v3192, 0.999
    %v3449 = vmul.f32 %v3193, 0.999
    %v3450 = vmul.f32 %v3194, 0.999
    %v3451 = vmul.f32 %v3195, 0.999
    %v3452 = vmul.f32 %v3196, 0.999
    %v3453 = vmul.f32 %v3197, 0.999
    %v3454 = vmul.f32 %v3198, 0.999
    %v3455 = vmul.f32 %v3199, 0.999
    %v3456 = vmul.f32 %v3200, 0.999
    %v3457 = vmul.f32 %v3201, 0.999
    %v3458 = vmul.f32 %v3202, 0.999
    %v3459 = vmul.f32 %v3203, 0.999
    %v3460 = vmul.f32 %v3204, 0.999
    %v3461 = vmul.f32 %v3205, 0.999
    %v3462 = vmul.f32 %v3206, 0.999
    %v3463 = vmul.f32 %v3207, 0.999
    %v3464 = vmul.f32 %v3208, 0.999
    %v3465 = vmul.f32 %v3209, 0.999
    %v3466 = vmul.f32 %v3210, 0.999
    %v3467 = vmul.f32 %v3211, 0.999
    %v3468 = vmul.f32 %v3212, 0.999
    %v3469 = vmul.f32 %v3213, 0.999
    %v3470 = vmul.f32 %v3214, 0.999
    %v3471 = vmul.f32 %v3215, 0.999
    %v3472 = vmul.f32 %v3216, 0.999
    %v3473 = vmul.f32 %v3217, 0.999
    %v3474 = vmul.f32 %v3218, 0.999
    %v3475 = vmul.f32 %v3219, 0.999
    %v3476 = vmul.f32 %v3220, 0.999
    %v3477 = vmul.f32 %v3221, 0.999
    %v3478 = vmul.f32 %v3222, 0.999
    %v3479 = vmul.f32 %v3223, 0.999
    %v3480 = vmul.f32 %v3224, 0.999
    %v3481 = vmul.f32 %v3225, 0.999
    %v3482 = vmul.f32 %v3226, 0.999
    %v3483 = vmul.f32 %v3227, 0.999
    %v3484 = vmul.f32 %v3228, 0.999
    %v3485 = vmul.f32 %v3229, 0.999
    %v3486 = vmul.f32 %v3230, 0.999
    %v3487 = vmul.f32 %v3231, 0.999
    %v3488 = vmul.f32 %v3232, 0.999
    %v3489 = vmul.f32 %v3233, 0.999
    %v3490 = vmul.f32 %v3234, 0.999
    %v3491 = vmul.f32 %v3235, 0.999
    %v3492 = vmul.f32 %v3236, 0.999
    %v3493 = vmul.f32 %v3237, 0.999
    %v3494 = vmul.f32 %v3238, 0.999
    %v3495 = vmul.f32 %v3239, 0.999
    %v3496 = vmul.f32 %v3240, 0.999
    %v3497 = vmul.f32 %v3241, 0.999
    %v3498 = vmul.f32 %v3242, 0.999
    %v3499 = vmul.f32 %v3243, 0.999
    %v3500 = vmul.f32 %v3244, 0.999
    %v3501 = vmul.f32 %v3245, 0.999
    %v3502 = vmul.f32 %v3246, 0.999
    %v3503 = vmul.f32 %v3247, 0.999
    %v3504 = vmul.f32 %v3248, 0.999
    %v3505 = vmul.f32 %v3249, 0.999
    %v3506 = vmul.f32 %v3250, 0.999
    %v3507 = vmul.f32 %v3251, 0.999
    %v3508 = vmul.f32 %v3252, 0.999
    %v3509 = vmul.f32 %v3253, 0.999
    %v3510 = vmul.f32 %v3254, 0.999
    %v3511 = vmul.f32 %v3255, 0.999
    %v3512 = vmul.f32 %v3256, 0.999
    %v3513 = vmul.f32 %v3257, 0.999
    %v3514 = vmul.f32 %v3258, 0.999
    %v3515 = vmul.f32 %v3259, 0.999
    %v3516 = vmul.f32 %v3260, 0.999
    %v3517 = vmul.f32 %v3261, 0.999
    %v3518 = vmul.f32 %v3262, 0.999
    %v3519 = vmul.f32 %v3263, 0.999
    %v3520 = vmul.f32 %v3264, 0.999
    %v3521 = vmul.f32 %v3265, 0.999
    %v3522 = vmul.f32 %v3266, 0.999
    %v3523 = vmul.f32 %v3267, 0.999
    %v3524 = vmul.f32 %v3268, 0.999
    %v3525 = vmul.f32 %v3269, 0.999
    %v3526 = vmul.f32 %v3270, 0.999
    %v3527 = vmul.f32 %v3271, 0.999
    %v3528 = vmul.f32 %v3272, 0.999
    %v3529 = vmul.f32 %v3273, 0.999
    %v3530 = vmul.f32 %v3274, 0.999
    %v3531 = vmul.f32 %v3275, 0.999
    %v3532 = vmul.f32 %v3276, 0.999
    %v3533 = vmul.f32 %v3277, 0.999
    %v3534 = vmul.f32 %v3278, 0.999
    %v3535 = vmul.f32 %v3279, 0.999
    %v3536 = vmul.f32 %v3280, 0.999
    %v3537 = vmul.f32 %v3281, 0.999
    %v3538 = vmul.f32 %v3282, 0.999
    %v3539 = vmul.f32 %v3283, 0.999
    %v3540 = vmul.f32 %v3284, 0.999
    %v3541 = vmul.f32 %v3285, 0.999
    %v3542 = vmul.f32 %v3286, 0.999
    %v3543 = vmul.f32 %v3287, 0.999
    %v3544 = vmul.f32 %v3288, 0.999
    %v3545 = vmul.f32 %v3289, 0.999
    %v3546 = vmul.f32 %v3290, 0.999
    %v3547 = vmul.f32 %v3291, 0.999
    %v3548 = vmul.f32 %v3292, 0.999
    %v3549 = vmul.f32 %v3293, 0.999
    %v3550 = vmul.f32 %v3294, 0.999
    %v3551 = vmul.f32 %v3295, 0.999
    %v3552 = vmul.f32 %v3296, 0.999
    %v3553 = vmul.f32 %v3297, 0.999
    %v3554 = vmul.f32 %v3298, 0.999
    %v3555 = vmul.f32 %v3299, 0.999
    %v3556 = vmul.f32 %v3300, 0.999
    %v3557 = vmul.f32 %v3301, 0.999
    %v3558 = vmul.f32 %v3302, 0.999
    %v3559 = vmul.f32 %v3303, 0.999
    %v3560 = vmul.f32 %v3304, 0.999
    %v3561 = vmul.f32 %v3305, 0.999
    %v3562 = vmul.f32 %v3306, 0.999
    %v3563 = vmul.f32 %v3307, 0.999
    %v3564 = vmul.f32 %v3308, 0.999
    %v3565 = vmul.f32 %v3309, 0.999
    %v3566 = vmul.f32 %v3310, 0.999
    %v3567 = vmul.f32 %v3311, 0.999
    %v3568 = vmul.f32 %v3312, 0.999
    %v3569 = vmul.f32 %v3313, 0.999
    %v3570 = vmul.f32 %v3314, 0.999
    %v3571 = vmul.f32 %v3315, 0.999
    %v3572 = vmul.f32 %v3316, 0.999
    %v3573 = vmul.f32 %v3317, 0.999
    %v3574 = vmul.f32 %v3318, 0.999
    %v3575 = vmul.f32 %v3319, 0.999
    %v3576 = vmul.f32 %v3320, 0.999
    %v3577 = vmul.f32 %v3321, 0.999
    %v3578 = vmul.f32 %v3322, 0.999
    %v3579 = vmul.f32 %v3323, 0.999
    %v3580 = vmul.f32 %v3324, 0.999
    %v3581 = vmul.f32 %v3325, 0.999
    %v3582 = vmul.f32 %v3326, 0.999
    %v3583 = vmul.f32 %v3327, 0.999
    %v3584 = vmul.f32 %v3328, 0.999
    %v3585 = vmul.f32 %v3329, 0.999
    %v3586 = vmul.f32 %v3330, 0.999
    %v3587 = vmul.f32 %v3331, 0.999
    %v3588 = vmul.f32 %v3332, 0.999
    %v3589 = vmul.f32 %v3333, 0.999
    %v3590 = vmul.f32 %v3334, 0.999
    %v3591 = vmul.f32 %v3335, 0.999
    %v3592 = vmul.f32 %v3336, 0.999
    %v3593 = vmul.f32 %v3337, 0.999
    %v3594 = vmul.f32 %v3338, 0.999
    %v3595 = vmul.f32 %v3339, 0.999
    %v3596 = vmul.f32 %v3340, 0.999
    %v3597 = vmul.f32 %v3341, 0.999
    %v3598 = vmul.f32 %v3342, 0.999
    %v3599 = vmul.f32 %v3343, 0.999
    %v3600 = vmul.f32 %v3344, 0.999
    %v3601 = vmul.f32 %v3345, 0.999
    %v3602 = vmul.f32 %v3346, 0.999
    %v3603 = vmul.f32 %v3347, 0.999
    %v3604 = vmul.f32 %v3348, 0.999
    %v3605 = vmul.f32 %v3349, 0.999
    %v3606 = vmul.f32 %v3350, 0.999
    %v3607 = vmul.f32 %v3351, 0.999
    %v3608 = vmul.f32 %v3352, 0.999
    %v3609 = vmul.f32 %v3353, 0.999
    %v3610 = vmul.f32 %v3354, 0.999
    %v3611 = vmul.f32 %v3355, 0.999
    %v3612 = vmul.f32 %v3356, 0.999
    %v3613 = vmul.f32 %v3357, 0.999
    %v3614 = vmul.f32 %v3358, 0.999
    %v3615 = vmul.f32 %v3359, 0.999
    %v3616 = vmul.f32 %v3360, 0.999
    %v3617 = vmul.f32 %v1486, 0.001
    %v3618 = vmul.f32 %v1487, 0.001
    %v3619 = vmul.f32 %v1488, 0.001
    %v3620 = vmul.f32 %v1489, 0.001
    %v3621 = vmul.f32 %v1490, 0.001
    %v3622 = vmul.f32 %v1491, 0.001
    %v3623 = vmul.f32 %v1492, 0.001
    %v3624 = vmul.f32 %v1493, 0.001
    %v3625 = vmul.f32 %v1494, 0.001
    %v3626 = vmul.f32 %v1495, 0.001
    %v3627 = vmul.f32 %v1496, 0.001
    %v3628 = vmul.f32 %v1497, 0.001
    %v3629 = vmul.f32 %v1498, 0.001
    %v3630 = vmul.f32 %v1499, 0.001
    %v3631 = vmul.f32 %v1500, 0.001
    %v3632 = vmul.f32 %v1501, 0.001
    %v3633 = vmul.f32 %v1502, 0.001
    %v3634 = vmul.f32 %v1503, 0.001
    %v3635 = vmul.f32 %v1504, 0.001
    %v3636 = vmul.f32 %v1505, 0.001
    %v3637 = vmul.f32 %v1506, 0.001
    %v3638 = vmul.f32 %v1507, 0.001
    %v3639 = vmul.f32 %v1508, 0.001
    %v3640 = vmul.f32 %v1509, 0.001
    %v3641 = vmul.f32 %v1510, 0.001
    %v3642 = vmul.f32 %v1511, 0.001
    %v3643 = vmul.f32 %v1512, 0.001
    %v3644 = vmul.f32 %v1513, 0.001
    %v3645 = vmul.f32 %v1514, 0.001
    %v3646 = vmul.f32 %v1515, 0.001
    %v3647 = vmul.f32 %v1516, 0.001
    %v3648 = vmul.f32 %v1517, 0.001
    %v3649 = vmul.f32 %v1518, 0.001
    %v3650 = vmul.f32 %v1519, 0.001
    %v3651 = vmul.f32 %v1520, 0.001
    %v3652 = vmul.f32 %v1521, 0.001
    %v3653 = vmul.f32 %v1522, 0.001
    %v3654 = vmul.f32 %v1523, 0.001
    %v3655 = vmul.f32 %v1524, 0.001
    %v3656 = vmul.f32 %v1525, 0.001
    %v3657 = vmul.f32 %v1526, 0.001
    %v3658 = vmul.f32 %v1527, 0.001
    %v3659 = vmul.f32 %v1528, 0.001
    %v3660 = vmul.f32 %v1529, 0.001
    %v3661 = vmul.f32 %v1530, 0.001
    %v3662 = vmul.f32 %v1531, 0.001
    %v3663 = vmul.f32 %v1532, 0.001
    %v3664 = vmul.f32 %v1533, 0.001
    %v3665 = vmul.f32 %v1534, 0.001
    %v3666 = vmul.f32 %v1535, 0.001
    %v3667 = vmul.f32 %v1536, 0.001
    %v3668 = vmul.f32 %v1537, 0.001
    %v3669 = vmul.f32 %v1538, 0.001
    %v3670 = vmul.f32 %v1539, 0.001
    %v3671 = vmul.f32 %v1540, 0.001
    %v3672 = vmul.f32 %v1541, 0.001
    %v3673 = vmul.f32 %v1542, 0.001
    %v3674 = vmul.f32 %v1543, 0.001
    %v3675 = vmul.f32 %v1544, 0.001
    %v3676 = vmul.f32 %v1545, 0.001
    %v3677 = vmul.f32 %v1546, 0.001
    %v3678 = vmul.f32 %v1547, 0.001
    %v3679 = vmul.f32 %v1548, 0.001
    %v3680 = vmul.f32 %v1549, 0.001
    %v3681 = vmul.f32 %v1550, 0.001
    %v3682 = vmul.f32 %v1551, 0.001
    %v3683 = vmul.f32 %v1552, 0.001
    %v3684 = vmul.f32 %v1553, 0.001
    %v3685 = vmul.f32 %v1554, 0.001
    %v3686 = vmul.f32 %v1555, 0.001
    %v3687 = vmul.f32 %v1556, 0.001
    %v3688 = vmul.f32 %v1557, 0.001
    %v3689 = vmul.f32 %v1558, 0.001
    %v3690 = vmul.f32 %v1559, 0.001
    %v3691 = vmul.f32 %v1560, 0.001
    %v3692 = vmul.f32 %v1561, 0.001
    %v3693 = vmul.f32 %v1562, 0.001
    %v3694 = vmul.f32 %v1563, 0.001
    %v3695 = vmul.f32 %v1564, 0.001
    %v3696 = vmul.f32 %v1565, 0.001
    %v3697 = vmul.f32 %v1566, 0.001
    %v3698 = vmul.f32 %v1567, 0.001
    %v3699 = vmul.f32 %v1568, 0.001
    %v3700 = vmul.f32 %v1569, 0.001
    %v3701 = vmul.f32 %v1570, 0.001
    %v3702 = vmul.f32 %v1571, 0.001
    %v3703 = vmul.f32 %v1572, 0.001
    %v3704 = vmul.f32 %v1573, 0.001
    %v3705 = vmul.f32 %v1574, 0.001
    %v3706 = vmul.f32 %v1575, 0.001
    %v3707 = vmul.f32 %v1576, 0.001
    %v3708 = vmul.f32 %v1577, 0.001
    %v3709 = vmul.f32 %v1578, 0.001
    %v3710 = vmul.f32 %v1579, 0.001
    %v3711 = vmul.f32 %v1580, 0.001
    %v3712 = vmul.f32 %v1581, 0.001
    %v3713 = vmul.f32 %v1582, 0.001
    %v3714 = vmul.f32 %v1583, 0.001
    %v3715 = vmul.f32 %v1584, 0.001
    %v3716 = vmul.f32 %v1585, 0.001
    %v3717 = vmul.f32 %v1586, 0.001
    %v3718 = vmul.f32 %v1587, 0.001
    %v3719 = vmul.f32 %v1588, 0.001
    %v3720 = vmul.f32 %v1589, 0.001
    %v3721 = vmul.f32 %v1590, 0.001
    %v3722 = vmul.f32 %v1591, 0.001
    %v3723 = vmul.f32 %v1592, 0.001
    %v3724 = vmul.f32 %v1593, 0.001
    %v3725 = vmul.f32 %v1594, 0.001
    %v3726 = vmul.f32 %v1595, 0.001
    %v3727 = vmul.f32 %v1596, 0.001
    %v3728 = vmul.f32 %v1597, 0.001
    %v3729 = vmul.f32 %v1598, 0.001
    %v3730 = vmul.f32 %v1599, 0.001
    %v3731 = vmul.f32 %v1600, 0.001
    %v3732 = vmul.f32 %v1601, 0.001
    %v3733 = vmul.f32 %v1602, 0.001
    %v3734 = vmul.f32 %v1603, 0.001
    %v3735 = vmul.f32 %v1604, 0.001
    %v3736 = vmul.f32 %v1605, 0.001
    %v3737 = vmul.f32 %v1606, 0.001
    %v3738 = vmul.f32 %v1607, 0.001
    %v3739 = vmul.f32 %v1608, 0.001
    %v3740 = vmul.f32 %v1609, 0.001
    %v3741 = vmul.f32 %v1610, 0.001
    %v3742 = vmul.f32 %v1611, 0.001
    %v3743 = vmul.f32 %v1612, 0.001
    %v3744 = vmul.f32 %v1613, 0.001
    %v3745 = vmul.f32 %v1614, 0.001
    %v3746 = vmul.f32 %v1615, 0.001
    %v3747 = vmul.f32 %v1616, 0.001
    %v3748 = vmul.f32 %v1617, 0.001
    %v3749 = vmul.f32 %v1618, 0.001
    %v3750 = vmul.f32 %v1619, 0.001
    %v3751 = vmul.f32 %v1620, 0.001
    %v3752 = vmul.f32 %v1621, 0.001
    %v3753 = vmul.f32 %v1622, 0.001
    %v3754 = vmul.f32 %v1623, 0.001
    %v3755 = vmul.f32 %v1624, 0.001
    %v3756 = vmul.f32 %v1625, 0.001
    %v3757 = vmul.f32 %v1626, 0.001
    %v3758 = vmul.f32 %v1627, 0.001
    %v3759 = vmul.f32 %v1628, 0.001
    %v3760 = vmul.f32 %v1629, 0.001
    %v3761 = vmul.f32 %v1630, 0.001
    %v3762 = vmul.f32 %v1631, 0.001
    %v3763 = vmul.f32 %v1632, 0.001
    %v3764 = vmul.f32 %v1633, 0.001
    %v3765 = vmul.f32 %v1634, 0.001
    %v3766 = vmul.f32 %v1635, 0.001
    %v3767 = vmul.f32 %v1636, 0.001
    %v3768 = vmul.f32 %v1637, 0.001
    %v3769 = vmul.f32 %v1638, 0.001
    %v3770 = vmul.f32 %v1639, 0.001
    %v3771 = vmul.f32 %v1640, 0.001
    %v3772 = vmul.f32 %v1641, 0.001
    %v3773 = vmul.f32 %v1642, 0.001
    %v3774 = vmul.f32 %v1643, 0.001
    %v3775 = vmul.f32 %v1644, 0.001
    %v3776 = vmul.f32 %v1645, 0.001
    %v3777 = vmul.f32 %v1646, 0.001
    %v3778 = vmul.f32 %v1647, 0.001
    %v3779 = vmul.f32 %v1648, 0.001
    %v3780 = vmul.f32 %v1649, 0.001
    %v3781 = vmul.f32 %v1650, 0.001
    %v3782 = vmul.f32 %v1651, 0.001
    %v3783 = vmul.f32 %v1652, 0.001
    %v3784 = vmul.f32 %v1653, 0.001
    %v3785 = vmul.f32 %v1654, 0.001
    %v3786 = vmul.f32 %v1655, 0.001
    %v3787 = vmul.f32 %v1656, 0.001
    %v3788 = vmul.f32 %v1657, 0.001
    %v3789 = vmul.f32 %v1658, 0.001
    %v3790 = vmul.f32 %v1659, 0.001
    %v3791 = vmul.f32 %v1660, 0.001
    %v3792 = vmul.f32 %v1661, 0.001
    %v3793 = vmul.f32 %v1662, 0.001
    %v3794 = vmul.f32 %v1663, 0.001
    %v3795 = vmul.f32 %v1664, 0.001
    %v3796 = vmul.f32 %v1665, 0.001
    %v3797 = vmul.f32 %v1666, 0.001
    %v3798 = vmul.f32 %v1667, 0.001
    %v3799 = vmul.f32 %v1668, 0.001
    %v3800 = vmul.f32 %v1669, 0.001
    %v3801 = vmul.f32 %v1670, 0.001
    %v3802 = vmul.f32 %v1671, 0.001
    %v3803 = vmul.f32 %v1672, 0.001
    %v3804 = vmul.f32 %v1673, 0.001
    %v3805 = vmul.f32 %v1674, 0.001
    %v3806 = vmul.f32 %v1675, 0.001
    %v3807 = vmul.f32 %v1676, 0.001
    %v3808 = vmul.f32 %v1677, 0.001
    %v3809 = vmul.f32 %v1678, 0.001
    %v3810 = vmul.f32 %v1679, 0.001
    %v3811 = vmul.f32 %v1680, 0.001
    %v3812 = vmul.f32 %v1681, 0.001
    %v3813 = vmul.f32 %v1682, 0.001
    %v3814 = vmul.f32 %v1683, 0.001
    %v3815 = vmul.f32 %v1684, 0.001
    %v3816 = vmul.f32 %v1685, 0.001
    %v3817 = vmul.f32 %v1686, 0.001
    %v3818 = vmul.f32 %v1687, 0.001
    %v3819 = vmul.f32 %v1688, 0.001
    %v3820 = vmul.f32 %v1689, 0.001
    %v3821 = vmul.f32 %v1690, 0.001
    %v3822 = vmul.f32 %v1691, 0.001
    %v3823 = vmul.f32 %v1692, 0.001
    %v3824 = vmul.f32 %v1693, 0.001
    %v3825 = vmul.f32 %v1694, 0.001
    %v3826 = vmul.f32 %v1695, 0.001
    %v3827 = vmul.f32 %v1696, 0.001
    %v3828 = vmul.f32 %v1697, 0.001
    %v3829 = vmul.f32 %v1698, 0.001
    %v3830 = vmul.f32 %v1699, 0.001
    %v3831 = vmul.f32 %v1700, 0.001
    %v3832 = vmul.f32 %v1701, 0.001
    %v3833 = vmul.f32 %v1702, 0.001
    %v3834 = vmul.f32 %v1703, 0.001
    %v3835 = vmul.f32 %v1704, 0.001
    %v3836 = vmul.f32 %v1705, 0.001
    %v3837 = vmul.f32 %v1706, 0.001
    %v3838 = vmul.f32 %v1707, 0.001
    %v3839 = vmul.f32 %v1708, 0.001
    %v3840 = vmul.f32 %v1709, 0.001
    %v3841 = vmul.f32 %v1710, 0.001
    %v3842 = vmul.f32 %v1711, 0.001
    %v3843 = vmul.f32 %v1712, 0.001
    %v3844 = vmul.f32 %v1713, 0.001
    %v3845 = vmul.f32 %v1714, 0.001
    %v3846 = vmul.f32 %v1715, 0.001
    %v3847 = vmul.f32 %v1716, 0.001
    %v3848 = vmul.f32 %v1717, 0.001
    %v3849 = vmul.f32 %v1718, 0.001
    %v3850 = vmul.f32 %v1719, 0.001
    %v3851 = vmul.f32 %v1720, 0.001
    %v3852 = vmul.f32 %v1721, 0.001
    %v3853 = vmul.f32 %v1722, 0.001
    %v3854 = vmul.f32 %v1723, 0.001
    %v3855 = vmul.f32 %v1724, 0.001
    %v3856 = vmul.f32 %v1725, 0.001
    %v3857 = vmul.f32 %v1726, 0.001
    %v3858 = vmul.f32 %v1727, 0.001
    %v3859 = vmul.f32 %v1728, 0.001
    %v3860 = vmul.f32 %v1729, 0.001
    %v3861 = vmul.f32 %v1730, 0.001
    %v3862 = vmul.f32 %v1731, 0.001
    %v3863 = vmul.f32 %v1732, 0.001
    %v3864 = vmul.f32 %v1733, 0.001
    %v3865 = vmul.f32 %v1734, 0.001
    %v3866 = vmul.f32 %v1735, 0.001
    %v3867 = vmul.f32 %v1736, 0.001
    %v3868 = vmul.f32 %v1737, 0.001
    %v3869 = vmul.f32 %v1738, 0.001
    %v3870 = vmul.f32 %v1739, 0.001
    %v3871 = vmul.f32 %v1740, 0.001
    %v3872 = vmul.f32 %v1741, 0.001
    %v3873 = vadd.f32 %v3361, %v3617
    %v3874 = vadd.f32 %v3362, %v3618
    %v3875 = vadd.f32 %v3363, %v3619
    %v3876 = vadd.f32 %v3364, %v3620
    %v3877 = vadd.f32 %v3365, %v3621
    %v3878 = vadd.f32 %v3366, %v3622
    %v3879 = vadd.f32 %v3367, %v3623
    %v3880 = vadd.f32 %v3368, %v3624
    %v3881 = vadd.f32 %v3369, %v3625
    %v3882 = vadd.f32 %v3370, %v3626
    %v3883 = vadd.f32 %v3371, %v3627
    %v3884 = vadd.f32 %v3372, %v3628
    %v3885 = vadd.f32 %v3373, %v3629
    %v3886 = vadd.f32 %v3374, %v3630
    %v3887 = vadd.f32 %v3375, %v3631
    %v3888 = vadd.f32 %v3376, %v3632
    %v3889 = vadd.f32 %v3377, %v3633
    %v3890 = vadd.f32 %v3378, %v3634
    %v3891 = vadd.f32 %v3379, %v3635
    %v3892 = vadd.f32 %v3380, %v3636
    %v3893 = vadd.f32 %v3381, %v3637
    %v3894 = vadd.f32 %v3382, %v3638
    %v3895 = vadd.f32 %v3383, %v3639
    %v3896 = vadd.f32 %v3384, %v3640
    %v3897 = vadd.f32 %v3385, %v3641
    %v3898 = vadd.f32 %v3386, %v3642
    %v3899 = vadd.f32 %v3387, %v3643
    %v3900 = vadd.f32 %v3388, %v3644
    %v3901 = vadd.f32 %v3389, %v3645
    %v3902 = vadd.f32 %v3390, %v3646
    %v3903 = vadd.f32 %v3391, %v3647
    %v3904 = vadd.f32 %v3392, %v3648
    %v3905 = vadd.f32 %v3393, %v3649
    %v3906 = vadd.f32 %v3394, %v3650
    %v3907 = vadd.f32 %v3395, %v3651
    %v3908 = vadd.f32 %v3396, %v3652
    %v3909 = vadd.f32 %v3397, %v3653
    %v3910 = vadd.f32 %v3398, %v3654
    %v3911 = vadd.f32 %v3399, %v3655
    %v3912 = vadd.f32 %v3400, %v3656
    %v3913 = vadd.f32 %v3401, %v3657
    %v3914 = vadd.f32 %v3402, %v3658
    %v3915 = vadd.f32 %v3403, %v3659
    %v3916 = vadd.f32 %v3404, %v3660
    %v3917 = vadd.f32 %v3405, %v3661
    %v3918 = vadd.f32 %v3406, %v3662
    %v3919 = vadd.f32 %v3407, %v3663
    %v3920 = vadd.f32 %v3408, %v3664
    %v3921 = vadd.f32 %v3409, %v3665
    %v3922 = vadd.f32 %v3410, %v3666
    %v3923 = vadd.f32 %v3411, %v3667
    %v3924 = vadd.f32 %v3412, %v3668
    %v3925 = vadd.f32 %v3413, %v3669
    %v3926 = vadd.f32 %v3414, %v3670
    %v3927 = vadd.f32 %v3415, %v3671
    %v3928 = vadd.f32 %v3416, %v3672
    %v3929 = vadd.f32 %v3417, %v3673
    %v3930 = vadd.f32 %v3418, %v3674
    %v3931 = vadd.f32 %v3419, %v3675
    %v3932 = vadd.f32 %v3420, %v3676
    %v3933 = vadd.f32 %v3421, %v3677
    %v3934 = vadd.f32 %v3422, %v3678
    %v3935 = vadd.f32 %v3423, %v3679
    %v3936 = vadd.f32 %v3424, %v3680
    %v3937 = vadd.f32 %v3425, %v3681
    %v3938 = vadd.f32 %v3426, %v3682
    %v3939 = vadd.f32 %v3427, %v3683
    %v3940 = vadd.f32 %v3428, %v3684
    %v3941 = vadd.f32 %v3429, %v3685
    %v3942 = vadd.f32 %v3430, %v3686
    %v3943 = vadd.f32 %v3431, %v3687
    %v3944 = vadd.f32 %v3432, %v3688
    %v3945 = vadd.f32 %v3433, %v3689
    %v3946 = vadd.f32 %v3434, %v3690
    %v3947 = vadd.f32 %v3435, %v3691
    %v3948 = vadd.f32 %v3436, %v3692
    %v3949 = vadd.f32 %v3437, %v3693
    %v3950 = vadd.f32 %v3438, %v3694
    %v3951 = vadd.f32 %v3439, %v3695
    %v3952 = vadd.f32 %v3440, %v3696
    %v3953 = vadd.f32 %v3441, %v3697
    %v3954 = vadd.f32 %v3442, %v3698
    %v3955 = vadd.f32 %v3443, %v3699
    %v3956 = vadd.f32 %v3444, %v3700
    %v3957 = vadd.f32 %v3445, %v3701
    %v3958 = vadd.f32 %v3446, %v3702
    %v3959 = vadd.f32 %v3447, %v3703
    %v3960 = vadd.f32 %v3448, %v3704
    %v3961 = vadd.f32 %v3449, %v3705
    %v3962 = vadd.f32 %v3450, %v3706
    %v3963 = vadd.f32 %v3451, %v3707
    %v3964 = vadd.f32 %v3452, %v3708
    %v3965 = vadd.f32 %v3453, %v3709
    %v3966 = vadd.f32 %v3454, %v3710
    %v3967 = vadd.f32 %v3455, %v3711
    %v3968 = vadd.f32 %v3456, %v3712
    %v3969 = vadd.f32 %v3457, %v3713
    %v3970 = vadd.f32 %v3458, %v3714
    %v3971 = vadd.f32 %v3459, %v3715
    %v3972 = vadd.f32 %v3460, %v3716
    %v3973 = vadd.f32 %v3461, %v3717
    %v3974 = vadd.f32 %v3462, %v3718
    %v3975 = vadd.f32 %v3463, %v3719
    %v3976 = vadd.f32 %v3464, %v3720
    %v3977 = vadd.f32 %v3465, %v3721
    %v3978 = vadd.f32 %v3466, %v3722
    %v3979 = vadd.f32 %v3467, %v3723
    %v3980 = vadd.f32 %v3468, %v3724
    %v3981 = vadd.f32 %v3469, %v3725
    %v3982 = vadd.f32 %v3470, %v3726
    %v3983 = vadd.f32 %v3471, %v3727
    %v3984 = vadd.f32 %v3472, %v3728
    %v3985 = vadd.f32 %v3473, %v3729
    %v3986 = vadd.f32 %v3474, %v3730
    %v3987 = vadd.f32 %v3475, %v3731
    %v3988 = vadd.f32 %v3476, %v3732
    %v3989 = vadd.f32 %v3477, %v3733
    %v3990 = vadd.f32 %v3478, %v3734
    %v3991 = vadd.f32 %v3479, %v3735
    %v3992 = vadd.f32 %v3480, %v3736
    %v3993 = vadd.f32 %v3481, %v3737
    %v3994 = vadd.f32 %v3482, %v3738
    %v3995 = vadd.f32 %v3483, %v3739
    %v3996 = vadd.f32 %v3484, %v3740
    %v3997 = vadd.f32 %v3485, %v3741
    %v3998 = vadd.f32 %v3486, %v3742
    %v3999 = vadd.f32 %v3487, %v3743
    %v4000 = vadd.f32 %v3488, %v3744
    %v4001 = vadd.f32 %v3489, %v3745
    %v4002 = vadd.f32 %v3490, %v3746
    %v4003 = vadd.f32 %v3491, %v3747
    %v4004 = vadd.f32 %v3492, %v3748
    %v4005 = vadd.f32 %v3493, %v3749
    %v4006 = vadd.f32 %v3494, %v3750
    %v4007 = vadd.f32 %v3495, %v3751
    %v4008 = vadd.f32 %v3496, %v3752
    %v4009 = vadd.f32 %v3497, %v3753
    %v4010 = vadd.f32 %v3498, %v3754
    %v4011 = vadd.f32 %v3499, %v3755
    %v4012 = vadd.f32 %v3500, %v3756
    %v4013 = vadd.f32 %v3501, %v3757
    %v4014 = vadd.f32 %v3502, %v3758
    %v4015 = vadd.f32 %v3503, %v3759
    %v4016 = vadd.f32 %v3504, %v3760
    %v4017 = vadd.f32 %v3505, %v3761
    %v4018 = vadd.f32 %v3506, %v3762
    %v4019 = vadd.f32 %v3507, %v3763
    %v4020 = vadd.f32 %v3508, %v3764
    %v4021 = vadd.f32 %v3509, %v3765
    %v4022 = vadd.f32 %v3510, %v3766
    %v4023 = vadd.f32 %v3511, %v3767
    %v4024 = vadd.f32 %v3512, %v3768
    %v4025 = vadd.f32 %v3513, %v3769
    %v4026 = vadd.f32 %v3514, %v3770
    %v4027 = vadd.f32 %v3515, %v3771
    %v4028 = vadd.f32 %v3516, %v3772
    %v4029 = vadd.f32 %v3517, %v3773
    %v4030 = vadd.f32 %v3518, %v3774
    %v4031 = vadd.f32 %v3519, %v3775
    %v4032 = vadd.f32 %v3520, %v3776
    %v4033 = vadd.f32 %v3521, %v3777
    %v4034 = vadd.f32 %v3522, %v3778
    %v4035 = vadd.f32 %v3523, %v3779
    %v4036 = vadd.f32 %v3524, %v3780
    %v4037 = vadd.f32 %v3525, %v3781
    %v4038 = vadd.f32 %v3526, %v3782
    %v4039 = vadd.f32 %v3527, %v3783
    %v4040 = vadd.f32 %v3528, %v3784
    %v4041 = vadd.f32 %v3529, %v3785
    %v4042 = vadd.f32 %v3530, %v3786
    %v4043 = vadd.f32 %v3531, %v3787
    %v4044 = vadd.f32 %v3532, %v3788
    %v4045 = vadd.f32 %v3533, %v3789
    %v4046 = vadd.f32 %v3534, %v3790
    %v4047 = vadd.f32 %v3535, %v3791
    %v4048 = vadd.f32 %v3536, %v3792
    %v4049 = vadd.f32 %v3537, %v3793
    %v4050 = vadd.f32 %v3538, %v3794
    %v4051 = vadd.f32 %v3539, %v3795
    %v4052 = vadd.f32 %v3540, %v3796
    %v4053 = vadd.f32 %v3541, %v3797
    %v4054 = vadd.f32 %v3542, %v3798
    %v4055 = vadd.f32 %v3543, %v3799
    %v4056 = vadd.f32 %v3544, %v3800
    %v4057 = vadd.f32 %v3545, %v3801
    %v4058 = vadd.f32 %v3546, %v3802
    %v4059 = vadd.f32 %v3547, %v3803
    %v4060 = vadd.f32 %v3548, %v3804
    %v4061 = vadd.f32 %v3549, %v3805
    %v4062 = vadd.f32 %v3550, %v3806
    %v4063 = vadd.f32 %v3551, %v3807
    %v4064 = vadd.f32 %v3552, %v3808
    %v4065 = vadd.f32 %v3553, %v3809
    %v4066 = vadd.f32 %v3554, %v3810
    %v4067 = vadd.f32 %v3555, %v3811
    %v4068 = vadd.f32 %v3556, %v3812
    %v4069 = vadd.f32 %v3557, %v3813
    %v4070 = vadd.f32 %v3558, %v3814
    %v4071 = vadd.f32 %v3559, %v3815
    %v4072 = vadd.f32 %v3560, %v3816
    %v4073 = vadd.f32 %v3561, %v3817
    %v4074 = vadd.f32 %v3562, %v3818
    %v4075 = vadd.f32 %v3563, %v3819
    %v4076 = vadd.f32 %v3564, %v3820
    %v4077 = vadd.f32 %v3565, %v3821
    %v4078 = vadd.f32 %v3566, %v3822
    %v4079 = vadd.f32 %v3567, %v3823
    %v4080 = vadd.f32 %v3568, %v3824
    %v4081 = vadd.f32 %v3569, %v3825
    %v4082 = vadd.f32 %v3570, %v3826
    %v4083 = vadd.f32 %v3571, %v3827
    %v4084 = vadd.f32 %v3572, %v3828
    %v4085 = vadd.f32 %v3573, %v3829
    %v4086 = vadd.f32 %v3574, %v3830
    %v4087 = vadd.f32 %v3575, %v3831
    %v4088 = vadd.f32 %v3576, %v3832
    %v4089 = vadd.f32 %v3577, %v3833
    %v4090 = vadd.f32 %v3578, %v3834
    %v4091 = vadd.f32 %v3579, %v3835
    %v4092 = vadd.f32 %v3580, %v3836
    %v4093 = vadd.f32 %v3581, %v3837
    %v4094 = vadd.f32 %v3582, %v3838
    %v4095 = vadd.f32 %v3583, %v3839
    %v4096 = vadd.f32 %v3584, %v3840
    %v4097 = vadd.f32 %v3585, %v3841
    %v4098 = vadd.f32 %v3586, %v3842
    %v4099 = vadd.f32 %v3587, %v3843
    %v4100 = vadd.f32 %v3588, %v3844
    %v4101 = vadd.f32 %v3589, %v3845
    %v4102 = vadd.f32 %v3590, %v3846
    %v4103 = vadd.f32 %v3591, %v3847
    %v4104 = vadd.f32 %v3592, %v3848
    %v4105 = vadd.f32 %v3593, %v3849
    %v4106 = vadd.f32 %v3594, %v3850
    %v4107 = vadd.f32 %v3595, %v3851
    %v4108 = vadd.f32 %v3596, %v3852
    %v4109 = vadd.f32 %v3597, %v3853
    %v4110 = vadd.f32 %v3598, %v3854
    %v4111 = vadd.f32 %v3599, %v3855
    %v4112 = vadd.f32 %v3600, %v3856
    %v4113 = vadd.f32 %v3601, %v3857
    %v4114 = vadd.f32 %v3602, %v3858
    %v4115 = vadd.f32 %v3603, %v3859
    %v4116 = vadd.f32 %v3604, %v3860
    %v4117 = vadd.f32 %v3605, %v3861
    %v4118 = vadd.f32 %v3606, %v3862
    %v4119 = vadd.f32 %v3607, %v3863
    %v4120 = vadd.f32 %v3608, %v3864
    %v4121 = vadd.f32 %v3609, %v3865
    %v4122 = vadd.f32 %v3610, %v3866
    %v4123 = vadd.f32 %v3611, %v3867
    %v4124 = vadd.f32 %v3612, %v3868
    %v4125 = vadd.f32 %v3613, %v3869
    %v4126 = vadd.f32 %v3614, %v3870
    %v4127 = vadd.f32 %v3615, %v3871
    %v4128 = vadd.f32 %v3616, %v3872
    %v4129 = vld [vmem:[%s14] sm:$0xf]
    %v4130 = vmul.f32 %v4129, 0.999
    %v4131 = vmul.f32 %v1742, 0.001
    %v4132 = vadd.f32 %v4130, %v4131
    %4133 = vst [vmem:[%s17] sm:$0xff] %v2909
    %4134 = vst [vmem:[%s17 + $0x8] sm:$0xff] %v2910
    %4135 = vst [vmem:[%s17 + $0x10] sm:$0xff] %v2911
    %4136 = vst [vmem:[%s17 + $0x18] sm:$0xff] %v2912
    %4137 = vst [vmem:[%s17 + $0x20] sm:$0xff] %v2913
    %4138 = vst [vmem:[%s17 + $0x28] sm:$0xff] %v2914
    %4139 = vst [vmem:[%s17 + $0x30] sm:$0xff] %v2915
    %4140 = vst [vmem:[%s17 + $0x38] sm:$0xff] %v2916
    %4141 = vst [vmem:[%s17 + $0x40] sm:$0xff] %v2917
    %4142 = vst [vmem:[%s17 + $0x48] sm:$0xff] %v2918
    %4143 = vst [vmem:[%s17 + $0x50] sm:$0xff] %v2919
    %4144 = vst [vmem:[%s17 + $0x58] sm:$0xff] %v2920
    %4145 = vst [vmem:[%s17 + $0x60] sm:$0xff] %v2921
    %4146 = vst [vmem:[%s17 + $0x68] sm:$0xff] %v2922
    %4147 = vst [vmem:[%s17 + $0x70] sm:$0xff] %v2923
    %4148 = vst [vmem:[%s17 + $0x78] sm:$0xff] %v2924
    %4149 = vst [vmem:[%s17 + $0x80] sm:$0xff] %v2925
    %4150 = vst [vmem:[%s17 + $0x88] sm:$0xff] %v2926
    %4151 = vst [vmem:[%s17 + $0x90] sm:$0xff] %v2927
    %4152 = vst [vmem:[%s17 + $0x98] sm:$0xff] %v2928
    %4153 = vst [vmem:[%s17 + $0xa0] sm:$0xff] %v2929
    %4154 = vst [vmem:[%s17 + $0xa8] sm:$0xff] %v2930
    %4155 = vst [vmem:[%s17 + $0xb0] sm:$0xff] %v2931
    %4156 = vst [vmem:[%s17 + $0xb8] sm:$0xff] %v2932
    %4157 = vst [vmem:[%s17 + $0xc0] sm:$0xff] %v2933
    %4158 = vst [vmem:[%s17 + $0xc8] sm:$0xff] %v2934
    %4159 = vst [vmem:[%s17 + $0xd0] sm:$0xff] %v2935
    %4160 = vst [vmem:[%s17 + $0xd8] sm:$0xff] %v2936
    %4161 = vst [vmem:[%s17 + $0xe0] sm:$0xff] %v2937
    %4162 = vst [vmem:[%s17 + $0xe8] sm:$0xff] %v2938
    %4163 = vst [vmem:[%s17 + $0xf0] sm:$0xff] %v2939
    %4164 = vst [vmem:[%s17 + $0xf8] sm:$0xff] %v2940
    %4165 = vst [vmem:[%s17 + $0x100] sm:$0xff] %v2941
    %4166 = vst [vmem:[%s17 + $0x108] sm:$0xff] %v2942
    %4167 = vst [vmem:[%s17 + $0x110] sm:$0xff] %v2943
    %4168 = vst [vmem:[%s17 + $0x118] sm:$0xff] %v2944
    %4169 = vst [vmem:[%s17 + $0x120] sm:$0xff] %v2945
    %4170 = vst [vmem:[%s17 + $0x128] sm:$0xff] %v2946
    %4171 = vst [vmem:[%s17 + $0x130] sm:$0xff] %v2947
    %4172 = vst [vmem:[%s17 + $0x138] sm:$0xff] %v2948
    %4173 = vst [vmem:[%s17 + $0x140] sm:$0xff] %v2949
    %4174 = vst [vmem:[%s17 + $0x148] sm:$0xff] %v2950
    %4175 = vst [vmem:[%s17 + $0x150] sm:$0xff] %v2951
    %4176 = vst [vmem:[%s17 + $0x158] sm:$0xff] %v2952
    %4177 = vst [vmem:[%s17 + $0x160] sm:$0xff] %v2953
    %4178 = vst [vmem:[%s17 + $0x168] sm:$0xff] %v2954
    %4179 = vst [vmem:[%s17 + $0x170] sm:$0xff] %v2955
    %4180 = vst [vmem:[%s17 + $0x178] sm:$0xff] %v2956
    %4181 = vst [vmem:[%s17 + $0x180] sm:$0xff] %v2957
    %4182 = vst [vmem:[%s17 + $0x188] sm:$0xff] %v2958
    %4183 = vst [vmem:[%s17 + $0x190] sm:$0xff] %v2959
    %4184 = vst [vmem:[%s17 + $0x198] sm:$0xff] %v2960
    %4185 = vst [vmem:[%s17 + $0x1a0] sm:$0xff] %v2961
    %4186 = vst [vmem:[%s17 + $0x1a8] sm:$0xff] %v2962
    %4187 = vst [vmem:[%s17 + $0x1b0] sm:$0xff] %v2963
    %4188 = vst [vmem:[%s17 + $0x1b8] sm:$0xff] %v2964
    %4189 = vst [vmem:[%s17 + $0x1c0] sm:$0xff] %v2965
    %4190 = vst [vmem:[%s17 + $0x1c8] sm:$0xff] %v2966
    %4191 = vst [vmem:[%s17 + $0x1d0] sm:$0xff] %v2967
    %4192 = vst [vmem:[%s17 + $0x1d8] sm:$0xff] %v2968
    %4193 = vst [vmem:[%s17 + $0x1e0] sm:$0xff] %v2969
    %4194 = vst [vmem:[%s17 + $0x1e8] sm:$0xff] %v2970
    %4195 = vst [vmem:[%s17 + $0x1f0] sm:$0xff] %v2971
    %4196 = vst [vmem:[%s17 + $0x1f8] sm:$0xff] %v2972
    %4197 = vst [vmem:[%s17 + $0x200] sm:$0xff] %v2973
    %4198 = vst [vmem:[%s17 + $0x208] sm:$0xff] %v2974
    %4199 = vst [vmem:[%s17 + $0x210] sm:$0xff] %v2975
    %4200 = vst [vmem:[%s17 + $0x218] sm:$0xff] %v2976
    %4201 = vst [vmem:[%s17 + $0x220] sm:$0xff] %v2977
    %4202 = vst [vmem:[%s17 + $0x228] sm:$0xff] %v2978
    %4203 = vst [vmem:[%s17 + $0x230] sm:$0xff] %v2979
    %4204 = vst [vmem:[%s17 + $0x238] sm:$0xff] %v2980
    %4205 = vst [vmem:[%s17 + $0x240] sm:$0xff] %v2981
    %4206 = vst [vmem:[%s17 + $0x248] sm:$0xff] %v2982
    %4207 = vst [vmem:[%s17 + $0x250] sm:$0xff] %v2983
    %4208 = vst [vmem:[%s17 + $0x258] sm:$0xff] %v2984
    %4209 = vst [vmem:[%s17 + $0x260] sm:$0xff] %v2985
    %4210 = vst [vmem:[%s17 + $0x268] sm:$0xff] %v2986
    %4211 = vst [vmem:[%s17 + $0x270] sm:$0xff] %v2987
    %4212 = vst [vmem:[%s17 + $0x278] sm:$0xff] %v2988
    %4213 = vst [vmem:[%s17 + $0x280] sm:$0xff] %v2989
    %4214 = vst [vmem:[%s17 + $0x288] sm:$0xff] %v2990
    %4215 = vst [vmem:[%s17 + $0x290] sm:$0xff] %v2991
    %4216 = vst [vmem:[%s17 + $0x298] sm:$0xff] %v2992
    %4217 = vst [vmem:[%s17 + $0x2a0] sm:$0xff] %v2993
    %4218 = vst [vmem:[%s17 + $0x2a8] sm:$0xff] %v2994
    %4219 = vst [vmem:[%s17 + $0x2b0] sm:$0xff] %v2995
    %4220 = vst [vmem:[%s17 + $0x2b8] sm:$0xff] %v2996
    %4221 = vst [vmem:[%s17 + $0x2c0] sm:$0xff] %v2997
    %4222 = vst [vmem:[%s17 + $0x2c8] sm:$0xff] %v2998
    %4223 = vst [vmem:[%s17 + $0x2d0] sm:$0xff] %v2999
    %4224 = vst [vmem:[%s17 + $0x2d8] sm:$0xff] %v3000
    %4225 = vst [vmem:[%s17 + $0x2e0] sm:$0xff] %v3001
    %4226 = vst [vmem:[%s17 + $0x2e8] sm:$0xff] %v3002
    %4227 = vst [vmem:[%s17 + $0x2f0] sm:$0xff] %v3003
    %4228 = vst [vmem:[%s17 + $0x2f8] sm:$0xff] %v3004
    %4229 = vst [vmem:[%s17 + $0x300] sm:$0xff] %v3005
    %4230 = vst [vmem:[%s17 + $0x308] sm:$0xff] %v3006
    %4231 = vst [vmem:[%s17 + $0x310] sm:$0xff] %v3007
    %4232 = vst [vmem:[%s17 + $0x318] sm:$0xff] %v3008
    %4233 = vst [vmem:[%s17 + $0x320] sm:$0xff] %v3009
    %4234 = vst [vmem:[%s17 + $0x328] sm:$0xff] %v3010
    %4235 = vst [vmem:[%s17 + $0x330] sm:$0xff] %v3011
    %4236 = vst [vmem:[%s17 + $0x338] sm:$0xff] %v3012
    %4237 = vst [vmem:[%s17 + $0x340] sm:$0xff] %v3013
    %4238 = vst [vmem:[%s17 + $0x348] sm:$0xff] %v3014
    %4239 = vst [vmem:[%s17 + $0x350] sm:$0xff] %v3015
    %4240 = vst [vmem:[%s17 + $0x358] sm:$0xff] %v3016
    %4241 = vst [vmem:[%s17 + $0x360] sm:$0xff] %v3017
    %4242 = vst [vmem:[%s17 + $0x368] sm:$0xff] %v3018
    %4243 = vst [vmem:[%s17 + $0x370] sm:$0xff] %v3019
    %4244 = vst [vmem:[%s17 + $0x378] sm:$0xff] %v3020
    %4245 = vst [vmem:[%s17 + $0x380] sm:$0xff] %v3021
    %4246 = vst [vmem:[%s17 + $0x388] sm:$0xff] %v3022
    %4247 = vst [vmem:[%s17 + $0x390] sm:$0xff] %v3023
    %4248 = vst [vmem:[%s17 + $0x398] sm:$0xff] %v3024
    %4249 = vst [vmem:[%s17 + $0x3a0] sm:$0xff] %v3025
    %4250 = vst [vmem:[%s17 + $0x3a8] sm:$0xff] %v3026
    %4251 = vst [vmem:[%s17 + $0x3b0] sm:$0xff] %v3027
    %4252 = vst [vmem:[%s17 + $0x3b8] sm:$0xff] %v3028
    %4253 = vst [vmem:[%s17 + $0x3c0] sm:$0xff] %v3029
    %4254 = vst [vmem:[%s17 + $0x3c8] sm:$0xff] %v3030
    %4255 = vst [vmem:[%s17 + $0x3d0] sm:$0xff] %v3031
    %4256 = vst [vmem:[%s17 + $0x3d8] sm:$0xff] %v3032
    %4257 = vst [vmem:[%s17 + $0x3e0] sm:$0xff] %v3033
    %4258 = vst [vmem:[%s17 + $0x3e8] sm:$0xff] %v3034
    %4259 = vst [vmem:[%s17 + $0x3f0] sm:$0xff] %v3035
    %4260 = vst [vmem:[%s17 + $0x3f8] sm:$0xff] %v3036
    %4261 = vst [vmem:[%s17 + $0x400] sm:$0xff] %v3037
    %4262 = vst [vmem:[%s17 + $0x408] sm:$0xff] %v3038
    %4263 = vst [vmem:[%s17 + $0x410] sm:$0xff] %v3039
    %4264 = vst [vmem:[%s17 + $0x418] sm:$0xff] %v3040
    %4265 = vst [vmem:[%s17 + $0x420] sm:$0xff] %v3041
    %4266 = vst [vmem:[%s17 + $0x428] sm:$0xff] %v3042
    %4267 = vst [vmem:[%s17 + $0x430] sm:$0xff] %v3043
    %4268 = vst [vmem:[%s17 + $0x438] sm:$0xff] %v3044
    %4269 = vst [vmem:[%s17 + $0x440] sm:$0xff] %v3045
    %4270 = vst [vmem:[%s17 + $0x448] sm:$0xff] %v3046
    %4271 = vst [vmem:[%s17 + $0x450] sm:$0xff] %v3047
    %4272 = vst [vmem:[%s17 + $0x458] sm:$0xff] %v3048
    %4273 = vst [vmem:[%s17 + $0x460] sm:$0xff] %v3049
    %4274 = vst [vmem:[%s17 + $0x468] sm:$0xff] %v3050
    %4275 = vst [vmem:[%s17 + $0x470] sm:$0xff] %v3051
    %4276 = vst [vmem:[%s17 + $0x478] sm:$0xff] %v3052
    %4277 = vst [vmem:[%s17 + $0x480] sm:$0xff] %v3053
    %4278 = vst [vmem:[%s17 + $0x488] sm:$0xff] %v3054
    %4279 = vst [vmem:[%s17 + $0x490] sm:$0xff] %v3055
    %4280 = vst [vmem:[%s17 + $0x498] sm:$0xff] %v3056
    %4281 = vst [vmem:[%s17 + $0x4a0] sm:$0xff] %v3057
    %4282 = vst [vmem:[%s17 + $0x4a8] sm:$0xff] %v3058
    %4283 = vst [vmem:[%s17 + $0x4b0] sm:$0xff] %v3059
    %4284 = vst [vmem:[%s17 + $0x4b8] sm:$0xff] %v3060
    %4285 = vst [vmem:[%s17 + $0x4c0] sm:$0xff] %v3061
    %4286 = vst [vmem:[%s17 + $0x4c8] sm:$0xff] %v3062
    %4287 = vst [vmem:[%s17 + $0x4d0] sm:$0xff] %v3063
    %4288 = vst [vmem:[%s17 + $0x4d8] sm:$0xff] %v3064
    %4289 = vst [vmem:[%s17 + $0x4e0] sm:$0xff] %v3065
    %4290 = vst [vmem:[%s17 + $0x4e8] sm:$0xff] %v3066
    %4291 = vst [vmem:[%s17 + $0x4f0] sm:$0xff] %v3067
    %4292 = vst [vmem:[%s17 + $0x4f8] sm:$0xff] %v3068
    %4293 = vst [vmem:[%s17 + $0x500] sm:$0xff] %v3069
    %4294 = vst [vmem:[%s17 + $0x508] sm:$0xff] %v3070
    %4295 = vst [vmem:[%s17 + $0x510] sm:$0xff] %v3071
    %4296 = vst [vmem:[%s17 + $0x518] sm:$0xff] %v3072
    %4297 = vst [vmem:[%s17 + $0x520] sm:$0xff] %v3073
    %4298 = vst [vmem:[%s17 + $0x528] sm:$0xff] %v3074
    %4299 = vst [vmem:[%s17 + $0x530] sm:$0xff] %v3075
    %4300 = vst [vmem:[%s17 + $0x538] sm:$0xff] %v3076
    %4301 = vst [vmem:[%s17 + $0x540] sm:$0xff] %v3077
    %4302 = vst [vmem:[%s17 + $0x548] sm:$0xff] %v3078
    %4303 = vst [vmem:[%s17 + $0x550] sm:$0xff] %v3079
    %4304 = vst [vmem:[%s17 + $0x558] sm:$0xff] %v3080
    %4305 = vst [vmem:[%s17 + $0x560] sm:$0xff] %v3081
    %4306 = vst [vmem:[%s17 + $0x568] sm:$0xff] %v3082
    %4307 = vst [vmem:[%s17 + $0x570] sm:$0xff] %v3083
    %4308 = vst [vmem:[%s17 + $0x578] sm:$0xff] %v3084
    %4309 = vst [vmem:[%s17 + $0x580] sm:$0xff] %v3085
    %4310 = vst [vmem:[%s17 + $0x588] sm:$0xff] %v3086
    %4311 = vst [vmem:[%s17 + $0x590] sm:$0xff] %v3087
    %4312 = vst [vmem:[%s17 + $0x598] sm:$0xff] %v3088
    %4313 = vst [vmem:[%s17 + $0x5a0] sm:$0xff] %v3089
    %4314 = vst [vmem:[%s17 + $0x5a8] sm:$0xff] %v3090
    %4315 = vst [vmem:[%s17 + $0x5b0] sm:$0xff] %v3091
    %4316 = vst [vmem:[%s17 + $0x5b8] sm:$0xff] %v3092
    %4317 = vst [vmem:[%s17 + $0x5c0] sm:$0xff] %v3093
    %4318 = vst [vmem:[%s17 + $0x5c8] sm:$0xff] %v3094
    %4319 = vst [vmem:[%s17 + $0x5d0] sm:$0xff] %v3095
    %4320 = vst [vmem:[%s17 + $0x5d8] sm:$0xff] %v3096
    %4321 = vst [vmem:[%s17 + $0x5e0] sm:$0xff] %v3097
    %4322 = vst [vmem:[%s17 + $0x5e8] sm:$0xff] %v3098
    %4323 = vst [vmem:[%s17 + $0x5f0] sm:$0xff] %v3099
    %4324 = vst [vmem:[%s17 + $0x5f8] sm:$0xff] %v3100
    %v4325 = vlaneseq
    %vm4326 = vcmp.ge.s32.totalorder %v4325, 0
    %vm4327 = vcmp.lt.s32.totalorder %v4325, 512
    %vm4328 = vmand %vm4326, %vm4327
    %4329 = vst.msk [vmem:[%s18] sm:$0xf] %vm4328, %v3104
    %4330 = vst [vmem:[%s19] sm:$0xff] %v3873
    %4331 = vst [vmem:[%s19 + $0x8] sm:$0xff] %v3874
    %4332 = vst [vmem:[%s19 + $0x10] sm:$0xff] %v3875
    %4333 = vst [vmem:[%s19 + $0x18] sm:$0xff] %v3876
    %4334 = vst [vmem:[%s19 + $0x20] sm:$0xff] %v3877
    %4335 = vst [vmem:[%s19 + $0x28] sm:$0xff] %v3878
    %4336 = vst [vmem:[%s19 + $0x30] sm:$0xff] %v3879
    %4337 = vst [vmem:[%s19 + $0x38] sm:$0xff] %v3880
    %4338 = vst [vmem:[%s19 + $0x40] sm:$0xff] %v3881
    %4339 = vst [vmem:[%s19 + $0x48] sm:$0xff] %v3882
    %4340 = vst [vmem:[%s19 + $0x50] sm:$0xff] %v3883
    %4341 = vst [vmem:[%s19 + $0x58] sm:$0xff] %v3884
    %4342 = vst [vmem:[%s19 + $0x60] sm:$0xff] %v3885
    %4343 = vst [vmem:[%s19 + $0x68] sm:$0xff] %v3886
    %4344 = vst [vmem:[%s19 + $0x70] sm:$0xff] %v3887
    %4345 = vst [vmem:[%s19 + $0x78] sm:$0xff] %v3888
    %4346 = vst [vmem:[%s19 + $0x80] sm:$0xff] %v3889
    %4347 = vst [vmem:[%s19 + $0x88] sm:$0xff] %v3890
    %4348 = vst [vmem:[%s19 + $0x90] sm:$0xff] %v3891
    %4349 = vst [vmem:[%s19 + $0x98] sm:$0xff] %v3892
    %4350 = vst [vmem:[%s19 + $0xa0] sm:$0xff] %v3893
    %4351 = vst [vmem:[%s19 + $0xa8] sm:$0xff] %v3894
    %4352 = vst [vmem:[%s19 + $0xb0] sm:$0xff] %v3895
    %4353 = vst [vmem:[%s19 + $0xb8] sm:$0xff] %v3896
    %4354 = vst [vmem:[%s19 + $0xc0] sm:$0xff] %v3897
    %4355 = vst [vmem:[%s19 + $0xc8] sm:$0xff] %v3898
    %4356 = vst [vmem:[%s19 + $0xd0] sm:$0xff] %v3899
    %4357 = vst [vmem:[%s19 + $0xd8] sm:$0xff] %v3900
    %4358 = vst [vmem:[%s19 + $0xe0] sm:$0xff] %v3901
    %4359 = vst [vmem:[%s19 + $0xe8] sm:$0xff] %v3902
    %4360 = vst [vmem:[%s19 + $0xf0] sm:$0xff] %v3903
    %4361 = vst [vmem:[%s19 + $0xf8] sm:$0xff] %v3904
    %4362 = vst [vmem:[%s19 + $0x100] sm:$0xff] %v3905
    %4363 = vst [vmem:[%s19 + $0x108] sm:$0xff] %v3906
    %4364 = vst [vmem:[%s19 + $0x110] sm:$0xff] %v3907
    %4365 = vst [vmem:[%s19 + $0x118] sm:$0xff] %v3908
    %4366 = vst [vmem:[%s19 + $0x120] sm:$0xff] %v3909
    %4367 = vst [vmem:[%s19 + $0x128] sm:$0xff] %v3910
    %4368 = vst [vmem:[%s19 + $0x130] sm:$0xff] %v3911
    %4369 = vst [vmem:[%s19 + $0x138] sm:$0xff] %v3912
    %4370 = vst [vmem:[%s19 + $0x140] sm:$0xff] %v3913
    %4371 = vst [vmem:[%s19 + $0x148] sm:$0xff] %v3914
    %4372 = vst [vmem:[%s19 + $0x150] sm:$0xff] %v3915
    %4373 = vst [vmem:[%s19 + $0x158] sm:$0xff] %v3916
    %4374 = vst [vmem:[%s19 + $0x160] sm:$0xff] %v3917
    %4375 = vst [vmem:[%s19 + $0x168] sm:$0xff] %v3918
    %4376 = vst [vmem:[%s19 + $0x170] sm:$0xff] %v3919
    %4377 = vst [vmem:[%s19 + $0x178] sm:$0xff] %v3920
    %4378 = vst [vmem:[%s19 + $0x180] sm:$0xff] %v3921
    %4379 = vst [vmem:[%s19 + $0x188] sm:$0xff] %v3922
    %4380 = vst [vmem:[%s19 + $0x190] sm:$0xff] %v3923
    %4381 = vst [vmem:[%s19 + $0x198] sm:$0xff] %v3924
    %4382 = vst [vmem:[%s19 + $0x1a0] sm:$0xff] %v3925
    %4383 = vst [vmem:[%s19 + $0x1a8] sm:$0xff] %v3926
    %4384 = vst [vmem:[%s19 + $0x1b0] sm:$0xff] %v3927
    %4385 = vst [vmem:[%s19 + $0x1b8] sm:$0xff] %v3928
    %4386 = vst [vmem:[%s19 + $0x1c0] sm:$0xff] %v3929
    %4387 = vst [vmem:[%s19 + $0x1c8] sm:$0xff] %v3930
    %4388 = vst [vmem:[%s19 + $0x1d0] sm:$0xff] %v3931
    %4389 = vst [vmem:[%s19 + $0x1d8] sm:$0xff] %v3932
    %4390 = vst [vmem:[%s19 + $0x1e0] sm:$0xff] %v3933
    %4391 = vst [vmem:[%s19 + $0x1e8] sm:$0xff] %v3934
    %4392 = vst [vmem:[%s19 + $0x1f0] sm:$0xff] %v3935
    %4393 = vst [vmem:[%s19 + $0x1f8] sm:$0xff] %v3936
    %4394 = vst [vmem:[%s19 + $0x200] sm:$0xff] %v3937
    %4395 = vst [vmem:[%s19 + $0x208] sm:$0xff] %v3938
    %4396 = vst [vmem:[%s19 + $0x210] sm:$0xff] %v3939
    %4397 = vst [vmem:[%s19 + $0x218] sm:$0xff] %v3940
    %4398 = vst [vmem:[%s19 + $0x220] sm:$0xff] %v3941
    %4399 = vst [vmem:[%s19 + $0x228] sm:$0xff] %v3942
    %4400 = vst [vmem:[%s19 + $0x230] sm:$0xff] %v3943
    %4401 = vst [vmem:[%s19 + $0x238] sm:$0xff] %v3944
    %4402 = vst [vmem:[%s19 + $0x240] sm:$0xff] %v3945
    %4403 = vst [vmem:[%s19 + $0x248] sm:$0xff] %v3946
    %4404 = vst [vmem:[%s19 + $0x250] sm:$0xff] %v3947
    %4405 = vst [vmem:[%s19 + $0x258] sm:$0xff] %v3948
    %4406 = vst [vmem:[%s19 + $0x260] sm:$0xff] %v3949
    %4407 = vst [vmem:[%s19 + $0x268] sm:$0xff] %v3950
    %4408 = vst [vmem:[%s19 + $0x270] sm:$0xff] %v3951
    %4409 = vst [vmem:[%s19 + $0x278] sm:$0xff] %v3952
    %4410 = vst [vmem:[%s19 + $0x280] sm:$0xff] %v3953
    %4411 = vst [vmem:[%s19 + $0x288] sm:$0xff] %v3954
    %4412 = vst [vmem:[%s19 + $0x290] sm:$0xff] %v3955
    %4413 = vst [vmem:[%s19 + $0x298] sm:$0xff] %v3956
    %4414 = vst [vmem:[%s19 + $0x2a0] sm:$0xff] %v3957
    %4415 = vst [vmem:[%s19 + $0x2a8] sm:$0xff] %v3958
    %4416 = vst [vmem:[%s19 + $0x2b0] sm:$0xff] %v3959
    %4417 = vst [vmem:[%s19 + $0x2b8] sm:$0xff] %v3960
    %4418 = vst [vmem:[%s19 + $0x2c0] sm:$0xff] %v3961
    %4419 = vst [vmem:[%s19 + $0x2c8] sm:$0xff] %v3962
    %4420 = vst [vmem:[%s19 + $0x2d0] sm:$0xff] %v3963
    %4421 = vst [vmem:[%s19 + $0x2d8] sm:$0xff] %v3964
    %4422 = vst [vmem:[%s19 + $0x2e0] sm:$0xff] %v3965
    %4423 = vst [vmem:[%s19 + $0x2e8] sm:$0xff] %v3966
    %4424 = vst [vmem:[%s19 + $0x2f0] sm:$0xff] %v3967
    %4425 = vst [vmem:[%s19 + $0x2f8] sm:$0xff] %v3968
    %4426 = vst [vmem:[%s19 + $0x300] sm:$0xff] %v3969
    %4427 = vst [vmem:[%s19 + $0x308] sm:$0xff] %v3970
    %4428 = vst [vmem:[%s19 + $0x310] sm:$0xff] %v3971
    %4429 = vst [vmem:[%s19 + $0x318] sm:$0xff] %v3972
    %4430 = vst [vmem:[%s19 + $0x320] sm:$0xff] %v3973
    %4431 = vst [vmem:[%s19 + $0x328] sm:$0xff] %v3974
    %4432 = vst [vmem:[%s19 + $0x330] sm:$0xff] %v3975
    %4433 = vst [vmem:[%s19 + $0x338] sm:$0xff] %v3976
    %4434 = vst [vmem:[%s19 + $0x340] sm:$0xff] %v3977
    %4435 = vst [vmem:[%s19 + $0x348] sm:$0xff] %v3978
    %4436 = vst [vmem:[%s19 + $0x350] sm:$0xff] %v3979
    %4437 = vst [vmem:[%s19 + $0x358] sm:$0xff] %v3980
    %4438 = vst [vmem:[%s19 + $0x360] sm:$0xff] %v3981
    %4439 = vst [vmem:[%s19 + $0x368] sm:$0xff] %v3982
    %4440 = vst [vmem:[%s19 + $0x370] sm:$0xff] %v3983
    %4441 = vst [vmem:[%s19 + $0x378] sm:$0xff] %v3984
    %4442 = vst [vmem:[%s19 + $0x380] sm:$0xff] %v3985
    %4443 = vst [vmem:[%s19 + $0x388] sm:$0xff] %v3986
    %4444 = vst [vmem:[%s19 + $0x390] sm:$0xff] %v3987
    %4445 = vst [vmem:[%s19 + $0x398] sm:$0xff] %v3988
    %4446 = vst [vmem:[%s19 + $0x3a0] sm:$0xff] %v3989
    %4447 = vst [vmem:[%s19 + $0x3a8] sm:$0xff] %v3990
    %4448 = vst [vmem:[%s19 + $0x3b0] sm:$0xff] %v3991
    %4449 = vst [vmem:[%s19 + $0x3b8] sm:$0xff] %v3992
    %4450 = vst [vmem:[%s19 + $0x3c0] sm:$0xff] %v3993
    %4451 = vst [vmem:[%s19 + $0x3c8] sm:$0xff] %v3994
    %4452 = vst [vmem:[%s19 + $0x3d0] sm:$0xff] %v3995
    %4453 = vst [vmem:[%s19 + $0x3d8] sm:$0xff] %v3996
    %4454 = vst [vmem:[%s19 + $0x3e0] sm:$0xff] %v3997
    %4455 = vst [vmem:[%s19 + $0x3e8] sm:$0xff] %v3998
    %4456 = vst [vmem:[%s19 + $0x3f0] sm:$0xff] %v3999
    %4457 = vst [vmem:[%s19 + $0x3f8] sm:$0xff] %v4000
    %4458 = vst [vmem:[%s19 + $0x400] sm:$0xff] %v4001
    %4459 = vst [vmem:[%s19 + $0x408] sm:$0xff] %v4002
    %4460 = vst [vmem:[%s19 + $0x410] sm:$0xff] %v4003
    %4461 = vst [vmem:[%s19 + $0x418] sm:$0xff] %v4004
    %4462 = vst [vmem:[%s19 + $0x420] sm:$0xff] %v4005
    %4463 = vst [vmem:[%s19 + $0x428] sm:$0xff] %v4006
    %4464 = vst [vmem:[%s19 + $0x430] sm:$0xff] %v4007
    %4465 = vst [vmem:[%s19 + $0x438] sm:$0xff] %v4008
    %4466 = vst [vmem:[%s19 + $0x440] sm:$0xff] %v4009
    %4467 = vst [vmem:[%s19 + $0x448] sm:$0xff] %v4010
    %4468 = vst [vmem:[%s19 + $0x450] sm:$0xff] %v4011
    %4469 = vst [vmem:[%s19 + $0x458] sm:$0xff] %v4012
    %4470 = vst [vmem:[%s19 + $0x460] sm:$0xff] %v4013
    %4471 = vst [vmem:[%s19 + $0x468] sm:$0xff] %v4014
    %4472 = vst [vmem:[%s19 + $0x470] sm:$0xff] %v4015
    %4473 = vst [vmem:[%s19 + $0x478] sm:$0xff] %v4016
    %4474 = vst [vmem:[%s19 + $0x480] sm:$0xff] %v4017
    %4475 = vst [vmem:[%s19 + $0x488] sm:$0xff] %v4018
    %4476 = vst [vmem:[%s19 + $0x490] sm:$0xff] %v4019
    %4477 = vst [vmem:[%s19 + $0x498] sm:$0xff] %v4020
    %4478 = vst [vmem:[%s19 + $0x4a0] sm:$0xff] %v4021
    %4479 = vst [vmem:[%s19 + $0x4a8] sm:$0xff] %v4022
    %4480 = vst [vmem:[%s19 + $0x4b0] sm:$0xff] %v4023
    %4481 = vst [vmem:[%s19 + $0x4b8] sm:$0xff] %v4024
    %4482 = vst [vmem:[%s19 + $0x4c0] sm:$0xff] %v4025
    %4483 = vst [vmem:[%s19 + $0x4c8] sm:$0xff] %v4026
    %4484 = vst [vmem:[%s19 + $0x4d0] sm:$0xff] %v4027
    %4485 = vst [vmem:[%s19 + $0x4d8] sm:$0xff] %v4028
    %4486 = vst [vmem:[%s19 + $0x4e0] sm:$0xff] %v4029
    %4487 = vst [vmem:[%s19 + $0x4e8] sm:$0xff] %v4030
    %4488 = vst [vmem:[%s19 + $0x4f0] sm:$0xff] %v4031
    %4489 = vst [vmem:[%s19 + $0x4f8] sm:$0xff] %v4032
    %4490 = vst [vmem:[%s19 + $0x500] sm:$0xff] %v4033
    %4491 = vst [vmem:[%s19 + $0x508] sm:$0xff] %v4034
    %4492 = vst [vmem:[%s19 + $0x510] sm:$0xff] %v4035
    %4493 = vst [vmem:[%s19 + $0x518] sm:$0xff] %v4036
    %4494 = vst [vmem:[%s19 + $0x520] sm:$0xff] %v4037
    %4495 = vst [vmem:[%s19 + $0x528] sm:$0xff] %v4038
    %4496 = vst [vmem:[%s19 + $0x530] sm:$0xff] %v4039
    %4497 = vst [vmem:[%s19 + $0x538] sm:$0xff] %v4040
    %4498 = vst [vmem:[%s19 + $0x540] sm:$0xff] %v4041
    %4499 = vst [vmem:[%s19 + $0x548] sm:$0xff] %v4042
    %4500 = vst [vmem:[%s19 + $0x550] sm:$0xff] %v4043
    %4501 = vst [vmem:[%s19 + $0x558] sm:$0xff] %v4044
    %4502 = vst [vmem:[%s19 + $0x560] sm:$0xff] %v4045
    %4503 = vst [vmem:[%s19 + $0x568] sm:$0xff] %v4046
    %4504 = vst [vmem:[%s19 + $0x570] sm:$0xff] %v4047
    %4505 = vst [vmem:[%s19 + $0x578] sm:$0xff] %v4048
    %4506 = vst [vmem:[%s19 + $0x580] sm:$0xff] %v4049
    %4507 = vst [vmem:[%s19 + $0x588] sm:$0xff] %v4050
    %4508 = vst [vmem:[%s19 + $0x590] sm:$0xff] %v4051
    %4509 = vst [vmem:[%s19 + $0x598] sm:$0xff] %v4052
    %4510 = vst [vmem:[%s19 + $0x5a0] sm:$0xff] %v4053
    %4511 = vst [vmem:[%s19 + $0x5a8] sm:$0xff] %v4054
    %4512 = vst [vmem:[%s19 + $0x5b0] sm:$0xff] %v4055
    %4513 = vst [vmem:[%s19 + $0x5b8] sm:$0xff] %v4056
    %4514 = vst [vmem:[%s19 + $0x5c0] sm:$0xff] %v4057
    %4515 = vst [vmem:[%s19 + $0x5c8] sm:$0xff] %v4058
    %4516 = vst [vmem:[%s19 + $0x5d0] sm:$0xff] %v4059
    %4517 = vst [vmem:[%s19 + $0x5d8] sm:$0xff] %v4060
    %4518 = vst [vmem:[%s19 + $0x5e0] sm:$0xff] %v4061
    %4519 = vst [vmem:[%s19 + $0x5e8] sm:$0xff] %v4062
    %4520 = vst [vmem:[%s19 + $0x5f0] sm:$0xff] %v4063
    %4521 = vst [vmem:[%s19 + $0x5f8] sm:$0xff] %v4064
    %4522 = vst [vmem:[%s19 + $0x600] sm:$0xff] %v4065
    %4523 = vst [vmem:[%s19 + $0x608] sm:$0xff] %v4066
    %4524 = vst [vmem:[%s19 + $0x610] sm:$0xff] %v4067
    %4525 = vst [vmem:[%s19 + $0x618] sm:$0xff] %v4068
    %4526 = vst [vmem:[%s19 + $0x620] sm:$0xff] %v4069
    %4527 = vst [vmem:[%s19 + $0x628] sm:$0xff] %v4070
    %4528 = vst [vmem:[%s19 + $0x630] sm:$0xff] %v4071
    %4529 = vst [vmem:[%s19 + $0x638] sm:$0xff] %v4072
    %4530 = vst [vmem:[%s19 + $0x640] sm:$0xff] %v4073
    %4531 = vst [vmem:[%s19 + $0x648] sm:$0xff] %v4074
    %4532 = vst [vmem:[%s19 + $0x650] sm:$0xff] %v4075
    %4533 = vst [vmem:[%s19 + $0x658] sm:$0xff] %v4076
    %4534 = vst [vmem:[%s19 + $0x660] sm:$0xff] %v4077
    %4535 = vst [vmem:[%s19 + $0x668] sm:$0xff] %v4078
    %4536 = vst [vmem:[%s19 + $0x670] sm:$0xff] %v4079
    %4537 = vst [vmem:[%s19 + $0x678] sm:$0xff] %v4080
    %4538 = vst [vmem:[%s19 + $0x680] sm:$0xff] %v4081
    %4539 = vst [vmem:[%s19 + $0x688] sm:$0xff] %v4082
    %4540 = vst [vmem:[%s19 + $0x690] sm:$0xff] %v4083
    %4541 = vst [vmem:[%s19 + $0x698] sm:$0xff] %v4084
    %4542 = vst [vmem:[%s19 + $0x6a0] sm:$0xff] %v4085
    %4543 = vst [vmem:[%s19 + $0x6a8] sm:$0xff] %v4086
    %4544 = vst [vmem:[%s19 + $0x6b0] sm:$0xff] %v4087
    %4545 = vst [vmem:[%s19 + $0x6b8] sm:$0xff] %v4088
    %4546 = vst [vmem:[%s19 + $0x6c0] sm:$0xff] %v4089
    %4547 = vst [vmem:[%s19 + $0x6c8] sm:$0xff] %v4090
    %4548 = vst [vmem:[%s19 + $0x6d0] sm:$0xff] %v4091
    %4549 = vst [vmem:[%s19 + $0x6d8] sm:$0xff] %v4092
    %4550 = vst [vmem:[%s19 + $0x6e0] sm:$0xff] %v4093
    %4551 = vst [vmem:[%s19 + $0x6e8] sm:$0xff] %v4094
    %4552 = vst [vmem:[%s19 + $0x6f0] sm:$0xff] %v4095
    %4553 = vst [vmem:[%s19 + $0x6f8] sm:$0xff] %v4096
    %4554 = vst [vmem:[%s19 + $0x700] sm:$0xff] %v4097
    %4555 = vst [vmem:[%s19 + $0x708] sm:$0xff] %v4098
    %4556 = vst [vmem:[%s19 + $0x710] sm:$0xff] %v4099
    %4557 = vst [vmem:[%s19 + $0x718] sm:$0xff] %v4100
    %4558 = vst [vmem:[%s19 + $0x720] sm:$0xff] %v4101
    %4559 = vst [vmem:[%s19 + $0x728] sm:$0xff] %v4102
    %4560 = vst [vmem:[%s19 + $0x730] sm:$0xff] %v4103
    %4561 = vst [vmem:[%s19 + $0x738] sm:$0xff] %v4104
    %4562 = vst [vmem:[%s19 + $0x740] sm:$0xff] %v4105
    %4563 = vst [vmem:[%s19 + $0x748] sm:$0xff] %v4106
    %4564 = vst [vmem:[%s19 + $0x750] sm:$0xff] %v4107
    %4565 = vst [vmem:[%s19 + $0x758] sm:$0xff] %v4108
    %4566 = vst [vmem:[%s19 + $0x760] sm:$0xff] %v4109
    %4567 = vst [vmem:[%s19 + $0x768] sm:$0xff] %v4110
    %4568 = vst [vmem:[%s19 + $0x770] sm:$0xff] %v4111
    %4569 = vst [vmem:[%s19 + $0x778] sm:$0xff] %v4112
    %4570 = vst [vmem:[%s19 + $0x780] sm:$0xff] %v4113
    %4571 = vst [vmem:[%s19 + $0x788] sm:$0xff] %v4114
    %4572 = vst [vmem:[%s19 + $0x790] sm:$0xff] %v4115
    %4573 = vst [vmem:[%s19 + $0x798] sm:$0xff] %v4116
    %4574 = vst [vmem:[%s19 + $0x7a0] sm:$0xff] %v4117
    %4575 = vst [vmem:[%s19 + $0x7a8] sm:$0xff] %v4118
    %4576 = vst [vmem:[%s19 + $0x7b0] sm:$0xff] %v4119
    %4577 = vst [vmem:[%s19 + $0x7b8] sm:$0xff] %v4120
    %4578 = vst [vmem:[%s19 + $0x7c0] sm:$0xff] %v4121
    %4579 = vst [vmem:[%s19 + $0x7c8] sm:$0xff] %v4122
    %4580 = vst [vmem:[%s19 + $0x7d0] sm:$0xff] %v4123
    %4581 = vst [vmem:[%s19 + $0x7d8] sm:$0xff] %v4124
    %4582 = vst [vmem:[%s19 + $0x7e0] sm:$0xff] %v4125
    %4583 = vst [vmem:[%s19 + $0x7e8] sm:$0xff] %v4126
    %4584 = vst [vmem:[%s19 + $0x7f0] sm:$0xff] %v4127
    %4585 = vst [vmem:[%s19 + $0x7f8] sm:$0xff] %v4128
    %4586 = vst.msk [vmem:[%s20] sm:$0xf] %vm4328, %v4132
    %v4587 = vld [vmem:[%s2] sm:$0xff]
    %v4588 = vld [vmem:[%s2 + $0x8] sm:$0xff]
    %v4589 = vld [vmem:[%s2 + $0x10] sm:$0xff]
    %v4591 = vperm.slane %v3104, 0
    %v4592 = vperm.slane %v3104, 1
    %v4593 = vperm.slane %v3104, 2
    %v4594 = vperm.slane %v3104, 3
    %4599 = vmatpush.msra.mxu0 %v2969
    %4600 = vmatpush.msra.mxu0 %v2965
    %4601 = vmatpush.msra.mxu0 %v2961
    %4602 = vmatpush.msra.mxu0 %v2957
    %4603 = vmatpush.msra.mxu0 %v2953
    %4604 = vmatpush.msra.mxu0 %v2949
    %4605 = vmatpush.msra.mxu0 %v2945
    %4606 = vmatpush.msra.mxu0 %v2941
    %4607 = vmatpush.msra.mxu0 %v2937
    %4608 = vmatpush.msra.mxu0 %v2933
    %4609 = vmatpush.msra.mxu0 %v2929
    %4610 = vmatpush.msra.mxu0 %v2925
    %4611 = vmatpush.msra.mxu0 %v2921
    %4612 = vmatpush.msra.mxu0 %v2917
    %4613 = vmatpush.msra.mxu0 %v2913
    %4614 = vmatpush.msra.mxu0 %v2909
    %4615 = vmatmul.f32.gmra.mxu0 %v4587
    %v4616 = vpop.f32.mrf.mxu0
    %v4617 = vadd.f32 %v4591, %v4616
    %4618 = vdwg.mxu0
    %4619 = vmatpush.msra.mxu0 %v3033
    %4620 = vmatpush.msra.mxu0 %v3029
    %4621 = vmatpush.msra.mxu0 %v3025
    %4622 = vmatpush.msra.mxu0 %v3021
    %4623 = vmatpush.msra.mxu0 %v3017
    %4624 = vmatpush.msra.mxu0 %v3013
    %4625 = vmatpush.msra.mxu0 %v3009
    %4626 = vmatpush.msra.mxu0 %v3005
    %4627 = vmatpush.msra.mxu0 %v3001
    %4628 = vmatpush.msra.mxu0 %v2997
    %4629 = vmatpush.msra.mxu0 %v2993
    %4630 = vmatpush.msra.mxu0 %v2989
    %4631 = vmatpush.msra.mxu0 %v2985
    %4632 = vmatpush.msra.mxu0 %v2981
    %4633 = vmatpush.msra.mxu0 %v2977
    %4634 = vmatpush.msra.mxu0 %v2973
    %4635 = vmatmul.f32.gmra.mxu0 %v4588
    %v4636 = vpop.f32.mrf.mxu0
    %v4637 = vadd.f32 %v4617, %v4636
    %4638 = vdwg.mxu0
    %4639 = vmatpush.msra.mxu0 %v3097
    %4640 = vmatpush.msra.mxu0 %v3093
    %4641 = vmatpush.msra.mxu0 %v3089
    %4642 = vmatpush.msra.mxu0 %v3085
    %4643 = vmatpush.msra.mxu0 %v3081
    %4644 = vmatpush.msra.mxu0 %v3077
    %4645 = vmatpush.msra.mxu0 %v3073
    %4646 = vmatpush.msra.mxu0 %v3069
    %4647 = vmatpush.msra.mxu0 %v3065
    %4648 = vmatpush.msra.mxu0 %v3061
    %4649 = vmatpush.msra.mxu0 %v3057
    %4650 = vmatpush.msra.mxu0 %v3053
    %4651 = vmatpush.msra.mxu0 %v3049
    %4652 = vmatpush.msra.mxu0 %v3045
    %4653 = vmatpush.msra.mxu0 %v3041
    %4654 = vmatpush.msra.mxu0 %v3037
    %4655 = vmatmul.f32.gmra.mxu0 %v4589
    %v4656 = vpop.f32.mrf.mxu0
    %v4657 = vadd.f32 %v4637, %v4656
    %4658 = vdwg.mxu0
    %4659 = vmatpush.msra.mxu0 %v2970
    %4660 = vmatpush.msra.mxu0 %v2966
    %4661 = vmatpush.msra.mxu0 %v2962
    %4662 = vmatpush.msra.mxu0 %v2958
    %4663 = vmatpush.msra.mxu0 %v2954
    %4664 = vmatpush.msra.mxu0 %v2950
    %4665 = vmatpush.msra.mxu0 %v2946
    %4666 = vmatpush.msra.mxu0 %v2942
    %4667 = vmatpush.msra.mxu0 %v2938
    %4668 = vmatpush.msra.mxu0 %v2934
    %4669 = vmatpush.msra.mxu0 %v2930
    %4670 = vmatpush.msra.mxu0 %v2926
    %4671 = vmatpush.msra.mxu0 %v2922
    %4672 = vmatpush.msra.mxu0 %v2918
    %4673 = vmatpush.msra.mxu0 %v2914
    %4674 = vmatpush.msra.mxu0 %v2910
    %4675 = vmatmul.f32.gmra.mxu0 %v4587
    %v4676 = vpop.f32.mrf.mxu0
    %v4677 = vadd.f32 %v4592, %v4676
    %4678 = vdwg.mxu0
    %4679 = vmatpush.msra.mxu0 %v3034
    %4680 = vmatpush.msra.mxu0 %v3030
    %4681 = vmatpush.msra.mxu0 %v3026
    %4682 = vmatpush.msra.mxu0 %v3022
    %4683 = vmatpush.msra.mxu0 %v3018
    %4684 = vmatpush.msra.mxu0 %v3014
    %4685 = vmatpush.msra.mxu0 %v3010
    %4686 = vmatpush.msra.mxu0 %v3006
    %4687 = vmatpush.msra.mxu0 %v3002
    %4688 = vmatpush.msra.mxu0 %v2998
    %4689 = vmatpush.msra.mxu0 %v2994
    %4690 = vmatpush.msra.mxu0 %v2990
    %4691 = vmatpush.msra.mxu0 %v2986
    %4692 = vmatpush.msra.mxu0 %v2982
    %4693 = vmatpush.msra.mxu0 %v2978
    %4694 = vmatpush.msra.mxu0 %v2974
    %4695 = vmatmul.f32.gmra.mxu0 %v4588
    %v4696 = vpop.f32.mrf.mxu0
    %v4697 = vadd.f32 %v4677, %v4696
    %4698 = vdwg.mxu0
    %4699 = vmatpush.msra.mxu0 %v3098
    %4700 = vmatpush.msra.mxu0 %v3094
    %4701 = vmatpush.msra.mxu0 %v3090
    %4702 = vmatpush.msra.mxu0 %v3086
    %4703 = vmatpush.msra.mxu0 %v3082
    %4704 = vmatpush.msra.mxu0 %v3078
    %4705 = vmatpush.msra.mxu0 %v3074
    %4706 = vmatpush.msra.mxu0 %v3070
    %4707 = vmatpush.msra.mxu0 %v3066
    %4708 = vmatpush.msra.mxu0 %v3062
    %4709 = vmatpush.msra.mxu0 %v3058
    %4710 = vmatpush.msra.mxu0 %v3054
    %4711 = vmatpush.msra.mxu0 %v3050
    %4712 = vmatpush.msra.mxu0 %v3046
    %4713 = vmatpush.msra.mxu0 %v3042
    %4714 = vmatpush.msra.mxu0 %v3038
    %4715 = vmatmul.f32.gmra.mxu0 %v4589
    %v4716 = vpop.f32.mrf.mxu0
    %v4717 = vadd.f32 %v4697, %v4716
    %4718 = vdwg.mxu0
    %4719 = vmatpush.msra.mxu0 %v2971
    %4720 = vmatpush.msra.mxu0 %v2967
    %4721 = vmatpush.msra.mxu0 %v2963
    %4722 = vmatpush.msra.mxu0 %v2959
    %4723 = vmatpush.msra.mxu0 %v2955
    %4724 = vmatpush.msra.mxu0 %v2951
    %4725 = vmatpush.msra.mxu0 %v2947
    %4726 = vmatpush.msra.mxu0 %v2943
    %4727 = vmatpush.msra.mxu0 %v2939
    %4728 = vmatpush.msra.mxu0 %v2935
    %4729 = vmatpush.msra.mxu0 %v2931
    %4730 = vmatpush.msra.mxu0 %v2927
    %4731 = vmatpush.msra.mxu0 %v2923
    %4732 = vmatpush.msra.mxu0 %v2919
    %4733 = vmatpush.msra.mxu0 %v2915
    %4734 = vmatpush.msra.mxu0 %v2911
    %4735 = vmatmul.f32.gmra.mxu0 %v4587
    %v4736 = vpop.f32.mrf.mxu0
    %v4737 = vadd.f32 %v4593, %v4736
    %4738 = vdwg.mxu0
    %4739 = vmatpush.msra.mxu0 %v3035
    %4740 = vmatpush.msra.mxu0 %v3031
    %4741 = vmatpush.msra.mxu0 %v3027
    %4742 = vmatpush.msra.mxu0 %v3023
    %4743 = vmatpush.msra.mxu0 %v3019
    %4744 = vmatpush.msra.mxu0 %v3015
    %4745 = vmatpush.msra.mxu0 %v3011
    %4746 = vmatpush.msra.mxu0 %v3007
    %4747 = vmatpush.msra.mxu0 %v3003
    %4748 = vmatpush.msra.mxu0 %v2999
    %4749 = vmatpush.msra.mxu0 %v2995
    %4750 = vmatpush.msra.mxu0 %v2991
    %4751 = vmatpush.msra.mxu0 %v2987
    %4752 = vmatpush.msra.mxu0 %v2983
    %4753 = vmatpush.msra.mxu0 %v2979
    %4754 = vmatpush.msra.mxu0 %v2975
    %4755 = vmatmul.f32.gmra.mxu0 %v4588
    %v4756 = vpop.f32.mrf.mxu0
    %v4757 = vadd.f32 %v4737, %v4756
    %4758 = vdwg.mxu0
    %4759 = vmatpush.msra.mxu0 %v3099
    %4760 = vmatpush.msra.mxu0 %v3095
    %4761 = vmatpush.msra.mxu0 %v3091
    %4762 = vmatpush.msra.mxu0 %v3087
    %4763 = vmatpush.msra.mxu0 %v3083
    %4764 = vmatpush.msra.mxu0 %v3079
    %4765 = vmatpush.msra.mxu0 %v3075
    %4766 = vmatpush.msra.mxu0 %v3071
    %4767 = vmatpush.msra.mxu0 %v3067
    %4768 = vmatpush.msra.mxu0 %v3063
    %4769 = vmatpush.msra.mxu0 %v3059
    %4770 = vmatpush.msra.mxu0 %v3055
    %4771 = vmatpush.msra.mxu0 %v3051
    %4772 = vmatpush.msra.mxu0 %v3047
    %4773 = vmatpush.msra.mxu0 %v3043
    %4774 = vmatpush.msra.mxu0 %v3039
    %4775 = vmatmul.f32.gmra.mxu0 %v4589
    %v4776 = vpop.f32.mrf.mxu0
    %v4777 = vadd.f32 %v4757, %v4776
    %4778 = vdwg.mxu0
    %4779 = vmatpush.msra.mxu0 %v2972
    %4780 = vmatpush.msra.mxu0 %v2968
    %4781 = vmatpush.msra.mxu0 %v2964
    %4782 = vmatpush.msra.mxu0 %v2960
    %4783 = vmatpush.msra.mxu0 %v2956
    %4784 = vmatpush.msra.mxu0 %v2952
    %4785 = vmatpush.msra.mxu0 %v2948
    %4786 = vmatpush.msra.mxu0 %v2944
    %4787 = vmatpush.msra.mxu0 %v2940
    %4788 = vmatpush.msra.mxu0 %v2936
    %4789 = vmatpush.msra.mxu0 %v2932
    %4790 = vmatpush.msra.mxu0 %v2928
    %4791 = vmatpush.msra.mxu0 %v2924
    %4792 = vmatpush.msra.mxu0 %v2920
    %4793 = vmatpush.msra.mxu0 %v2916
    %4794 = vmatpush.msra.mxu0 %v2912
    %4795 = vmatmul.f32.gmra.mxu0 %v4587
    %v4796 = vpop.f32.mrf.mxu0
    %v4797 = vadd.f32 %v4594, %v4796
    %4798 = vdwg.mxu0
    %4799 = vmatpush.msra.mxu0 %v3036
    %4800 = vmatpush.msra.mxu0 %v3032
    %4801 = vmatpush.msra.mxu0 %v3028
    %4802 = vmatpush.msra.mxu0 %v3024
    %4803 = vmatpush.msra.mxu0 %v3020
    %4804 = vmatpush.msra.mxu0 %v3016
    %4805 = vmatpush.msra.mxu0 %v3012
    %4806 = vmatpush.msra.mxu0 %v3008
    %4807 = vmatpush.msra.mxu0 %v3004
    %4808 = vmatpush.msra.mxu0 %v3000
    %4809 = vmatpush.msra.mxu0 %v2996
    %4810 = vmatpush.msra.mxu0 %v2992
    %4811 = vmatpush.msra.mxu0 %v2988
    %4812 = vmatpush.msra.mxu0 %v2984
    %4813 = vmatpush.msra.mxu0 %v2980
    %4814 = vmatpush.msra.mxu0 %v2976
    %4815 = vmatmul.f32.gmra.mxu0 %v4588
    %v4816 = vpop.f32.mrf.mxu0
    %v4817 = vadd.f32 %v4797, %v4816
    %4818 = vdwg.mxu0
    %4819 = vmatpush.msra.mxu0 %v3100
    %4820 = vmatpush.msra.mxu0 %v3096
    %4821 = vmatpush.msra.mxu0 %v3092
    %4822 = vmatpush.msra.mxu0 %v3088
    %4823 = vmatpush.msra.mxu0 %v3084
    %4824 = vmatpush.msra.mxu0 %v3080
    %4825 = vmatpush.msra.mxu0 %v3076
    %4826 = vmatpush.msra.mxu0 %v3072
    %4827 = vmatpush.msra.mxu0 %v3068
    %4828 = vmatpush.msra.mxu0 %v3064
    %4829 = vmatpush.msra.mxu0 %v3060
    %4830 = vmatpush.msra.mxu0 %v3056
    %4831 = vmatpush.msra.mxu0 %v3052
    %4832 = vmatpush.msra.mxu0 %v3048
    %4833 = vmatpush.msra.mxu0 %v3044
    %4834 = vmatpush.msra.mxu0 %v3040
    %4835 = vmatmul.f32.gmra.mxu0 %v4589
    %v4836 = vpop.f32.mrf.mxu0
    %v4837 = vadd.f32 %v4817, %v4836
    %4838 = vdwg.mxu0
    %v4839 = vmax.f32 %v4657, 0.0
    %v4840 = vmax.f32 %v4717, 0.0
    %v4841 = vmax.f32 %v4777, 0.0
    %v4842 = vmax.f32 %v4837, 0.0
    %v4844 = vperm.slane %v4132, 0
    %v4845 = vperm.slane %v4132, 1
    %v4846 = vperm.slane %v4132, 2
    %v4847 = vperm.slane %v4132, 3
    %4852 = vmatpush.msra.mxu0 %v3933
    %4853 = vmatpush.msra.mxu0 %v3929
    %4854 = vmatpush.msra.mxu0 %v3925
    %4855 = vmatpush.msra.mxu0 %v3921
    %4856 = vmatpush.msra.mxu0 %v3917
    %4857 = vmatpush.msra.mxu0 %v3913
    %4858 = vmatpush.msra.mxu0 %v3909
    %4859 = vmatpush.msra.mxu0 %v3905
    %4860 = vmatpush.msra.mxu0 %v3901
    %4861 = vmatpush.msra.mxu0 %v3897
    %4862 = vmatpush.msra.mxu0 %v3893
    %4863 = vmatpush.msra.mxu0 %v3889
    %4864 = vmatpush.msra.mxu0 %v3885
    %4865 = vmatpush.msra.mxu0 %v3881
    %4866 = vmatpush.msra.mxu0 %v3877
    %4867 = vmatpush.msra.mxu0 %v3873
    %4868 = vmatmul.f32.gmra.mxu0 %v4839
    %v4869 = vpop.f32.mrf.mxu0
    %v4870 = vadd.f32 %v4844, %v4869
    %4871 = vdwg.mxu0
    %4872 = vmatpush.msra.mxu0 %v3997
    %4873 = vmatpush.msra.mxu0 %v3993
    %4874 = vmatpush.msra.mxu0 %v3989
    %4875 = vmatpush.msra.mxu0 %v3985
    %4876 = vmatpush.msra.mxu0 %v3981
    %4877 = vmatpush.msra.mxu0 %v3977
    %4878 = vmatpush.msra.mxu0 %v3973
    %4879 = vmatpush.msra.mxu0 %v3969
    %4880 = vmatpush.msra.mxu0 %v3965
    %4881 = vmatpush.msra.mxu0 %v3961
    %4882 = vmatpush.msra.mxu0 %v3957
    %4883 = vmatpush.msra.mxu0 %v3953
    %4884 = vmatpush.msra.mxu0 %v3949
    %4885 = vmatpush.msra.mxu0 %v3945
    %4886 = vmatpush.msra.mxu0 %v3941
    %4887 = vmatpush.msra.mxu0 %v3937
    %4888 = vmatmul.f32.gmra.mxu0 %v4840
    %v4889 = vpop.f32.mrf.mxu0
    %v4890 = vadd.f32 %v4870, %v4889
    %4891 = vdwg.mxu0
    %4892 = vmatpush.msra.mxu0 %v4061
    %4893 = vmatpush.msra.mxu0 %v4057
    %4894 = vmatpush.msra.mxu0 %v4053
    %4895 = vmatpush.msra.mxu0 %v4049
    %4896 = vmatpush.msra.mxu0 %v4045
    %4897 = vmatpush.msra.mxu0 %v4041
    %4898 = vmatpush.msra.mxu0 %v4037
    %4899 = vmatpush.msra.mxu0 %v4033
    %4900 = vmatpush.msra.mxu0 %v4029
    %4901 = vmatpush.msra.mxu0 %v4025
    %4902 = vmatpush.msra.mxu0 %v4021
    %4903 = vmatpush.msra.mxu0 %v4017
    %4904 = vmatpush.msra.mxu0 %v4013
    %4905 = vmatpush.msra.mxu0 %v4009
    %4906 = vmatpush.msra.mxu0 %v4005
    %4907 = vmatpush.msra.mxu0 %v4001
    %4908 = vmatmul.f32.gmra.mxu0 %v4841
    %v4909 = vpop.f32.mrf.mxu0
    %v4910 = vadd.f32 %v4890, %v4909
    %4911 = vdwg.mxu0
    %4912 = vmatpush.msra.mxu0 %v4125
    %4913 = vmatpush.msra.mxu0 %v4121
    %4914 = vmatpush.msra.mxu0 %v4117
    %4915 = vmatpush.msra.mxu0 %v4113
    %4916 = vmatpush.msra.mxu0 %v4109
    %4917 = vmatpush.msra.mxu0 %v4105
    %4918 = vmatpush.msra.mxu0 %v4101
    %4919 = vmatpush.msra.mxu0 %v4097
    %4920 = vmatpush.msra.mxu0 %v4093
    %4921 = vmatpush.msra.mxu0 %v4089
    %4922 = vmatpush.msra.mxu0 %v4085
    %4923 = vmatpush.msra.mxu0 %v4081
    %4924 = vmatpush.msra.mxu0 %v4077
    %4925 = vmatpush.msra.mxu0 %v4073
    %4926 = vmatpush.msra.mxu0 %v4069
    %4927 = vmatpush.msra.mxu0 %v4065
    %4928 = vmatmul.f32.gmra.mxu0 %v4842
    %v4929 = vpop.f32.mrf.mxu0
    %v4930 = vadd.f32 %v4910, %v4929
    %4931 = vdwg.mxu0
    %4932 = vmatpush.msra.mxu0 %v3934
    %4933 = vmatpush.msra.mxu0 %v3930
    %4934 = vmatpush.msra.mxu0 %v3926
    %4935 = vmatpush.msra.mxu0 %v3922
    %4936 = vmatpush.msra.mxu0 %v3918
    %4937 = vmatpush.msra.mxu0 %v3914
    %4938 = vmatpush.msra.mxu0 %v3910
    %4939 = vmatpush.msra.mxu0 %v3906
    %4940 = vmatpush.msra.mxu0 %v3902
    %4941 = vmatpush.msra.mxu0 %v3898
    %4942 = vmatpush.msra.mxu0 %v3894
    %4943 = vmatpush.msra.mxu0 %v3890
    %4944 = vmatpush.msra.mxu0 %v3886
    %4945 = vmatpush.msra.mxu0 %v3882
    %4946 = vmatpush.msra.mxu0 %v3878
    %4947 = vmatpush.msra.mxu0 %v3874
    %4948 = vmatmul.f32.gmra.mxu0 %v4839
    %v4949 = vpop.f32.mrf.mxu0
    %v4950 = vadd.f32 %v4845, %v4949
    %4951 = vdwg.mxu0
    %4952 = vmatpush.msra.mxu0 %v3998
    %4953 = vmatpush.msra.mxu0 %v3994
    %4954 = vmatpush.msra.mxu0 %v3990
    %4955 = vmatpush.msra.mxu0 %v3986
    %4956 = vmatpush.msra.mxu0 %v3982
    %4957 = vmatpush.msra.mxu0 %v3978
    %4958 = vmatpush.msra.mxu0 %v3974
    %4959 = vmatpush.msra.mxu0 %v3970
    %4960 = vmatpush.msra.mxu0 %v3966
    %4961 = vmatpush.msra.mxu0 %v3962
    %4962 = vmatpush.msra.mxu0 %v3958
    %4963 = vmatpush.msra.mxu0 %v3954
    %4964 = vmatpush.msra.mxu0 %v3950
    %4965 = vmatpush.msra.mxu0 %v3946
    %4966 = vmatpush.msra.mxu0 %v3942
    %4967 = vmatpush.msra.mxu0 %v3938
    %4968 = vmatmul.f32.gmra.mxu0 %v4840
    %v4969 = vpop.f32.mrf.mxu0
    %v4970 = vadd.f32 %v4950, %v4969
    %4971 = vdwg.mxu0
    %4972 = vmatpush.msra.mxu0 %v4062
    %4973 = vmatpush.msra.mxu0 %v4058
    %4974 = vmatpush.msra.mxu0 %v4054
    %4975 = vmatpush.msra.mxu0 %v4050
    %4976 = vmatpush.msra.mxu0 %v4046
    %4977 = vmatpush.msra.mxu0 %v4042
    %4978 = vmatpush.msra.mxu0 %v4038
    %4979 = vmatpush.msra.mxu0 %v4034
    %4980 = vmatpush.msra.mxu0 %v4030
    %4981 = vmatpush.msra.mxu0 %v4026
    %4982 = vmatpush.msra.mxu0 %v4022
    %4983 = vmatpush.msra.mxu0 %v4018
    %4984 = vmatpush.msra.mxu0 %v4014
    %4985 = vmatpush.msra.mxu0 %v4010
    %4986 = vmatpush.msra.mxu0 %v4006
    %4987 = vmatpush.msra.mxu0 %v4002
    %4988 = vmatmul.f32.gmra.mxu0 %v4841
    %v4989 = vpop.f32.mrf.mxu0
    %v4990 = vadd.f32 %v4970, %v4989
    %4991 = vdwg.mxu0
    %4992 = vmatpush.msra.mxu0 %v4126
    %4993 = vmatpush.msra.mxu0 %v4122
    %4994 = vmatpush.msra.mxu0 %v4118
    %4995 = vmatpush.msra.mxu0 %v4114
    %4996 = vmatpush.msra.mxu0 %v4110
    %4997 = vmatpush.msra.mxu0 %v4106
    %4998 = vmatpush.msra.mxu0 %v4102
    %4999 = vmatpush.msra.mxu0 %v4098
    %5000 = vmatpush.msra.mxu0 %v4094
    %5001 = vmatpush.msra.mxu0 %v4090
    %5002 = vmatpush.msra.mxu0 %v4086
    %5003 = vmatpush.msra.mxu0 %v4082
    %5004 = vmatpush.msra.mxu0 %v4078
    %5005 = vmatpush.msra.mxu0 %v4074
    %5006 = vmatpush.msra.mxu0 %v4070
    %5007 = vmatpush.msra.mxu0 %v4066
    %5008 = vmatmul.f32.gmra.mxu0 %v4842
    %v5009 = vpop.f32.mrf.mxu0
    %v5010 = vadd.f32 %v4990, %v5009
    %5011 = vdwg.mxu0
    %5012 = vmatpush.msra.mxu0 %v3935
    %5013 = vmatpush.msra.mxu0 %v3931
    %5014 = vmatpush.msra.mxu0 %v3927
    %5015 = vmatpush.msra.mxu0 %v3923
    %5016 = vmatpush.msra.mxu0 %v3919
    %5017 = vmatpush.msra.mxu0 %v3915
    %5018 = vmatpush.msra.mxu0 %v3911
    %5019 = vmatpush.msra.mxu0 %v3907
    %5020 = vmatpush.msra.mxu0 %v3903
    %5021 = vmatpush.msra.mxu0 %v3899
    %5022 = vmatpush.msra.mxu0 %v3895
    %5023 = vmatpush.msra.mxu0 %v3891
    %5024 = vmatpush.msra.mxu0 %v3887
    %5025 = vmatpush.msra.mxu0 %v3883
    %5026 = vmatpush.msra.mxu0 %v3879
    %5027 = vmatpush.msra.mxu0 %v3875
    %5028 = vmatmul.f32.gmra.mxu0 %v4839
    %v5029 = vpop.f32.mrf.mxu0
    %v5030 = vadd.f32 %v4846, %v5029
    %5031 = vdwg.mxu0
    %5032 = vmatpush.msra.mxu0 %v3999
    %5033 = vmatpush.msra.mxu0 %v3995
    %5034 = vmatpush.msra.mxu0 %v3991
    %5035 = vmatpush.msra.mxu0 %v3987
    %5036 = vmatpush.msra.mxu0 %v3983
    %5037 = vmatpush.msra.mxu0 %v3979
    %5038 = vmatpush.msra.mxu0 %v3975
    %5039 = vmatpush.msra.mxu0 %v3971
    %5040 = vmatpush.msra.mxu0 %v3967
    %5041 = vmatpush.msra.mxu0 %v3963
    %5042 = vmatpush.msra.mxu0 %v3959
    %5043 = vmatpush.msra.mxu0 %v3955
    %5044 = vmatpush.msra.mxu0 %v3951
    %5045 = vmatpush.msra.mxu0 %v3947
    %5046 = vmatpush.msra.mxu0 %v3943
    %5047 = vmatpush.msra.mxu0 %v3939
    %5048 = vmatmul.f32.gmra.mxu0 %v4840
    %v5049 = vpop.f32.mrf.mxu0
    %v5050 = vadd.f32 %v5030, %v5049
    %5051 = vdwg.mxu0
    %5052 = vmatpush.msra.mxu0 %v4063
    %5053 = vmatpush.msra.mxu0 %v4059
    %5054 = vmatpush.msra.mxu0 %v4055
    %5055 = vmatpush.msra.mxu0 %v4051
    %5056 = vmatpush.msra.mxu0 %v4047
    %5057 = vmatpush.msra.mxu0 %v4043
    %5058 = vmatpush.msra.mxu0 %v4039
    %5059 = vmatpush.msra.mxu0 %v4035
    %5060 = vmatpush.msra.mxu0 %v4031
    %5061 = vmatpush.msra.mxu0 %v4027
    %5062 = vmatpush.msra.mxu0 %v4023
    %5063 = vmatpush.msra.mxu0 %v4019
    %5064 = vmatpush.msra.mxu0 %v4015
    %5065 = vmatpush.msra.mxu0 %v4011
    %5066 = vmatpush.msra.mxu0 %v4007
    %5067 = vmatpush.msra.mxu0 %v4003
    %5068 = vmatmul.f32.gmra.mxu0 %v4841
    %v5069 = vpop.f32.mrf.mxu0
    %v5070 = vadd.f32 %v5050, %v5069
    %5071 = vdwg.mxu0
    %5072 = vmatpush.msra.mxu0 %v4127
    %5073 = vmatpush.msra.mxu0 %v4123
    %5074 = vmatpush.msra.mxu0 %v4119
    %5075 = vmatpush.msra.mxu0 %v4115
    %5076 = vmatpush.msra.mxu0 %v4111
    %5077 = vmatpush.msra.mxu0 %v4107
    %5078 = vmatpush.msra.mxu0 %v4103
    %5079 = vmatpush.msra.mxu0 %v4099
    %5080 = vmatpush.msra.mxu0 %v4095
    %5081 = vmatpush.msra.mxu0 %v4091
    %5082 = vmatpush.msra.mxu0 %v4087
    %5083 = vmatpush.msra.mxu0 %v4083
    %5084 = vmatpush.msra.mxu0 %v4079
    %5085 = vmatpush.msra.mxu0 %v4075
    %5086 = vmatpush.msra.mxu0 %v4071
    %5087 = vmatpush.msra.mxu0 %v4067
    %5088 = vmatmul.f32.gmra.mxu0 %v4842
    %v5089 = vpop.f32.mrf.mxu0
    %v5090 = vadd.f32 %v5070, %v5089
    %5091 = vdwg.mxu0
    %5092 = vmatpush.msra.mxu0 %v3936
    %5093 = vmatpush.msra.mxu0 %v3932
    %5094 = vmatpush.msra.mxu0 %v3928
    %5095 = vmatpush.msra.mxu0 %v3924
    %5096 = vmatpush.msra.mxu0 %v3920
    %5097 = vmatpush.msra.mxu0 %v3916
    %5098 = vmatpush.msra.mxu0 %v3912
    %5099 = vmatpush.msra.mxu0 %v3908
    %5100 = vmatpush.msra.mxu0 %v3904
    %5101 = vmatpush.msra.mxu0 %v3900
    %5102 = vmatpush.msra.mxu0 %v3896
    %5103 = vmatpush.msra.mxu0 %v3892
    %5104 = vmatpush.msra.mxu0 %v3888
    %5105 = vmatpush.msra.mxu0 %v3884
    %5106 = vmatpush.msra.mxu0 %v3880
    %5107 = vmatpush.msra.mxu0 %v3876
    %5108 = vmatmul.f32.gmra.mxu0 %v4839
    %v5109 = vpop.f32.mrf.mxu0
    %v5110 = vadd.f32 %v4847, %v5109
    %5111 = vdwg.mxu0
    %5112 = vmatpush.msra.mxu0 %v4000
    %5113 = vmatpush.msra.mxu0 %v3996
    %5114 = vmatpush.msra.mxu0 %v3992
    %5115 = vmatpush.msra.mxu0 %v3988
    %5116 = vmatpush.msra.mxu0 %v3984
    %5117 = vmatpush.msra.mxu0 %v3980
    %5118 = vmatpush.msra.mxu0 %v3976
    %5119 = vmatpush.msra.mxu0 %v3972
    %5120 = vmatpush.msra.mxu0 %v3968
    %5121 = vmatpush.msra.mxu0 %v3964
    %5122 = vmatpush.msra.mxu0 %v3960
    %5123 = vmatpush.msra.mxu0 %v3956
    %5124 = vmatpush.msra.mxu0 %v3952
    %5125 = vmatpush.msra.mxu0 %v3948
    %5126 = vmatpush.msra.mxu0 %v3944
    %5127 = vmatpush.msra.mxu0 %v3940
    %5128 = vmatmul.f32.gmra.mxu0 %v4840
    %v5129 = vpop.f32.mrf.mxu0
    %v5130 = vadd.f32 %v5110, %v5129
    %5131 = vdwg.mxu0
    %5132 = vmatpush.msra.mxu0 %v4064
    %5133 = vmatpush.msra.mxu0 %v4060
    %5134 = vmatpush.msra.mxu0 %v4056
    %5135 = vmatpush.msra.mxu0 %v4052
    %5136 = vmatpush.msra.mxu0 %v4048
    %5137 = vmatpush.msra.mxu0 %v4044
    %5138 = vmatpush.msra.mxu0 %v4040
    %5139 = vmatpush.msra.mxu0 %v4036
    %5140 = vmatpush.msra.mxu0 %v4032
    %5141 = vmatpush.msra.mxu0 %v4028
    %5142 = vmatpush.msra.mxu0 %v4024
    %5143 = vmatpush.msra.mxu0 %v4020
    %5144 = vmatpush.msra.mxu0 %v4016
    %5145 = vmatpush.msra.mxu0 %v4012
    %5146 = vmatpush.msra.mxu0 %v4008
    %5147 = vmatpush.msra.mxu0 %v4004
    %5148 = vmatmul.f32.gmra.mxu0 %v4841
    %v5149 = vpop.f32.mrf.mxu0
    %v5150 = vadd.f32 %v5130, %v5149
    %5151 = vdwg.mxu0
    %5152 = vmatpush.msra.mxu0 %v4128
    %5153 = vmatpush.msra.mxu0 %v4124
    %5154 = vmatpush.msra.mxu0 %v4120
    %5155 = vmatpush.msra.mxu0 %v4116
    %5156 = vmatpush.msra.mxu0 %v4112
    %5157 = vmatpush.msra.mxu0 %v4108
    %5158 = vmatpush.msra.mxu0 %v4104
    %5159 = vmatpush.msra.mxu0 %v4100
    %5160 = vmatpush.msra.mxu0 %v4096
    %5161 = vmatpush.msra.mxu0 %v4092
    %5162 = vmatpush.msra.mxu0 %v4088
    %5163 = vmatpush.msra.mxu0 %v4084
    %5164 = vmatpush.msra.mxu0 %v4080
    %5165 = vmatpush.msra.mxu0 %v4076
    %5166 = vmatpush.msra.mxu0 %v4072
    %5167 = vmatpush.msra.mxu0 %v4068
    %5168 = vmatmul.f32.gmra.mxu0 %v4842
    %v5169 = vpop.f32.mrf.mxu0
    %v5170 = vadd.f32 %v5150, %v5169
    %5171 = vdwg.mxu0
    %v5172 = vmul.f32 %v1050, %v2091
    %v5173 = vmul.f32 %v1130, %v2171
    %v5174 = vmul.f32 %v1210, %v2251
    %v5175 = vmul.f32 %v1290, %v2331
    %vm5176 = vcmask 1041408
    %v5177 = vsel %vm5176, %v5172, 0.0
    %v5178 = vsel %vm5176, %v5173, 0.0
    %v5179 = vadd.f32 %v5177, %v5178
    %v5180 = vsel %vm5176, %v5174, 0.0
    %v5181 = vadd.f32 %v5179, %v5180
    %v5182 = vsel %vm5176, %v5175, 0.0
    %v5183 = vadd.f32 %v5181, %v5182
    %5184 = vadd.xlane.f32.xlu0 %v5183
    %v5185 = vpop.xlane.xlu0 %5184
    %v5186 = vmul.f32 %v5185, 14.285714
    %5187 = vmatpush.xpose.msra.mxu0 0.0
    %5188 = vmatpush.xpose.msra.mxu0 0.0
    %5189 = vmatpush.xpose.msra.mxu0 0.0
    %5190 = vmatpush.xpose.msra.mxu0 0.0
    %5191 = vmatpush.xpose.msra.mxu0 0.0
    %5192 = vmatpush.xpose.msra.mxu0 0.0
    %5193 = vmatpush.xpose.msra.mxu0 0.0
    %5194 = vmatpush.xpose.msra.mxu0 0.0
    %5195 = vmatpush.xpose.msra.mxu0 0.0
    %5196 = vmatpush.xpose.msra.mxu0 0.0
    %5197 = vmatpush.xpose.msra.mxu0 0.0
    %5198 = vmatpush.xpose.msra.mxu0 0.0
    %5199 = vmatpush.xpose.msra.mxu0 0.0
    %5200 = vmatpush.xpose.msra.mxu0 0.0
    %5201 = vmatpush.xpose.msra.mxu0 0.0
    %5202 = vmatpush.xpose.msra.mxu0 %v4930
    %5203 = vmatmul.f32.gmra.mxu0 %v1050
    %v5204 = vpop.f32.mrf.mxu0
    %v5205 = vadd.f32 0.0, %v5204
    %5206 = vdwg.mxu0
    %5207 = vmatpush.xpose.msra.mxu0 0.0
    %5208 = vmatpush.xpose.msra.mxu0 0.0
    %5209 = vmatpush.xpose.msra.mxu0 0.0
    %5210 = vmatpush.xpose.msra.mxu0 0.0
    %5211 = vmatpush.xpose.msra.mxu0 0.0
    %5212 = vmatpush.xpose.msra.mxu0 0.0
    %5213 = vmatpush.xpose.msra.mxu0 0.0
    %5214 = vmatpush.xpose.msra.mxu0 0.0
    %5215 = vmatpush.xpose.msra.mxu0 0.0
    %5216 = vmatpush.xpose.msra.mxu0 0.0
    %5217 = vmatpush.xpose.msra.mxu0 0.0
    %5218 = vmatpush.xpose.msra.mxu0 0.0
    %5219 = vmatpush.xpose.msra.mxu0 0.0
    %5220 = vmatpush.xpose.msra.mxu0 0.0
    %5221 = vmatpush.xpose.msra.mxu0 0.0
    %5222 = vmatpush.xpose.msra.mxu0 %v5010
    %5223 = vmatmul.f32.gmra.mxu0 %v1130
    %v5224 = vpop.f32.mrf.mxu0
    %v5225 = vadd.f32 %v5205, %v5224
    %5226 = vdwg.mxu0
    %5227 = vmatpush.xpose.msra.mxu0 0.0
    %5228 = vmatpush.xpose.msra.mxu0 0.0
    %5229 = vmatpush.xpose.msra.mxu0 0.0
    %5230 = vmatpush.xpose.msra.mxu0 0.0
    %5231 = vmatpush.xpose.msra.mxu0 0.0
    %5232 = vmatpush.xpose.msra.mxu0 0.0
    %5233 = vmatpush.xpose.msra.mxu0 0.0
    %5234 = vmatpush.xpose.msra.mxu0 0.0
    %5235 = vmatpush.xpose.msra.mxu0 0.0
    %5236 = vmatpush.xpose.msra.mxu0 0.0
    %5237 = vmatpush.xpose.msra.mxu0 0.0
    %5238 = vmatpush.xpose.msra.mxu0 0.0
    %5239 = vmatpush.xpose.msra.mxu0 0.0
    %5240 = vmatpush.xpose.msra.mxu0 0.0
    %5241 = vmatpush.xpose.msra.mxu0 0.0
    %5242 = vmatpush.xpose.msra.mxu0 %v5090
    %5243 = vmatmul.f32.gmra.mxu0 %v1210
    %v5244 = vpop.f32.mrf.mxu0
    %v5245 = vadd.f32 %v5225, %v5244
    %5246 = vdwg.mxu0
    %5247 = vmatpush.xpose.msra.mxu0 0.0
    %5248 = vmatpush.xpose.msra.mxu0 0.0
    %5249 = vmatpush.xpose.msra.mxu0 0.0
    %5250 = vmatpush.xpose.msra.mxu0 0.0
    %5251 = vmatpush.xpose.msra.mxu0 0.0
    %5252 = vmatpush.xpose.msra.mxu0 0.0
    %5253 = vmatpush.xpose.msra.mxu0 0.0
    %5254 = vmatpush.xpose.msra.mxu0 0.0
    %5255 = vmatpush.xpose.msra.mxu0 0.0
    %5256 = vmatpush.xpose.msra.mxu0 0.0
    %5257 = vmatpush.xpose.msra.mxu0 0.0
    %5258 = vmatpush.xpose.msra.mxu0 0.0
    %5259 = vmatpush.xpose.msra.mxu0 0.0
    %5260 = vmatpush.xpose.msra.mxu0 0.0
    %5261 = vmatpush.xpose.msra.mxu0 0.0
    %5262 = vmatpush.xpose.msra.mxu0 %v5170
    %5263 = vmatmul.f32.gmra.mxu0 %v1290
    %v5264 = vpop.f32.mrf.mxu0
    %v5265 = vadd.f32 %v5245, %v5264
    %5266 = vdwg.mxu0
    %v5267 = vmul.f32 %v5265, 14.285714
    %vm5268 = vcmask 58368
    %v5269 = vsel %vm5268, %v5267, -inf
    %5270 = vmax.xlane.f32.xlu0 %v5269
    %v5271 = vpop.xlane.xlu0 %5270
    %v5272 = vmax.f32 %v5186, %v5271
    %v5273 = vsub.f32 %v5186, %v5272
    %v5274 = vmul.f32 %v5273, 1.442695
    %v5275 = vpow.pop %v5274
    %v5276 = vsub.f32 %v5267, %v5272
    %v5277 = vmul.f32 %v5276, 1.442695
    %v5278 = vpow.pop %v5277
    %v5279 = vsel %vm5268, %v5278, 0.0
    %5280 = vadd.xlane.f32.xlu0 %v5279
    %v5281 = vpop.xlane.xlu0 %5280
    %v5282 = vadd.f32 %v5275, %v5281
    %v5283 = vlog2.pop %v5282
    %v5284 = vmul.f32 %v5283, 0.6931472
    %v5285 = vadd.f32 %v5284, %v5272
    %v5286 = vsub.f32 %v5285, %v5186
    %v5287 = vsel %vm5176, %v5286, 0.0
    %v5288 = vrot.slane %v5287, 4
    %v5289 = vadd.f32 %v5287, %v5288
    %v5290 = vrot.slane %v5289, 2
    %v5291 = vadd.f32 %v5289, %v5290
    %v5292 = vrot.slane %v5291, 1
    %v5293 = vadd.f32 %v5291, %v5292
    %v5294 = vrcp.pop 2.0
    %v5295 = vmul.f32 2.0, %v5294
    %v5296 = vsub.f32 1.0, %v5295
    %v5297 = vmul.f32 %v5294, %v5296
    %v5298 = vadd.f32 %v5294, %v5297
    %vm5299 = vweird.f32 %v5294
    %v5300 = vsel %vm5299, %v5294, %v5298
    %v5301 = vmul.f32 %v5293, %v5300
    %vm5302 = vcmask 0
    %5303 = vst.msk [vmem:[#allocation8] sm:$0x1] %vm5302, %v5301
    %v5308 = vrot.slane %v1130, 6
    %v5309 = vrot.slane %v1210, 4
    %v5310 = vrot.slane %v1290, 2
    %v5311 = vsel %vm5176, %v1050, %v5308
    %vm5312 = vcmask 1045508
    %v5313 = vsel %vm5312, %v5309, %v5310
    %vm5314 = vcmask 1043456
    %v5315 = vsel %vm5314, %v5311, %v5313
    %5317 = vst [vmem:[#allocation9] sm:$0xff] %v5315
    // Predicated region
    $region74: #{moco_forward.1} parent=1 // pred_check
      _
    $region75: #{moco_forward.1} parent=1 // pred_check_branch
      %5319 = sbr.rel (0) target = $region77
    $region76: #{moco_forward.1} parent=1 // pred_region
      %5321 = vsyncadd [#allocation4], 0
      %s5323 = sshll.u32 [#allocation8], 4
      %s5324 = int_to_ptr.vmem [resolvable:$true] %s5323
      %s5325 = sshll.u32 %s15, 4
      %s5326 = int_to_ptr.hbm [resolvable:$true] %s5325
      %5328 = dma.vmem_to_hbm [thread:$0]  %s5324, 16, %s5326, [#allocation4]
    $region77: #{moco_forward.1} parent=1 // pred_fallthru
      _
    // Predicated region
    $region78: #{moco_forward.1} parent=1 // pred_check
      _
    $region79: #{moco_forward.1} parent=1 // pred_check_branch
      %5330 = sbr.rel (0) target = $region81
    $region80: #{moco_forward.1} parent=1 // pred_region
      %5332 = vsyncadd [#allocation10], 0
      %s5334 = sshll.u32 [#allocation9], 4
      %s5335 = int_to_ptr.vmem [resolvable:$true] %s5334
      %s5336 = sshll.u32 %s16, 4
      %s5337 = int_to_ptr.hbm [resolvable:$true] %s5336
      %5339 = dma.vmem_to_hbm [thread:$0]  %s5335, 128, %s5337, [#allocation10]
    $region81: #{moco_forward.1} parent=1 // pred_fallthru
      _
    // Predicated region
    $region82: #{moco_forward.1} parent=1 // pred_check
      _
    $region83: #{moco_forward.1} parent=1 // pred_check_branch
      %5341 = sbr.rel (0) target = $region85
    $region84: #{moco_forward.1} parent=1 // pred_region
      _
    $region85: #{moco_forward.1} parent=1 // pred_fallthru
      _
    // Predicated region
    $region86: #{moco_forward.1} parent=1 // pred_check
      _
    $region87: #{moco_forward.1} parent=1 // pred_check_branch
      %5343 = sbr.rel (0) target = $region89
    $region88: #{moco_forward.1} parent=1 // pred_region
      _
    $region89: #{moco_forward.1} parent=1 // pred_fallthru
      _
    // Predicated region
    $region90: #{moco_forward.1} parent=1 // pred_check
      _
    $region91: #{moco_forward.1} parent=1 // pred_check_branch
      %5345 = sbr.rel (0) target = $region93
    $region92: #{moco_forward.1} parent=1 // pred_region
      _
    $region93: #{moco_forward.1} parent=1 // pred_fallthru
      _
    // Predicated region
    $region94: #{moco_forward.1} parent=1 // pred_check
      _
    $region95: #{moco_forward.1} parent=1 // pred_check_branch
      %5347 = sbr.rel (0) target = $region97
    $region96: #{moco_forward.1} parent=1 // pred_region
      _
    $region97: #{moco_forward.1} parent=1 // pred_fallthru
      _
    // Predicated region
    $region98: #{moco_forward.1} parent=1 // pred_check
      _
    $region99: #{moco_forward.1} parent=1 // pred_check_branch
      %5349 = sbr.rel (0) target = $region101
    $region100: #{moco_forward.1} parent=1 // pred_region
      %5351 = dma.done [#allocation4], 16
    $region101: #{moco_forward.1} parent=1 // pred_fallthru
      _
    // Predicated region
    $region102: #{moco_forward.1} parent=1 // pred_check
      _
    $region103: #{moco_forward.1} parent=1 // pred_check_branch
      %5353 = sbr.rel (0) target = $region105
    $region104: #{moco_forward.1} parent=1 // pred_region
      %5355 = dma.done [#allocation10], 128
    $region105: #{moco_forward.1} parent=1 // pred_fallthru
      _
    // Predicated region
    $region106: #{moco_forward.1} parent=1 // pred_check
      _
    $region107: #{moco_forward.1} parent=1 // pred_check_branch
      %5357 = sbr.rel (0) target = $region109
    $region108: #{moco_forward.1} parent=1 // pred_region
      _
    $region109: #{moco_forward.1} parent=1 // pred_fallthru
      _
    // Predicated region
    $region110: #{moco_forward.1} parent=1 // pred_check
      _
    $region111: #{moco_forward.1} parent=1 // pred_check_branch
      %5359 = sbr.rel (0) target = $region113
    $region112: #{moco_forward.1} parent=1 // pred_region
      _
    $region113: #{moco_forward.1} parent=1 // pred_fallthru
      _
    // Predicated region
    $region114: #{moco_forward.1} parent=1 // pred_check
      _
    $region115: #{moco_forward.1} parent=1 // pred_check_branch
      %5361 = sbr.rel (0) target = $region117
    $region116: #{moco_forward.1} parent=1 // pred_region
      _
    $region117: #{moco_forward.1} parent=1 // pred_fallthru
      _
    // Predicated region
    $region118: #{moco_forward.1} parent=1 // pred_check
      _
    $region119: #{moco_forward.1} parent=1 // pred_check_branch
      %5363 = sbr.rel (0) target = $region121
    $region120: #{moco_forward.1} parent=1 // pred_region
      _
    $region121: #{moco_forward.1} parent=1 // pred_fallthru
      _
    %5364 = vsyncpa [#allocation3], 1
    %5365 = vsyncpa [#allocation6], 1
    %5366 = vsyncpa [#allocation4], 1
    %5367 = vsyncpa [#allocation10], 1

</llo_original>
